<compile_context>
chip_gen: v6e
topology: v6e:2x2x1
jax: 0.10.0
libtpu: 0.0.40
codegen_flags: <defaults>
</compile_context>

<pallas_src>
import functools

import jax
import jax.numpy as jnp
from jax.experimental import pallas as pl
from jax.experimental.pallas import tpu as pltpu

NEG_SLOPE = 0.01  # nn.LeakyReLU() default negative_slope


# ----------------------------------------------------------------------------
# In-kernel helpers (operate on values already resident in VMEM/vregs).
# ----------------------------------------------------------------------------
def _leaky_relu(y):
    # max(y, a*y) == LeakyReLU for 0 < a < 1: 2 VPU ops (no compare+select).
    return jnp.maximum(y, NEG_SLOPE * y)


def _conv1x1(x, w_bf16, b_f32):
    """Per-pixel 1x1 conv: x (Bb, N, Cin) f32 -> (Bb, N, Cout) f32."""
    Bb, N, Cin = x.shape
    y = jnp.dot(x.reshape(Bb * N, Cin).astype(jnp.bfloat16), w_bf16,
                preferred_element_type=jnp.float32) + b_f32
    return y.reshape(Bb, N, w_bf16.shape[1])


def _self_attn_block(x, wqk, bqk, wv, bv, gamma, kv_blk):
    """Self_Attn on a (Bb, N, C) f32 slab.

    energy[i, j] = (x_i @ Wqk + bqk) . x_j  with Wqk = Wq Wk^T, bqk = bq Wk^T;
    the dropped per-row term q_i.bk is constant over j so softmax(dim=-1) is
    unchanged.  Online (flash) softmax over KV blocks; normalization deferred.
    """
    Bb, N, C = x.shape
    x_bf = x.astype(jnp.bfloat16)
    x2 = x_bf.reshape(Bb * N, C)
    qk = (jnp.dot(x2, wqk, preferred_element_type=jnp.float32) + bqk
          ).reshape(Bb, N, C)
    v = (jnp.dot(x2, wv, preferred_element_type=jnp.float32) + bv
         ).reshape(Bb, N, C)
    qk_bf = qk.astype(jnp.bfloat16)
    v_bf = v.astype(jnp.bfloat16)

    num_blk = N // kv_blk  # wrapper guarantees divisibility
    m = jnp.full((Bb, N, 1), -jnp.inf, dtype=jnp.float32)
    l = jnp.zeros((Bb, N, 1), dtype=jnp.float32)
    acc = jnp.zeros((Bb, N, C), dtype=jnp.float32)
    # num_blk is a trace-time constant -> static unroll.
    # TODO(synk): ref-backed pl.loop + VMEM scratch accumulators for huge N.
    for j in range(num_blk):
        kj = x_bf[:, j * kv_blk:(j + 1) * kv_blk, :]              # (Bb, Tk, C)
        vj = v_bf[:, j * kv_blk:(j + 1) * kv_blk, :]              # (Bb, Tk, C)
        e = jnp.einsum('bnc,bkc->bnk', qk_bf, kj,
                       preferred_element_type=jnp.float32)        # (Bb, N, Tk)
        m_new = jnp.maximum(m, jnp.max(e, axis=-1, keepdims=True))
        scale = jnp.exp(m - m_new)
        p = jnp.exp(e - m_new)
        l = scale * l + jnp.sum(p, axis=-1, keepdims=True)
        acc = scale * acc + jnp.einsum('bnk,bkc->bnc',
                                       p.astype(jnp.bfloat16), vj,
                                       preferred_element_type=jnp.float32)
        m = m_new
    # Deferred normalization: scale the (N, C) accumulator, not the scores.
    out = acc * pl.reciprocal(l, approx=True)   # EUP slot; cheap now (N ops)
    return gamma * out + x


# ----------------------------------------------------------------------------
# Fused Discriminator kernel: Bb images per grid step, everything in VMEM.
# ----------------------------------------------------------------------------
def _disc_kernel(gammas_ref, x_ref,
                 wqk1_ref, bqk1_ref, wv1_ref, bv1_ref,
                 c1w_ref, c1b_ref, c2w_ref, c2b_ref,
                 wqk2_ref, bqk2_ref, wv2_ref, bv2_ref,
                 c3w_ref, c3b_ref, fcw_ref, fcb_ref,
                 o_ref, *, kv_blk):
    # Residual stream in f32; matmul operands are cast to bf16 per-op.
    x = x_ref[...].astype(jnp.float32)                            # (Bb, N, Cin)

    # Self_Attn(in_ch)
    x = _self_attn_block(x, wqk1_ref[...], bqk1_ref[...], wv1_ref[...],
                         bv1_ref[...], gammas_ref[0], kv_blk)
    # Conv2d(in_ch, f, 1) + LeakyReLU
    x = _leaky_relu(_conv1x1(x, c1w_ref[...], c1b_ref[...]))
    # Conv2d(f, 2f, 1) + LeakyReLU
    x = _leaky_relu(_conv1x1(x, c2w_ref[...], c2b_ref[...]))
    # Self_Attn(2f)
    x = _self_attn_block(x, wqk2_ref[...], bqk2_ref[...], wv2_ref[...],
                         bv2_ref[...], gammas_ref[1], kv_blk)
    # Conv2d(2f, 4f, 1) + LeakyReLU
    x = _leaky_relu(_conv1x1(x, c3w_ref[...], c3b_ref[...]))
    # AdaptiveAvgPool2d(1) + Linear(4f, 1): (N, 4f) never leaves VMEM; f32.
    pooled = jnp.mean(x, axis=1)                                  # (Bb, 4f)
    o_ref[...] = jnp.dot(pooled, fcw_ref[...],
                         preferred_element_type=jnp.float32) + fcb_ref[...]


def discriminator_forward(x_nchw, p, *, batch_block=None, kv_block=512):
    B, C, H, W = x_nchw.shape
    N = H * W
    x = jnp.transpose(x_nchw.reshape(B, C, N), (0, 2, 1))         # (B, N, C)
    x = x.astype(jnp.bfloat16)           # halves per-step activation DMA

    # Host-side weight prep: degenerate-contraction fix + bf16 MXU operands.
    def sa_prep(sa):
        wq, bq, wk, bk, wv, bv, g = sa
        wqk = (wq @ wk.T).astype(jnp.bfloat16)                    # (C, C)
        bqk = (bq @ wk.T).astype(jnp.float32)                     # (1, C)
        return wqk, bqk, wv.astype(jnp.bfloat16), bv.astype(jnp.float32), g

    wqk1, bqk1, wv1, bv1, g1 = sa_prep(p["sa1"])
    wqk2, bqk2, wv2, bv2, g2 = sa_prep(p["sa2"])
    gammas = jnp.concatenate([g1, g2]).astype(jnp.float32)        # (2,)

    c1w = p["c1_w"].astype(jnp.bfloat16); c1b = p["c1_b"]
    c2w = p["c2_w"].astype(jnp.bfloat16); c2b = p["c2_b"]
    c3w = p["c3_w"].astype(jnp.bfloat16); c3b = p["c3_b"]
    fcw, fcb = p["fc_w"], p["fc_b"]                               # tiny: f32

    # Several images per grid step at small shapes (amortizes step overhead,
    # fills (8,128) vregs).  Pad batch so the grid divides evenly.
    Bb = batch_block if batch_block is not None else min(B, 8)
    pad = (-B) % Bb
    if pad:
        x = jnp.pad(x, ((0, pad), (0, 0), (0, 0)))
    Bp = B + pad

    kv_blk = min(kv_block, N)
    if N % kv_blk:
        kv_blk = N  # TODO(synk): mask/pad a ragged KV tail instead.

    def full(w):  # whole-array VMEM block, resident across the batch grid
        return pl.BlockSpec(w.shape, lambda b: (0,) * w.ndim)

    out = pl.pallas_call(
        functools.partial(_disc_kernel, kv_blk=kv_blk),
        out_shape=jax.ShapeDtypeStruct((Bp, 1), jnp.float32),
        grid=(Bp // Bb,),
        in_specs=[
            pl.BlockSpec(memory_space=pltpu.MemorySpace.SMEM),    # gammas (2,)
            pl.BlockSpec((Bb, N, C), lambda b: (b, 0, 0)),        # x
            full(wqk1), full(bqk1), full(wv1), full(bv1),
            full(c1w), full(c1b), full(c2w), full(c2b),
            full(wqk2), full(bqk2), full(wv2), full(bv2),
            full(c3w), full(c3b), full(fcw), full(fcb),
        ],
        out_specs=pl.BlockSpec((Bb, 1), lambda b: (b, 0)),
        compiler_params=pltpu.CompilerParams(
            dimension_semantics=("parallel",),
            # Explicit scoped-VMEM budget; at production N pick Bb/kv_blk so
            # the (Bb, N, kv_blk) f32 score slab + residents stay under this.
            vmem_limit_bytes=48 * 1024 * 1024),
    )(gammas, x, wqk1, bqk1, wv1, bv1, c1w, c1b, c2w, c2b,
      wqk2, bqk2, wv2, bv2, c3w, c3b, fcw, fcb)
    return out[:B]


# ----------------------------------------------------------------------------
# Pure-JAX f32 reference (standard q/k/v path; validates the Wqk rewrite too).
# ----------------------------------------------------------------------------
def _ref_self_attn(x, wq, bq, wk, bk, wv, bv, gamma):
    q = x @ wq + bq
    k = x @ wk + bk
    v = x @ wv + bv
    energy = jnp.einsum("bnc,bmc->bnm", q, k)
    attn = jax.nn.softmax(energy, axis=-1)
    out = jnp.einsum("bnm,bmc->bnc", attn, v)
    return gamma[0] * out + x


def _ref_lrelu(y):
    return jnp.where(y >= 0, y, NEG_SLOPE * y)


def _ref_forward(x_nchw, p):
    B, C, H, W = x_nchw.shape
    x = jnp.transpose(x_nchw.reshape(B, C, H * W), (0, 2, 1))
    x = _ref_self_attn(x, *p["sa1"])
    x = _ref_lrelu(x @ p["c1_w"] + p["c1_b"])
    x = _ref_lrelu(x @ p["c2_w"] + p["c2_b"])
    x = _ref_self_attn(x, *p["sa2"])
    x = _ref_lrelu(x @ p["c3_w"] + p["c3_b"])
    pooled = jnp.mean(x, axis=1)
    return pooled @ p["fc_w"] + p["fc_b"]


# ----------------------------------------------------------------------------
def _init_params(key, in_ch, filters):
    f = filters
    ks = jax.random.split(key, 20)
    s = 0.1

    def w(k, shape):
        return (s * jax.random.normal(k, shape)).astype(jnp.float32)

    def sa_params(keys, c):
        cq = c // 8
        # NOTE: PyTorch inits gamma = 0 (attention branch disabled).  0.5 is a
        # TEST-ONLY init so the attention path is actually exercised here.
        return (w(keys[0], (c, cq)), w(keys[1], (1, cq)),      # query conv
                w(keys[2], (c, cq)), w(keys[3], (1, cq)),      # key conv
                w(keys[4], (c, c)),  w(keys[5], (1, c)),       # value conv
                jnp.array([0.5], dtype=jnp.float32))           # gamma

    return {
        "sa1": sa_params(ks[0:6], in_ch),
        "c1_w": w(ks[6], (in_ch, f)),       "c1_b": w(ks[7], (1, f)),
        "c2_w": w(ks[8], (f, 2 * f)),       "c2_b": w(ks[9], (1, 2 * f)),
        "sa2": sa_params(ks[10:16], 2 * f),
        "c3_w": w(ks[16], (2 * f, 4 * f)),  "c3_b": w(ks[17], (1, 4 * f)),
        "fc_w": w(ks[18], (4 * f, 1)),      "fc_b": w(ks[19], (1, 1)),
    }


if __name__ == "__main__":
    key = jax.random.PRNGKey(0)
    B, C_in, H, W = 2, 8, 8, 8          # small NCHW input (N = 64)
    filters = 16                        # Discriminator(in_ch=8, shapes, filters=16)

    k_x, k_p = jax.random.split(key)
    x = jax.random.normal(k_x, (B, C_in, H, W), dtype=jnp.float32)
    params = _init_params(k_p, C_in, filters)

    # kv_block=32 -> 2 KV blocks per attention: exercises the online-softmax loop.
    out = jax.block_until_ready(discriminator_forward(x, params, kv_block=32))
    ref = jax.block_until_ready(_ref_forward(x, params))

    assert out.shape == (B, 1), out.shape
    # bf16 MXU operands (f32 accumulation) -> bf16-appropriate tolerance.
    assert jnp.allclose(out, ref, rtol=5e-2, atol=5e-3), (out, ref)
    print("KERNEL_OK")
</pallas_src>

<mosaic_0001>
module attributes {stable_mosaic.version = 11 : i64} {
  func.func @_disc_kernel(%arg0: i32, %arg1: memref<2xf32, #tpu.memory_space<smem>>, %arg2: memref<2x64x8xbf16, #tpu.memory_space<vmem>>, %arg3: memref<8x8xbf16, #tpu.memory_space<vmem>>, %arg4: memref<1x8xf32, #tpu.memory_space<vmem>>, %arg5: memref<8x8xbf16, #tpu.memory_space<vmem>>, %arg6: memref<1x8xf32, #tpu.memory_space<vmem>>, %arg7: memref<8x16xbf16, #tpu.memory_space<vmem>>, %arg8: memref<1x16xf32, #tpu.memory_space<vmem>>, %arg9: memref<16x32xbf16, #tpu.memory_space<vmem>>, %arg10: memref<1x32xf32, #tpu.memory_space<vmem>>, %arg11: memref<32x32xbf16, #tpu.memory_space<vmem>>, %arg12: memref<1x32xf32, #tpu.memory_space<vmem>>, %arg13: memref<32x32xbf16, #tpu.memory_space<vmem>>, %arg14: memref<1x32xf32, #tpu.memory_space<vmem>>, %arg15: memref<32x64xbf16, #tpu.memory_space<vmem>>, %arg16: memref<1x64xf32, #tpu.memory_space<vmem>>, %arg17: memref<64x1xf32, #tpu.memory_space<vmem>>, %arg18: memref<1x1xf32, #tpu.memory_space<vmem>>, %arg19: memref<2x1xf32, #tpu.memory_space<vmem>>) attributes {dimension_semantics = [#tpu.dimension_semantics<parallel>], iteration_bounds = array<i64: 1>, scalar_prefetch = 0 : i64, scratch_operands = 0 : i64, tpu.core_type = #tpu.core_type<tc>, window_params = [{transform_indices = @transform_0, window_bounds = array<i64: 2>}, {transform_indices = @transform_1, window_bounds = array<i64: 2, 64, 8>}, {pipeline_mode = #tpu.pipeline_mode<synchronous>, transform_indices = @transform_2, window_bounds = array<i64: 8, 8>}, {pipeline_mode = #tpu.pipeline_mode<synchronous>, transform_indices = @transform_3, window_bounds = array<i64: 1, 8>}, {pipeline_mode = #tpu.pipeline_mode<synchronous>, transform_indices = @transform_4, window_bounds = array<i64: 8, 8>}, {pipeline_mode = #tpu.pipeline_mode<synchronous>, transform_indices = @transform_5, window_bounds = array<i64: 1, 8>}, {pipeline_mode = #tpu.pipeline_mode<synchronous>, transform_indices = @transform_6, window_bounds = array<i64: 8, 16>}, {pipeline_mode = #tpu.pipeline_mode<synchronous>, transform_indices = @transform_7, window_bounds = array<i64: 1, 16>}, {pipeline_mode = #tpu.pipeline_mode<synchronous>, transform_indices = @transform_8, window_bounds = array<i64: 16, 32>}, {pipeline_mode = #tpu.pipeline_mode<synchronous>, transform_indices = @transform_9, window_bounds = array<i64: 1, 32>}, {pipeline_mode = #tpu.pipeline_mode<synchronous>, transform_indices = @transform_10, window_bounds = array<i64: 32, 32>}, {pipeline_mode = #tpu.pipeline_mode<synchronous>, transform_indices = @transform_11, window_bounds = array<i64: 1, 32>}, {pipeline_mode = #tpu.pipeline_mode<synchronous>, transform_indices = @transform_12, window_bounds = array<i64: 32, 32>}, {pipeline_mode = #tpu.pipeline_mode<synchronous>, transform_indices = @transform_13, window_bounds = array<i64: 1, 32>}, {pipeline_mode = #tpu.pipeline_mode<synchronous>, transform_indices = @transform_14, window_bounds = array<i64: 32, 64>}, {pipeline_mode = #tpu.pipeline_mode<synchronous>, transform_indices = @transform_15, window_bounds = array<i64: 1, 64>}, {pipeline_mode = #tpu.pipeline_mode<synchronous>, transform_indices = @transform_16, window_bounds = array<i64: 64, 1>}, {pipeline_mode = #tpu.pipeline_mode<synchronous>, transform_indices = @transform_17, window_bounds = array<i64: 1, 1>}, {transform_indices = @transform_18, window_bounds = array<i64: 2, 1>}]} {
    %c0 = arith.constant 0 : index
    %c0_0 = arith.constant 0 : index
    %c0_1 = arith.constant 0 : index
    %0 = vector.load %arg2[%c0, %c0_0, %c0_1] : memref<2x64x8xbf16, #tpu.memory_space<vmem>>, vector<2x64x8xbf16>
    %1 = arith.extf %0 : vector<2x64x8xbf16> to vector<2x64x8xf32>
    %c0_2 = arith.constant 0 : index
    %c0_3 = arith.constant 0 : index
    %2 = vector.load %arg3[%c0_2, %c0_3] : memref<8x8xbf16, #tpu.memory_space<vmem>>, vector<8x8xbf16>
    %c0_4 = arith.constant 0 : index
    %c0_5 = arith.constant 0 : index
    %3 = vector.load %arg4[%c0_4, %c0_5] : memref<1x8xf32, #tpu.memory_space<vmem>>, vector<1x8xf32>
    %c0_6 = arith.constant 0 : index
    %c0_7 = arith.constant 0 : index
    %4 = vector.load %arg5[%c0_6, %c0_7] : memref<8x8xbf16, #tpu.memory_space<vmem>>, vector<8x8xbf16>
    %c0_8 = arith.constant 0 : index
    %c0_9 = arith.constant 0 : index
    %5 = vector.load %arg6[%c0_8, %c0_9] : memref<1x8xf32, #tpu.memory_space<vmem>>, vector<1x8xf32>
    %c0_10 = arith.constant 0 : index
    %6 = memref.load %arg1[%c0_10] : memref<2xf32, #tpu.memory_space<smem>>
    %7 = arith.truncf %1 : vector<2x64x8xf32> to vector<2x64x8xbf16>
    %8 = vector.shape_cast %7 : vector<2x64x8xbf16> to vector<128x8xbf16>
    %cst = arith.constant dense<0.000000e+00> : vector<128x8xf32>
    %9 = tpu.matmul %8, %2, %cst {dimension_numbers = #tpu.dot_dimension_numbers<[1], [0], [0], [1], [0, 0, 1, 1], [], []>} : vector<128x8xbf16>, vector<8x8xbf16>, vector<128x8xf32> -> vector<128x8xf32>
    %10 = vector.broadcast %3 : vector<1x8xf32> to vector<128x8xf32>
    %11 = arith.addf %9, %10 : vector<128x8xf32>
    %12 = vector.shape_cast %11 : vector<128x8xf32> to vector<2x64x8xf32>
    %cst_11 = arith.constant dense<0.000000e+00> : vector<128x8xf32>
    %13 = tpu.matmul %8, %4, %cst_11 {dimension_numbers = #tpu.dot_dimension_numbers<[1], [0], [0], [1], [0, 0, 1, 1], [], []>} : vector<128x8xbf16>, vector<8x8xbf16>, vector<128x8xf32> -> vector<128x8xf32>
    %14 = vector.broadcast %5 : vector<1x8xf32> to vector<128x8xf32>
    %15 = arith.addf %13, %14 : vector<128x8xf32>
    %16 = vector.shape_cast %15 : vector<128x8xf32> to vector<2x64x8xf32>
    %17 = arith.truncf %12 : vector<2x64x8xf32> to vector<2x64x8xbf16>
    %18 = arith.truncf %16 : vector<2x64x8xf32> to vector<2x64x8xbf16>
    %cst_12 = arith.constant 0xFF800000 : f32
    %19 = vector.broadcast %cst_12 : f32 to vector<2x64x1xf32>
    %cst_13 = arith.constant 0.000000e+00 : f32
    %20 = vector.broadcast %cst_13 : f32 to vector<2x64x1xf32>
    %cst_14 = arith.constant 0.000000e+00 : f32
    %21 = vector.broadcast %cst_14 : f32 to vector<2x64x8xf32>
    %22 = vector.extract_strided_slice %7 {offsets = [0, 0, 0], sizes = [2, 32, 8], strides = [1, 1, 1]} : vector<2x64x8xbf16> to vector<2x32x8xbf16>
    %23 = vector.extract_strided_slice %18 {offsets = [0, 0, 0], sizes = [2, 32, 8], strides = [1, 1, 1]} : vector<2x64x8xbf16> to vector<2x32x8xbf16>
    "tpu.trace_start"() <{level = 10 : i32, message = "bnc,bkc->bnk"}> : () -> ()
    %cst_15 = arith.constant dense<0.000000e+00> : vector<2x64x32xf32>
    %24 = tpu.matmul %17, %22, %cst_15 {dimension_numbers = #tpu.dot_dimension_numbers<[2], [2], [1], [1], [0, 0, 0, 1, 1, 1], [0], [0]>} : vector<2x64x8xbf16>, vector<2x32x8xbf16>, vector<2x64x32xf32> -> vector<2x64x32xf32>
    "tpu.trace_stop"() : () -> ()
    %cst_16 = arith.constant dense<0xFF800000> : vector<2x64xf32>
    %25 = vector.multi_reduction <maximumf>, %24, %cst_16 [2] : vector<2x64x32xf32> to vector<2x64xf32>
    %26 = vector.shape_cast %25 : vector<2x64xf32> to vector<2x64x1xf32>
    %27 = arith.maximumf %19, %26 : vector<2x64x1xf32>
    %28 = arith.subf %19, %27 : vector<2x64x1xf32>
    %29 = math.exp %28 : vector<2x64x1xf32>
    %30 = vector.broadcast %27 : vector<2x64x1xf32> to vector<2x64x32xf32>
    %31 = arith.subf %24, %30 : vector<2x64x32xf32>
    %32 = math.exp %31 : vector<2x64x32xf32>
    %33 = arith.mulf %29, %20 : vector<2x64x1xf32>
    %cst_17 = arith.constant dense<0.000000e+00> : vector<2x64xf32>
    %34 = vector.multi_reduction <add>, %32, %cst_17 [2] : vector<2x64x32xf32> to vector<2x64xf32>
    %35 = vector.shape_cast %34 : vector<2x64xf32> to vector<2x64x1xf32>
    %36 = arith.addf %33, %35 : vector<2x64x1xf32>
    %37 = vector.broadcast %29 : vector<2x64x1xf32> to vector<2x64x8xf32>
    %38 = arith.mulf %37, %21 : vector<2x64x8xf32>
    %39 = arith.truncf %32 : vector<2x64x32xf32> to vector<2x64x32xbf16>
    "tpu.trace_start"() <{level = 10 : i32, message = "bnk,bkc->bnc"}> : () -> ()
    %cst_18 = arith.constant dense<0.000000e+00> : vector<2x64x8xf32>
    %40 = tpu.matmul %39, %23, %cst_18 {dimension_numbers = #tpu.dot_dimension_numbers<[2], [1], [1], [2], [0, 0, 0, 1, 1, 2], [0], [0]>} : vector<2x64x32xbf16>, vector<2x32x8xbf16>, vector<2x64x8xf32> -> vector<2x64x8xf32>
    "tpu.trace_stop"() : () -> ()
    %41 = arith.addf %38, %40 : vector<2x64x8xf32>
    %42 = vector.extract_strided_slice %7 {offsets = [0, 32, 0], sizes = [2, 32, 8], strides = [1, 1, 1]} : vector<2x64x8xbf16> to vector<2x32x8xbf16>
    %43 = vector.extract_strided_slice %18 {offsets = [0, 32, 0], sizes = [2, 32, 8], strides = [1, 1, 1]} : vector<2x64x8xbf16> to vector<2x32x8xbf16>
    "tpu.trace_start"() <{level = 10 : i32, message = "bnc,bkc->bnk"}> : () -> ()
    %cst_19 = arith.constant dense<0.000000e+00> : vector<2x64x32xf32>
    %44 = tpu.matmul %17, %42, %cst_19 {dimension_numbers = #tpu.dot_dimension_numbers<[2], [2], [1], [1], [0, 0, 0, 1, 1, 1], [0], [0]>} : vector<2x64x8xbf16>, vector<2x32x8xbf16>, vector<2x64x32xf32> -> vector<2x64x32xf32>
    "tpu.trace_stop"() : () -> ()
    %cst_20 = arith.constant dense<0xFF800000> : vector<2x64xf32>
    %45 = vector.multi_reduction <maximumf>, %44, %cst_20 [2] : vector<2x64x32xf32> to vector<2x64xf32>
    %46 = vector.shape_cast %45 : vector<2x64xf32> to vector<2x64x1xf32>
    %47 = arith.maximumf %27, %46 : vector<2x64x1xf32>
    %48 = arith.subf %27, %47 : vector<2x64x1xf32>
    %49 = math.exp %48 : vector<2x64x1xf32>
    %50 = vector.broadcast %47 : vector<2x64x1xf32> to vector<2x64x32xf32>
    %51 = arith.subf %44, %50 : vector<2x64x32xf32>
    %52 = math.exp %51 : vector<2x64x32xf32>
    %53 = arith.mulf %49, %36 : vector<2x64x1xf32>
    %cst_21 = arith.constant dense<0.000000e+00> : vector<2x64xf32>
    %54 = vector.multi_reduction <add>, %52, %cst_21 [2] : vector<2x64x32xf32> to vector<2x64xf32>
    %55 = vector.shape_cast %54 : vector<2x64xf32> to vector<2x64x1xf32>
    %56 = arith.addf %53, %55 : vector<2x64x1xf32>
    %57 = vector.broadcast %49 : vector<2x64x1xf32> to vector<2x64x8xf32>
    %58 = arith.mulf %57, %41 : vector<2x64x8xf32>
    %59 = arith.truncf %52 : vector<2x64x32xf32> to vector<2x64x32xbf16>
    "tpu.trace_start"() <{level = 10 : i32, message = "bnk,bkc->bnc"}> : () -> ()
    %cst_22 = arith.constant dense<0.000000e+00> : vector<2x64x8xf32>
    %60 = tpu.matmul %59, %43, %cst_22 {dimension_numbers = #tpu.dot_dimension_numbers<[2], [1], [1], [2], [0, 0, 0, 1, 1, 2], [0], [0]>} : vector<2x64x32xbf16>, vector<2x32x8xbf16>, vector<2x64x8xf32> -> vector<2x64x8xf32>
    "tpu.trace_stop"() : () -> ()
    %61 = arith.addf %58, %60 : vector<2x64x8xf32>
    %62 = tpu.reciprocal %56 {approx = true} : vector<2x64x1xf32> -> vector<2x64x1xf32>
    %63 = vector.broadcast %62 : vector<2x64x1xf32> to vector<2x64x8xf32>
    %64 = arith.mulf %61, %63 : vector<2x64x8xf32>
    %65 = vector.broadcast %6 : f32 to vector<2x64x8xf32>
    %66 = arith.mulf %65, %64 : vector<2x64x8xf32>
    %67 = arith.addf %66, %1 : vector<2x64x8xf32>
    %c0_23 = arith.constant 0 : index
    %c0_24 = arith.constant 0 : index
    %68 = vector.load %arg7[%c0_23, %c0_24] : memref<8x16xbf16, #tpu.memory_space<vmem>>, vector<8x16xbf16>
    %c0_25 = arith.constant 0 : index
    %c0_26 = arith.constant 0 : index
    %69 = vector.load %arg8[%c0_25, %c0_26] : memref<1x16xf32, #tpu.memory_space<vmem>>, vector<1x16xf32>
    %70 = vector.shape_cast %67 : vector<2x64x8xf32> to vector<128x8xf32>
    %71 = arith.truncf %70 : vector<128x8xf32> to vector<128x8xbf16>
    %cst_27 = arith.constant dense<0.000000e+00> : vector<128x16xf32>
    %72 = tpu.matmul %71, %68, %cst_27 {dimension_numbers = #tpu.dot_dimension_numbers<[1], [0], [0], [1], [0, 0, 1, 1], [], []>} : vector<128x8xbf16>, vector<8x16xbf16>, vector<128x16xf32> -> vector<128x16xf32>
    %73 = vector.broadcast %69 : vector<1x16xf32> to vector<128x16xf32>
    %74 = arith.addf %72, %73 : vector<128x16xf32>
    %75 = vector.shape_cast %74 : vector<128x16xf32> to vector<2x64x16xf32>
    %cst_28 = arith.constant 0.00999999977 : f32
    %76 = vector.broadcast %cst_28 : f32 to vector<2x64x16xf32>
    %77 = arith.mulf %76, %75 : vector<2x64x16xf32>
    %78 = arith.maximumf %75, %77 : vector<2x64x16xf32>
    %c0_29 = arith.constant 0 : index
    %c0_30 = arith.constant 0 : index
    %79 = vector.load %arg9[%c0_29, %c0_30] : memref<16x32xbf16, #tpu.memory_space<vmem>>, vector<16x32xbf16>
    %c0_31 = arith.constant 0 : index
    %c0_32 = arith.constant 0 : index
    %80 = vector.load %arg10[%c0_31, %c0_32] : memref<1x32xf32, #tpu.memory_space<vmem>>, vector<1x32xf32>
    %81 = vector.shape_cast %78 : vector<2x64x16xf32> to vector<128x16xf32>
    %82 = arith.truncf %81 : vector<128x16xf32> to vector<128x16xbf16>
    %cst_33 = arith.constant dense<0.000000e+00> : vector<128x32xf32>
    %83 = tpu.matmul %82, %79, %cst_33 {dimension_numbers = #tpu.dot_dimension_numbers<[1], [0], [0], [1], [0, 0, 1, 1], [], []>} : vector<128x16xbf16>, vector<16x32xbf16>, vector<128x32xf32> -> vector<128x32xf32>
    %84 = vector.broadcast %80 : vector<1x32xf32> to vector<128x32xf32>
    %85 = arith.addf %83, %84 : vector<128x32xf32>
    %86 = vector.shape_cast %85 : vector<128x32xf32> to vector<2x64x32xf32>
    %cst_34 = arith.constant 0.00999999977 : f32
    %87 = vector.broadcast %cst_34 : f32 to vector<2x64x32xf32>
    %88 = arith.mulf %87, %86 : vector<2x64x32xf32>
    %89 = arith.maximumf %86, %88 : vector<2x64x32xf32>
    %c0_35 = arith.constant 0 : index
    %c0_36 = arith.constant 0 : index
    %90 = vector.load %arg11[%c0_35, %c0_36] : memref<32x32xbf16, #tpu.memory_space<vmem>>, vector<32x32xbf16>
    %c0_37 = arith.constant 0 : index
    %c0_38 = arith.constant 0 : index
    %91 = vector.load %arg12[%c0_37, %c0_38] : memref<1x32xf32, #tpu.memory_space<vmem>>, vector<1x32xf32>
    %c0_39 = arith.constant 0 : index
    %c0_40 = arith.constant 0 : index
    %92 = vector.load %arg13[%c0_39, %c0_40] : memref<32x32xbf16, #tpu.memory_space<vmem>>, vector<32x32xbf16>
    %c0_41 = arith.constant 0 : index
    %c0_42 = arith.constant 0 : index
    %93 = vector.load %arg14[%c0_41, %c0_42] : memref<1x32xf32, #tpu.memory_space<vmem>>, vector<1x32xf32>
    %c1 = arith.constant 1 : index
    %94 = memref.load %arg1[%c1] : memref<2xf32, #tpu.memory_space<smem>>
    %95 = arith.truncf %89 : vector<2x64x32xf32> to vector<2x64x32xbf16>
    %96 = vector.shape_cast %95 : vector<2x64x32xbf16> to vector<128x32xbf16>
    %cst_43 = arith.constant dense<0.000000e+00> : vector<128x32xf32>
    %97 = tpu.matmul %96, %90, %cst_43 {dimension_numbers = #tpu.dot_dimension_numbers<[1], [0], [0], [1], [0, 0, 1, 1], [], []>} : vector<128x32xbf16>, vector<32x32xbf16>, vector<128x32xf32> -> vector<128x32xf32>
    %98 = vector.broadcast %91 : vector<1x32xf32> to vector<128x32xf32>
    %99 = arith.addf %97, %98 : vector<128x32xf32>
    %100 = vector.shape_cast %99 : vector<128x32xf32> to vector<2x64x32xf32>
    %cst_44 = arith.constant dense<0.000000e+00> : vector<128x32xf32>
    %101 = tpu.matmul %96, %92, %cst_44 {dimension_numbers = #tpu.dot_dimension_numbers<[1], [0], [0], [1], [0, 0, 1, 1], [], []>} : vector<128x32xbf16>, vector<32x32xbf16>, vector<128x32xf32> -> vector<128x32xf32>
    %102 = vector.broadcast %93 : vector<1x32xf32> to vector<128x32xf32>
    %103 = arith.addf %101, %102 : vector<128x32xf32>
    %104 = vector.shape_cast %103 : vector<128x32xf32> to vector<2x64x32xf32>
    %105 = arith.truncf %100 : vector<2x64x32xf32> to vector<2x64x32xbf16>
    %106 = arith.truncf %104 : vector<2x64x32xf32> to vector<2x64x32xbf16>
    %cst_45 = arith.constant 0xFF800000 : f32
    %107 = vector.broadcast %cst_45 : f32 to vector<2x64x1xf32>
    %cst_46 = arith.constant 0.000000e+00 : f32
    %108 = vector.broadcast %cst_46 : f32 to vector<2x64x1xf32>
    %cst_47 = arith.constant 0.000000e+00 : f32
    %109 = vector.broadcast %cst_47 : f32 to vector<2x64x32xf32>
    %110 = vector.extract_strided_slice %95 {offsets = [0, 0, 0], sizes = [2, 32, 32], strides = [1, 1, 1]} : vector<2x64x32xbf16> to vector<2x32x32xbf16>
    %111 = vector.extract_strided_slice %106 {offsets = [0, 0, 0], sizes = [2, 32, 32], strides = [1, 1, 1]} : vector<2x64x32xbf16> to vector<2x32x32xbf16>
    "tpu.trace_start"() <{level = 10 : i32, message = "bnc,bkc->bnk"}> : () -> ()
    %cst_48 = arith.constant dense<0.000000e+00> : vector<2x64x32xf32>
    %112 = tpu.matmul %105, %110, %cst_48 {dimension_numbers = #tpu.dot_dimension_numbers<[2], [2], [1], [1], [0, 0, 0, 1, 1, 1], [0], [0]>} : vector<2x64x32xbf16>, vector<2x32x32xbf16>, vector<2x64x32xf32> -> vector<2x64x32xf32>
    "tpu.trace_stop"() : () -> ()
    %cst_49 = arith.constant dense<0xFF800000> : vector<2x64xf32>
    %113 = vector.multi_reduction <maximumf>, %112, %cst_49 [2] : vector<2x64x32xf32> to vector<2x64xf32>
    %114 = vector.shape_cast %113 : vector<2x64xf32> to vector<2x64x1xf32>
    %115 = arith.maximumf %107, %114 : vector<2x64x1xf32>
    %116 = arith.subf %107, %115 : vector<2x64x1xf32>
    %117 = math.exp %116 : vector<2x64x1xf32>
    %118 = vector.broadcast %115 : vector<2x64x1xf32> to vector<2x64x32xf32>
    %119 = arith.subf %112, %118 : vector<2x64x32xf32>
    %120 = math.exp %119 : vector<2x64x32xf32>
    %121 = arith.mulf %117, %108 : vector<2x64x1xf32>
    %cst_50 = arith.constant dense<0.000000e+00> : vector<2x64xf32>
    %122 = vector.multi_reduction <add>, %120, %cst_50 [2] : vector<2x64x32xf32> to vector<2x64xf32>
    %123 = vector.shape_cast %122 : vector<2x64xf32> to vector<2x64x1xf32>
    %124 = arith.addf %121, %123 : vector<2x64x1xf32>
    %125 = vector.broadcast %117 : vector<2x64x1xf32> to vector<2x64x32xf32>
    %126 = arith.mulf %125, %109 : vector<2x64x32xf32>
    %127 = arith.truncf %120 : vector<2x64x32xf32> to vector<2x64x32xbf16>
    "tpu.trace_start"() <{level = 10 : i32, message = "bnk,bkc->bnc"}> : () -> ()
    %cst_51 = arith.constant dense<0.000000e+00> : vector<2x64x32xf32>
    %128 = tpu.matmul %127, %111, %cst_51 {dimension_numbers = #tpu.dot_dimension_numbers<[2], [1], [1], [2], [0, 0, 0, 1, 1, 2], [0], [0]>} : vector<2x64x32xbf16>, vector<2x32x32xbf16>, vector<2x64x32xf32> -> vector<2x64x32xf32>
    "tpu.trace_stop"() : () -> ()
    %129 = arith.addf %126, %128 : vector<2x64x32xf32>
    %130 = vector.extract_strided_slice %95 {offsets = [0, 32, 0], sizes = [2, 32, 32], strides = [1, 1, 1]} : vector<2x64x32xbf16> to vector<2x32x32xbf16>
    %131 = vector.extract_strided_slice %106 {offsets = [0, 32, 0], sizes = [2, 32, 32], strides = [1, 1, 1]} : vector<2x64x32xbf16> to vector<2x32x32xbf16>
    "tpu.trace_start"() <{level = 10 : i32, message = "bnc,bkc->bnk"}> : () -> ()
    %cst_52 = arith.constant dense<0.000000e+00> : vector<2x64x32xf32>
    %132 = tpu.matmul %105, %130, %cst_52 {dimension_numbers = #tpu.dot_dimension_numbers<[2], [2], [1], [1], [0, 0, 0, 1, 1, 1], [0], [0]>} : vector<2x64x32xbf16>, vector<2x32x32xbf16>, vector<2x64x32xf32> -> vector<2x64x32xf32>
    "tpu.trace_stop"() : () -> ()
    %cst_53 = arith.constant dense<0xFF800000> : vector<2x64xf32>
    %133 = vector.multi_reduction <maximumf>, %132, %cst_53 [2] : vector<2x64x32xf32> to vector<2x64xf32>
    %134 = vector.shape_cast %133 : vector<2x64xf32> to vector<2x64x1xf32>
    %135 = arith.maximumf %115, %134 : vector<2x64x1xf32>
    %136 = arith.subf %115, %135 : vector<2x64x1xf32>
    %137 = math.exp %136 : vector<2x64x1xf32>
    %138 = vector.broadcast %135 : vector<2x64x1xf32> to vector<2x64x32xf32>
    %139 = arith.subf %132, %138 : vector<2x64x32xf32>
    %140 = math.exp %139 : vector<2x64x32xf32>
    %141 = arith.mulf %137, %124 : vector<2x64x1xf32>
    %cst_54 = arith.constant dense<0.000000e+00> : vector<2x64xf32>
    %142 = vector.multi_reduction <add>, %140, %cst_54 [2] : vector<2x64x32xf32> to vector<2x64xf32>
    %143 = vector.shape_cast %142 : vector<2x64xf32> to vector<2x64x1xf32>
    %144 = arith.addf %141, %143 : vector<2x64x1xf32>
    %145 = vector.broadcast %137 : vector<2x64x1xf32> to vector<2x64x32xf32>
    %146 = arith.mulf %145, %129 : vector<2x64x32xf32>
    %147 = arith.truncf %140 : vector<2x64x32xf32> to vector<2x64x32xbf16>
    "tpu.trace_start"() <{level = 10 : i32, message = "bnk,bkc->bnc"}> : () -> ()
    %cst_55 = arith.constant dense<0.000000e+00> : vector<2x64x32xf32>
    %148 = tpu.matmul %147, %131, %cst_55 {dimension_numbers = #tpu.dot_dimension_numbers<[2], [1], [1], [2], [0, 0, 0, 1, 1, 2], [0], [0]>} : vector<2x64x32xbf16>, vector<2x32x32xbf16>, vector<2x64x32xf32> -> vector<2x64x32xf32>
    "tpu.trace_stop"() : () -> ()
    %149 = arith.addf %146, %148 : vector<2x64x32xf32>
    %150 = tpu.reciprocal %144 {approx = true} : vector<2x64x1xf32> -> vector<2x64x1xf32>
    %151 = vector.broadcast %150 : vector<2x64x1xf32> to vector<2x64x32xf32>
    %152 = arith.mulf %149, %151 : vector<2x64x32xf32>
    %153 = vector.broadcast %94 : f32 to vector<2x64x32xf32>
    %154 = arith.mulf %153, %152 : vector<2x64x32xf32>
    %155 = arith.addf %154, %89 : vector<2x64x32xf32>
    %c0_56 = arith.constant 0 : index
    %c0_57 = arith.constant 0 : index
    %156 = vector.load %arg15[%c0_56, %c0_57] : memref<32x64xbf16, #tpu.memory_space<vmem>>, vector<32x64xbf16>
    %c0_58 = arith.constant 0 : index
    %c0_59 = arith.constant 0 : index
    %157 = vector.load %arg16[%c0_58, %c0_59] : memref<1x64xf32, #tpu.memory_space<vmem>>, vector<1x64xf32>
    %158 = vector.shape_cast %155 : vector<2x64x32xf32> to vector<128x32xf32>
    %159 = arith.truncf %158 : vector<128x32xf32> to vector<128x32xbf16>
    %cst_60 = arith.constant dense<0.000000e+00> : vector<128x64xf32>
    %160 = tpu.matmul %159, %156, %cst_60 {dimension_numbers = #tpu.dot_dimension_numbers<[1], [0], [0], [1], [0, 0, 1, 1], [], []>} : vector<128x32xbf16>, vector<32x64xbf16>, vector<128x64xf32> -> vector<128x64xf32>
    %161 = vector.broadcast %157 : vector<1x64xf32> to vector<128x64xf32>
    %162 = arith.addf %160, %161 : vector<128x64xf32>
    %163 = vector.shape_cast %162 : vector<128x64xf32> to vector<2x64x64xf32>
    %cst_61 = arith.constant 0.00999999977 : f32
    %164 = vector.broadcast %cst_61 : f32 to vector<2x64x64xf32>
    %165 = arith.mulf %164, %163 : vector<2x64x64xf32>
    %166 = arith.maximumf %163, %165 : vector<2x64x64xf32>
    %cst_62 = arith.constant dense<0.000000e+00> : vector<2x64xf32>
    %167 = vector.multi_reduction <add>, %166, %cst_62 [1] : vector<2x64x64xf32> to vector<2x64xf32>
    %cst_63 = arith.constant 6.400000e+01 : f32
    %168 = vector.broadcast %cst_63 : f32 to vector<2x64xf32>
    %169 = arith.divf %167, %168 : vector<2x64xf32>
    %c0_64 = arith.constant 0 : index
    %c0_65 = arith.constant 0 : index
    %170 = vector.load %arg17[%c0_64, %c0_65] : memref<64x1xf32, #tpu.memory_space<vmem>>, vector<64x1xf32>
    %cst_66 = arith.constant dense<0.000000e+00> : vector<2x1xf32>
    %171 = tpu.matmul %169, %170, %cst_66 {dimension_numbers = #tpu.dot_dimension_numbers<[1], [0], [0], [1], [0, 0, 1, 1], [], []>} : vector<2x64xf32>, vector<64x1xf32>, vector<2x1xf32> -> vector<2x1xf32>
    %c0_67 = arith.constant 0 : index
    %c0_68 = arith.constant 0 : index
    %172 = vector.load %arg18[%c0_67, %c0_68] : memref<1x1xf32, #tpu.memory_space<vmem>>, vector<1x1xf32>
    %173 = vector.broadcast %172 : vector<1x1xf32> to vector<2x1xf32>
    %174 = arith.addf %171, %173 : vector<2x1xf32>
    %c0_69 = arith.constant 0 : index
    %c0_70 = arith.constant 0 : index
    %175 = vector.load %arg19[%c0_69, %c0_70] : memref<2x1xf32, #tpu.memory_space<vmem>>, vector<2x1xf32>
    tpu.vector_store %arg19[%c0_69, %c0_70], %174 {strides = array<i32>} : memref<2x1xf32, #tpu.memory_space<vmem>>, vector<2x1xf32>,
    return
  }
  func.func @transform_0(%arg0: i32) -> i32 {
    %c0_i32 = arith.constant 0 : i32
    %c0_i32_0 = arith.constant 0 : i32
    return %c0_i32 : i32
  }
  func.func @transform_1(%arg0: i32) -> (i32, i32, i32) {
    %c0_i32 = arith.constant 0 : i32
    %c0_i32_0 = arith.constant 0 : i32
    %c0_i32_1 = arith.constant 0 : i32
    return %arg0, %c0_i32, %c0_i32_0 : i32, i32, i32
  }
  func.func @transform_2(%arg0: i32) -> (i32, i32) {
    %c0_i32 = arith.constant 0 : i32
    %c0_i32_0 = arith.constant 0 : i32
    %c0_i32_1 = arith.constant 0 : i32
    return %c0_i32, %c0_i32_0 : i32, i32
  }
  func.func @transform_3(%arg0: i32) -> (i32, i32) {
    %c0_i32 = arith.constant 0 : i32
    %c0_i32_0 = arith.constant 0 : i32
    %c0_i32_1 = arith.constant 0 : i32
    return %c0_i32, %c0_i32_0 : i32, i32
  }
  func.func @transform_4(%arg0: i32) -> (i32, i32) {
    %c0_i32 = arith.constant 0 : i32
    %c0_i32_0 = arith.constant 0 : i32
    %c0_i32_1 = arith.constant 0 : i32
    return %c0_i32, %c0_i32_0 : i32, i32
  }
  func.func @transform_5(%arg0: i32) -> (i32, i32) {
    %c0_i32 = arith.constant 0 : i32
    %c0_i32_0 = arith.constant 0 : i32
    %c0_i32_1 = arith.constant 0 : i32
    return %c0_i32, %c0_i32_0 : i32, i32
  }
  func.func @transform_6(%arg0: i32) -> (i32, i32) {
    %c0_i32 = arith.constant 0 : i32
    %c0_i32_0 = arith.constant 0 : i32
    %c0_i32_1 = arith.constant 0 : i32
    return %c0_i32, %c0_i32_0 : i32, i32
  }
  func.func @transform_7(%arg0: i32) -> (i32, i32) {
    %c0_i32 = arith.constant 0 : i32
    %c0_i32_0 = arith.constant 0 : i32
    %c0_i32_1 = arith.constant 0 : i32
    return %c0_i32, %c0_i32_0 : i32, i32
  }
  func.func @transform_8(%arg0: i32) -> (i32, i32) {
    %c0_i32 = arith.constant 0 : i32
    %c0_i32_0 = arith.constant 0 : i32
    %c0_i32_1 = arith.constant 0 : i32
    return %c0_i32, %c0_i32_0 : i32, i32
  }
  func.func @transform_9(%arg0: i32) -> (i32, i32) {
    %c0_i32 = arith.constant 0 : i32
    %c0_i32_0 = arith.constant 0 : i32
    %c0_i32_1 = arith.constant 0 : i32
    return %c0_i32, %c0_i32_0 : i32, i32
  }
  func.func @transform_10(%arg0: i32) -> (i32, i32) {
    %c0_i32 = arith.constant 0 : i32
    %c0_i32_0 = arith.constant 0 : i32
    %c0_i32_1 = arith.constant 0 : i32
    return %c0_i32, %c0_i32_0 : i32, i32
  }
  func.func @transform_11(%arg0: i32) -> (i32, i32) {
    %c0_i32 = arith.constant 0 : i32
    %c0_i32_0 = arith.constant 0 : i32
    %c0_i32_1 = arith.constant 0 : i32
    return %c0_i32, %c0_i32_0 : i32, i32
  }
  func.func @transform_12(%arg0: i32) -> (i32, i32) {
    %c0_i32 = arith.constant 0 : i32
    %c0_i32_0 = arith.constant 0 : i32
    %c0_i32_1 = arith.constant 0 : i32
    return %c0_i32, %c0_i32_0 : i32, i32
  }
  func.func @transform_13(%arg0: i32) -> (i32, i32) {
    %c0_i32 = arith.constant 0 : i32
    %c0_i32_0 = arith.constant 0 : i32
    %c0_i32_1 = arith.constant 0 : i32
    return %c0_i32, %c0_i32_0 : i32, i32
  }
  func.func @transform_14(%arg0: i32) -> (i32, i32) {
    %c0_i32 = arith.constant 0 : i32
    %c0_i32_0 = arith.constant 0 : i32
    %c0_i32_1 = arith.constant 0 : i32
    return %c0_i32, %c0_i32_0 : i32, i32
  }
  func.func @transform_15(%arg0: i32) -> (i32, i32) {
    %c0_i32 = arith.constant 0 : i32
    %c0_i32_0 = arith.constant 0 : i32
    %c0_i32_1 = arith.constant 0 : i32
    return %c0_i32, %c0_i32_0 : i32, i32
  }
  func.func @transform_16(%arg0: i32) -> (i32, i32) {
    %c0_i32 = arith.constant 0 : i32
    %c0_i32_0 = arith.constant 0 : i32
    %c0_i32_1 = arith.constant 0 : i32
    return %c0_i32, %c0_i32_0 : i32, i32
  }
  func.func @transform_17(%arg0: i32) -> (i32, i32) {
    %c0_i32 = arith.constant 0 : i32
    %c0_i32_0 = arith.constant 0 : i32
    %c0_i32_1 = arith.constant 0 : i32
    return %c0_i32, %c0_i32_0 : i32, i32
  }
  func.func @transform_18(%arg0: i32) -> (i32, i32) {
    %c0_i32 = arith.constant 0 : i32
    %c0_i32_0 = arith.constant 0 : i32
    return %arg0, %c0_i32 : i32, i32
  }
}

</mosaic_0001>

<llo_original>
// kernel: tpu_custom_call.1
$region0: #{tpu_custom_call.1}
  #allocation0 [shape = 'u32[]', space=smem, size = 0x4, offset = 0x4, fixed_abs, tag = 'smem constant byte address 0x4 - core index']
  #allocation1 [shape = 'u32[144,128]{1,0:T(1,128)}', space=vmem, size = 0x12000, scoped, tag = 'internal scratch']
  #allocation2 [shape = 'f32[1,1]{1,0:T(1,128)S(1)}', space=vmem, size = 0x200, scoped, tag = 'scoped memory for tpu_custom_call.1']
  %s0 = inlined_call_operand.vmem [shape: f32[2], index: 0, kind: input, shape index: {}]
  %s1 = inlined_call_operand.vmem [shape: bf16[2,64,8], index: 1, kind: input, shape index: {}]
  %s2 = inlined_call_operand.vmem [shape: bf16[8,8], index: 2, kind: input, shape index: {}]
  %s3 = inlined_call_operand.vmem [shape: f32[1,8], index: 3, kind: input, shape index: {}]
  %s4 = inlined_call_operand.vmem [shape: bf16[8,8], index: 4, kind: input, shape index: {}]
  %s5 = inlined_call_operand.vmem [shape: f32[1,8], index: 5, kind: input, shape index: {}]
  %s6 = inlined_call_operand.vmem [shape: bf16[8,16], index: 6, kind: input, shape index: {}]
  %s7 = inlined_call_operand.vmem [shape: f32[1,16], index: 7, kind: input, shape index: {}]
  %s8 = inlined_call_operand.vmem [shape: bf16[16,32], index: 8, kind: input, shape index: {}]
  %s9 = inlined_call_operand.vmem [shape: f32[1,32], index: 9, kind: input, shape index: {}]
  %s10 = inlined_call_operand.vmem [shape: bf16[32,32], index: 10, kind: input, shape index: {}]
  %s11 = inlined_call_operand.vmem [shape: f32[1,32], index: 11, kind: input, shape index: {}]
  %s12 = inlined_call_operand.vmem [shape: bf16[32,32], index: 12, kind: input, shape index: {}]
  %s13 = inlined_call_operand.vmem [shape: f32[1,32], index: 13, kind: input, shape index: {}]
  %s14 = inlined_call_operand.vmem [shape: bf16[32,64], index: 14, kind: input, shape index: {}]
  %s15 = inlined_call_operand.vmem [shape: f32[1,64], index: 15, kind: input, shape index: {}]
  %s16 = inlined_call_operand.vmem [shape: f32[64,1], index: 16, kind: input, shape index: {}]
  %s17 = inlined_call_operand.<no memory space> [shape: f32[1,1], index: 17, kind: input, shape index: {}]
  %s18 = inlined_call_operand.vmem [shape: f32[2,1], index: 18, kind: output, shape index: {}]
  %s19 = sld [smem:[#allocation0]]
  $region86: #{tpu_custom_call.1} parent=0
    _
  %s21 = ssub.s32 1, %s19
  %s22 = scalar_select 0, %s21, %s19
  %v23 = vstv %s17
  %24 = vst [vmem:[#allocation2] sm:$0x1] %v23
  $region1: #{tpu_custom_call.1} parent=0
    #allocation3 [shape = 'u8[512]{0}', space=smem, size = 0x200, scoped, tag = 'input window, operand 0, single buffered']
    #allocation4 [shape = 's32[1]{0}', space=sflag, size = 0x4, scoped, tag = 'scoped memory for tpu_custom_call.1']
    %25 = vsyncpa [#allocation4], 0
    // Predicated region
    $region2: #{tpu_custom_call.1} parent=1 // pred_check
      _
    $region3: #{tpu_custom_call.1} parent=1 // pred_check_branch
      %27 = sbr.rel (0) target = $region5
    $region4: #{tpu_custom_call.1} parent=1 // pred_region
      %s29 = ssub.s32 16, 16
      %30 = vsyncadd [#allocation4], %s29
      %s32 = sshll.u32 %s0, 4
      %s33 = int_to_ptr.vmem [resolvable:$true] %s32
      %35 = dma.vmem_to_smem %s33, 16, [#allocation3], [#allocation4]
    $region5: #{tpu_custom_call.1} parent=1 // pred_fallthru
      _
    // Predicated region
    $region6: #{tpu_custom_call.1} parent=1 // pred_check
      _
    $region7: #{tpu_custom_call.1} parent=1 // pred_check_branch
      %37 = sbr.rel (0) target = $region9
    $region8: #{tpu_custom_call.1} parent=1 // pred_region
      _
    $region9: #{tpu_custom_call.1} parent=1 // pred_fallthru
      _
    // Predicated region
    $region10: #{tpu_custom_call.1} parent=1 // pred_check
      _
    $region11: #{tpu_custom_call.1} parent=1 // pred_check_branch
      %39 = sbr.rel (0) target = $region13
    $region12: #{tpu_custom_call.1} parent=1 // pred_region
      _
    $region13: #{tpu_custom_call.1} parent=1 // pred_fallthru
      _
    // Predicated region
    $region14: #{tpu_custom_call.1} parent=1 // pred_check
      _
    $region15: #{tpu_custom_call.1} parent=1 // pred_check_branch
      %41 = sbr.rel (0) target = $region17
    $region16: #{tpu_custom_call.1} parent=1 // pred_region
      _
    $region17: #{tpu_custom_call.1} parent=1 // pred_fallthru
      _
    // Predicated region
    $region18: #{tpu_custom_call.1} parent=1 // pred_check
      _
    $region19: #{tpu_custom_call.1} parent=1 // pred_check_branch
      %43 = sbr.rel (0) target = $region21
    $region20: #{tpu_custom_call.1} parent=1 // pred_region
      _
    $region21: #{tpu_custom_call.1} parent=1 // pred_fallthru
      _
    // Predicated region
    $region22: #{tpu_custom_call.1} parent=1 // pred_check
      _
    $region23: #{tpu_custom_call.1} parent=1 // pred_check_branch
      %45 = sbr.rel (0) target = $region25
    $region24: #{tpu_custom_call.1} parent=1 // pred_region
      _
    $region25: #{tpu_custom_call.1} parent=1 // pred_fallthru
      _
    // Predicated region
    $region26: #{tpu_custom_call.1} parent=1 // pred_check
      _
    $region27: #{tpu_custom_call.1} parent=1 // pred_check_branch
      %47 = sbr.rel (0) target = $region29
    $region28: #{tpu_custom_call.1} parent=1 // pred_region
      _
    $region29: #{tpu_custom_call.1} parent=1 // pred_fallthru
      _
    // Predicated region
    $region30: #{tpu_custom_call.1} parent=1 // pred_check
      _
    $region31: #{tpu_custom_call.1} parent=1 // pred_check_branch
      %49 = sbr.rel (0) target = $region33
    $region32: #{tpu_custom_call.1} parent=1 // pred_region
      _
    $region33: #{tpu_custom_call.1} parent=1 // pred_fallthru
      _
    // Predicated region
    $region34: #{tpu_custom_call.1} parent=1 // pred_check
      _
    $region35: #{tpu_custom_call.1} parent=1 // pred_check_branch
      %51 = sbr.rel (0) target = $region37
    $region36: #{tpu_custom_call.1} parent=1 // pred_region
      _
    $region37: #{tpu_custom_call.1} parent=1 // pred_fallthru
      _
    // Predicated region
    $region38: #{tpu_custom_call.1} parent=1 // pred_check
      _
    $region39: #{tpu_custom_call.1} parent=1 // pred_check_branch
      %53 = sbr.rel (0) target = $region41
    $region40: #{tpu_custom_call.1} parent=1 // pred_region
      _
    $region41: #{tpu_custom_call.1} parent=1 // pred_fallthru
      _
    // Predicated region
    $region42: #{tpu_custom_call.1} parent=1 // pred_check
      _
    $region43: #{tpu_custom_call.1} parent=1 // pred_check_branch
      %55 = sbr.rel (0) target = $region45
    $region44: #{tpu_custom_call.1} parent=1 // pred_region
      _
    $region45: #{tpu_custom_call.1} parent=1 // pred_fallthru
      _
    // Predicated region
    $region46: #{tpu_custom_call.1} parent=1 // pred_check
      _
    $region47: #{tpu_custom_call.1} parent=1 // pred_check_branch
      %57 = sbr.rel (0) target = $region49
    $region48: #{tpu_custom_call.1} parent=1 // pred_region
      _
    $region49: #{tpu_custom_call.1} parent=1 // pred_fallthru
      _
    // Predicated region
    $region50: #{tpu_custom_call.1} parent=1 // pred_check
      _
    $region51: #{tpu_custom_call.1} parent=1 // pred_check_branch
      %59 = sbr.rel (0) target = $region53
    $region52: #{tpu_custom_call.1} parent=1 // pred_region
      _
    $region53: #{tpu_custom_call.1} parent=1 // pred_fallthru
      _
    // Predicated region
    $region54: #{tpu_custom_call.1} parent=1 // pred_check
      _
    $region55: #{tpu_custom_call.1} parent=1 // pred_check_branch
      %61 = sbr.rel (0) target = $region57
    $region56: #{tpu_custom_call.1} parent=1 // pred_region
      _
    $region57: #{tpu_custom_call.1} parent=1 // pred_fallthru
      _
    // Predicated region
    $region58: #{tpu_custom_call.1} parent=1 // pred_check
      _
    $region59: #{tpu_custom_call.1} parent=1 // pred_check_branch
      %63 = sbr.rel (0) target = $region61
    $region60: #{tpu_custom_call.1} parent=1 // pred_region
      _
    $region61: #{tpu_custom_call.1} parent=1 // pred_fallthru
      _
    // Predicated region
    $region62: #{tpu_custom_call.1} parent=1 // pred_check
      _
    $region63: #{tpu_custom_call.1} parent=1 // pred_check_branch
      %65 = sbr.rel (0) target = $region65
    $region64: #{tpu_custom_call.1} parent=1 // pred_region
      _
    $region65: #{tpu_custom_call.1} parent=1 // pred_fallthru
      _
    // Predicated region
    $region66: #{tpu_custom_call.1} parent=1 // pred_check
      _
    $region67: #{tpu_custom_call.1} parent=1 // pred_check_branch
      %67 = sbr.rel (0) target = $region69
    $region68: #{tpu_custom_call.1} parent=1 // pred_region
      _
    $region69: #{tpu_custom_call.1} parent=1 // pred_fallthru
      _
    // Predicated region
    $region70: #{tpu_custom_call.1} parent=1 // pred_check
      _
    $region71: #{tpu_custom_call.1} parent=1 // pred_check_branch
      %69 = sbr.rel (0) target = $region73
    $region72: #{tpu_custom_call.1} parent=1 // pred_region
      _
    $region73: #{tpu_custom_call.1} parent=1 // pred_fallthru
      _
    // Predicated region
    $region74: #{tpu_custom_call.1} parent=1 // pred_check
      _
    $region75: #{tpu_custom_call.1} parent=1 // pred_check_branch
      %71 = sbr.rel (0) target = $region77
    $region76: #{tpu_custom_call.1} parent=1 // pred_region
      %72 = dma.done [#allocation4], 16
    $region77: #{tpu_custom_call.1} parent=1 // pred_fallthru
      _
    %73 = sfence
    %v75 = vld [vmem:[%s1] sm:$0xf]
    %v76 = vld [vmem:[%s1 + $0x4] sm:$0xf]
    %v77 = vld [vmem:[%s1 + $0x8] sm:$0xf]
    %v78 = vld [vmem:[%s1 + $0xc] sm:$0xf]
    %v79 = vld [vmem:[%s1 + $0x10] sm:$0xf]
    %v80 = vld [vmem:[%s1 + $0x14] sm:$0xf]
    %v81 = vld [vmem:[%s1 + $0x18] sm:$0xf]
    %v82 = vld [vmem:[%s1 + $0x1c] sm:$0xf]
    %v83 = vld [vmem:[%s1 + $0x20] sm:$0xf]
    %v84 = vld [vmem:[%s1 + $0x24] sm:$0xf]
    %v85 = vld [vmem:[%s1 + $0x28] sm:$0xf]
    %v86 = vld [vmem:[%s1 + $0x2c] sm:$0xf]
    %v87 = vld [vmem:[%s1 + $0x30] sm:$0xf]
    %v88 = vld [vmem:[%s1 + $0x34] sm:$0xf]
    %v89 = vld [vmem:[%s1 + $0x38] sm:$0xf]
    %v90 = vld [vmem:[%s1 + $0x3c] sm:$0xf]
    %v91 = vunpack.c.l.bf16 %v75
    %v92 = vunpack.c.l.bf16 %v76
    %v93 = vunpack.c.l.bf16 %v77
    %v94 = vunpack.c.l.bf16 %v78
    %v95 = vunpack.c.l.bf16 %v79
    %v96 = vunpack.c.l.bf16 %v80
    %v97 = vunpack.c.l.bf16 %v81
    %v98 = vunpack.c.l.bf16 %v82
    %v99 = vunpack.c.l.bf16 %v83
    %v100 = vunpack.c.l.bf16 %v84
    %v101 = vunpack.c.l.bf16 %v85
    %v102 = vunpack.c.l.bf16 %v86
    %v103 = vunpack.c.l.bf16 %v87
    %v104 = vunpack.c.l.bf16 %v88
    %v105 = vunpack.c.l.bf16 %v89
    %v106 = vunpack.c.l.bf16 %v90
    %v107 = vld [vmem:[%s2] sm:$0xf]
    %v108 = vld [vmem:[%s3] sm:$0x1]
    %v109 = vld [vmem:[%s4] sm:$0xf]
    %v110 = vld [vmem:[%s5] sm:$0x1]
    %s111 = sld [smem:[#allocation3]]
    %v113 = vlaneseq
    %v114 = vshrl.u32 %v113, 7
    %v115 = vsub.s32 0, %v114
    %v116 = vrot.slane %v108, %v115
    %v134 = vunpack.c.l.b16 %v75
    %v135 = vunpack.c.l.b16 %v76
    %v136 = vunpack.c.l.b16 %v77
    %v137 = vunpack.c.l.b16 %v78
    %v138 = vunpack.c.l.b16 %v79
    %v139 = vunpack.c.l.b16 %v80
    %v140 = vunpack.c.l.b16 %v81
    %v141 = vunpack.c.l.b16 %v82
    %v142 = vunpack.c.l.b16 %v83
    %v143 = vunpack.c.l.b16 %v84
    %v144 = vunpack.c.l.b16 %v85
    %v145 = vunpack.c.l.b16 %v86
    %v146 = vunpack.c.l.b16 %v87
    %v147 = vunpack.c.l.b16 %v88
    %v148 = vunpack.c.l.b16 %v89
    %v149 = vunpack.c.l.b16 %v90
    %v150 = vpack.c.b16 %v135, %v134
    %v151 = vpack.c.b16 %v137, %v136
    %v152 = vpack.c.b16 %v139, %v138
    %v153 = vpack.c.b16 %v141, %v140
    %v154 = vpack.c.b16 %v143, %v142
    %v155 = vpack.c.b16 %v145, %v144
    %v156 = vpack.c.b16 %v147, %v146
    %v157 = vpack.c.b16 %v149, %v148
    %vm158 = vcmask 64512
    %v160 = vsel %vm158, %v150, 0
    %v163 = vsel %vm158, %v151, 0
    %v166 = vsel %vm158, %v152, 0
    %v169 = vsel %vm158, %v153, 0
    %v172 = vsel %vm158, %v154, 0
    %v175 = vsel %vm158, %v155, 0
    %v178 = vsel %vm158, %v156, 0
    %v181 = vsel %vm158, %v157, 0
    %vm183 = vcmask 1043456
    %v185 = vsel %vm183, %v107, 0
    %187 = vmatprep.subr.bf16.mxu0 0
    %188 = vmatpush1.bf16.msra.mxu0 0
    %189 = vmatprep.subr.bf16.mxu0 0
    %190 = vmatpush1.bf16.msra.mxu0 0
    %191 = vmatprep.subr.bf16.mxu0 0
    %192 = vmatpush1.bf16.msra.mxu0 0
    %193 = vmatprep.subr.bf16.mxu0 0
    %194 = vmatpush1.bf16.msra.mxu0 0
    %195 = vmatprep.subr.bf16.mxu0 0
    %196 = vmatpush1.bf16.msra.mxu0 0
    %197 = vmatprep.subr.bf16.mxu0 0
    %198 = vmatpush1.bf16.msra.mxu0 0
    %199 = vmatprep.subr.bf16.mxu0 0
    %200 = vmatpush1.bf16.msra.mxu0 0
    %201 = vmatprep.subr.bf16.mxu0 0
    %202 = vmatpush1.bf16.msra.mxu0 %v185
    %203 = vmatprep.subr.bf16.mxu0 0
    %204 = vmatpush2.bf16.msra.mxu0 0
    %205 = vmatprep.subr.bf16.mxu0 0
    %206 = vmatpush2.bf16.msra.mxu0 0
    %207 = vmatprep.subr.bf16.mxu0 0
    %208 = vmatpush2.bf16.msra.mxu0 0
    %209 = vmatprep.subr.bf16.mxu0 0
    %210 = vmatpush2.bf16.msra.mxu0 0
    %211 = vmatprep.subr.bf16.mxu0 0
    %212 = vmatpush2.bf16.msra.mxu0 0
    %213 = vmatprep.subr.bf16.mxu0 0
    %214 = vmatpush2.bf16.msra.mxu0 0
    %215 = vmatprep.subr.bf16.mxu0 0
    %216 = vmatpush2.bf16.msra.mxu0 0
    %217 = vmatprep.subr.bf16.mxu0 0
    %218 = vmatpush2.bf16.msra.mxu0 0
    %219 = vmatprep.mubr.bf16.mxu0 0
    %220 = vmatmul.mubr.bf16.gmra.mxu0 %v160
    %v221 = vpop.f32.mrf.mxu0
    %v222 = vadd.f32 %v116, %v221
    %v223 = vpop.f32.mrf.mxu0
    %v224 = vpop.f32.mrf.mxu0
    %v225 = vadd.f32 %v116, %v224
    %v226 = vpop.f32.mrf.mxu0
    %227 = vmatprep.mubr.bf16.mxu0 0
    %228 = vmatmul.mubr.bf16.gmra.mxu0 %v163
    %v229 = vpop.f32.mrf.mxu0
    %v230 = vadd.f32 %v116, %v229
    %v231 = vpop.f32.mrf.mxu0
    %v232 = vpop.f32.mrf.mxu0
    %v233 = vadd.f32 %v116, %v232
    %v234 = vpop.f32.mrf.mxu0
    %235 = vmatprep.mubr.bf16.mxu0 0
    %236 = vmatmul.mubr.bf16.gmra.mxu0 %v166
    %v237 = vpop.f32.mrf.mxu0
    %v238 = vadd.f32 %v116, %v237
    %v239 = vpop.f32.mrf.mxu0
    %v240 = vpop.f32.mrf.mxu0
    %v241 = vadd.f32 %v116, %v240
    %v242 = vpop.f32.mrf.mxu0
    %243 = vmatprep.mubr.bf16.mxu0 0
    %244 = vmatmul.mubr.bf16.gmra.mxu0 %v169
    %v245 = vpop.f32.mrf.mxu0
    %v246 = vadd.f32 %v116, %v245
    %v247 = vpop.f32.mrf.mxu0
    %v248 = vpop.f32.mrf.mxu0
    %v249 = vadd.f32 %v116, %v248
    %v250 = vpop.f32.mrf.mxu0
    %251 = vmatprep.mubr.bf16.mxu0 0
    %252 = vmatmul.mubr.bf16.gmra.mxu0 %v172
    %v253 = vpop.f32.mrf.mxu0
    %v254 = vadd.f32 %v116, %v253
    %v255 = vpop.f32.mrf.mxu0
    %v256 = vpop.f32.mrf.mxu0
    %v257 = vadd.f32 %v116, %v256
    %v258 = vpop.f32.mrf.mxu0
    %259 = vmatprep.mubr.bf16.mxu0 0
    %260 = vmatmul.mubr.bf16.gmra.mxu0 %v175
    %v261 = vpop.f32.mrf.mxu0
    %v262 = vadd.f32 %v116, %v261
    %v263 = vpop.f32.mrf.mxu0
    %v264 = vpop.f32.mrf.mxu0
    %v265 = vadd.f32 %v116, %v264
    %v266 = vpop.f32.mrf.mxu0
    %267 = vmatprep.mubr.bf16.mxu0 0
    %268 = vmatmul.mubr.bf16.gmra.mxu0 %v178
    %v269 = vpop.f32.mrf.mxu0
    %v270 = vadd.f32 %v116, %v269
    %v271 = vpop.f32.mrf.mxu0
    %v272 = vpop.f32.mrf.mxu0
    %v273 = vadd.f32 %v116, %v272
    %v274 = vpop.f32.mrf.mxu0
    %275 = vmatprep.mubr.bf16.mxu0 0
    %276 = vmatmul.mubr.bf16.gmra.mxu0 %v181
    %v277 = vpop.f32.mrf.mxu0
    %v278 = vadd.f32 %v116, %v277
    %v279 = vpop.f32.mrf.mxu0
    %v280 = vpop.f32.mrf.mxu0
    %v281 = vadd.f32 %v116, %v280
    %v282 = vpop.f32.mrf.mxu0
    %283 = vdwg.mxu0
    %v285 = vlaneseq
    %v286 = vshrl.u32 %v285, 7
    %v287 = vsub.s32 0, %v286
    %v288 = vrot.slane %v110, %v287
    %v291 = vsel %vm183, %v109, 0
    %293 = vmatprep.subr.bf16.mxu0 0
    %294 = vmatpush1.bf16.msra.mxu0 0
    %295 = vmatprep.subr.bf16.mxu0 0
    %296 = vmatpush1.bf16.msra.mxu0 0
    %297 = vmatprep.subr.bf16.mxu0 0
    %298 = vmatpush1.bf16.msra.mxu0 0
    %299 = vmatprep.subr.bf16.mxu0 0
    %300 = vmatpush1.bf16.msra.mxu0 0
    %301 = vmatprep.subr.bf16.mxu0 0
    %302 = vmatpush1.bf16.msra.mxu0 0
    %303 = vmatprep.subr.bf16.mxu0 0
    %304 = vmatpush1.bf16.msra.mxu0 0
    %305 = vmatprep.subr.bf16.mxu0 0
    %306 = vmatpush1.bf16.msra.mxu0 0
    %307 = vmatprep.subr.bf16.mxu0 0
    %308 = vmatpush1.bf16.msra.mxu0 %v291
    %309 = vmatprep.subr.bf16.mxu0 0
    %310 = vmatpush2.bf16.msra.mxu0 0
    %311 = vmatprep.subr.bf16.mxu0 0
    %312 = vmatpush2.bf16.msra.mxu0 0
    %313 = vmatprep.subr.bf16.mxu0 0
    %314 = vmatpush2.bf16.msra.mxu0 0
    %315 = vmatprep.subr.bf16.mxu0 0
    %316 = vmatpush2.bf16.msra.mxu0 0
    %317 = vmatprep.subr.bf16.mxu0 0
    %318 = vmatpush2.bf16.msra.mxu0 0
    %319 = vmatprep.subr.bf16.mxu0 0
    %320 = vmatpush2.bf16.msra.mxu0 0
    %321 = vmatprep.subr.bf16.mxu0 0
    %322 = vmatpush2.bf16.msra.mxu0 0
    %323 = vmatprep.subr.bf16.mxu0 0
    %324 = vmatpush2.bf16.msra.mxu0 0
    %325 = vmatprep.mubr.bf16.mxu0 0
    %326 = vmatmul.mubr.bf16.gmra.mxu0 %v160
    %v327 = vpop.f32.mrf.mxu0
    %v328 = vadd.f32 %v288, %v327
    %v329 = vpop.f32.mrf.mxu0
    %v330 = vpop.f32.mrf.mxu0
    %v331 = vadd.f32 %v288, %v330
    %v332 = vpop.f32.mrf.mxu0
    %333 = vmatprep.mubr.bf16.mxu0 0
    %334 = vmatmul.mubr.bf16.gmra.mxu0 %v163
    %v335 = vpop.f32.mrf.mxu0
    %v336 = vadd.f32 %v288, %v335
    %v337 = vpop.f32.mrf.mxu0
    %v338 = vpop.f32.mrf.mxu0
    %v339 = vadd.f32 %v288, %v338
    %v340 = vpop.f32.mrf.mxu0
    %341 = vmatprep.mubr.bf16.mxu0 0
    %342 = vmatmul.mubr.bf16.gmra.mxu0 %v166
    %v343 = vpop.f32.mrf.mxu0
    %v344 = vadd.f32 %v288, %v343
    %v345 = vpop.f32.mrf.mxu0
    %v346 = vpop.f32.mrf.mxu0
    %v347 = vadd.f32 %v288, %v346
    %v348 = vpop.f32.mrf.mxu0
    %349 = vmatprep.mubr.bf16.mxu0 0
    %350 = vmatmul.mubr.bf16.gmra.mxu0 %v169
    %v351 = vpop.f32.mrf.mxu0
    %v352 = vadd.f32 %v288, %v351
    %v353 = vpop.f32.mrf.mxu0
    %v354 = vpop.f32.mrf.mxu0
    %v355 = vadd.f32 %v288, %v354
    %v356 = vpop.f32.mrf.mxu0
    %357 = vmatprep.mubr.bf16.mxu0 0
    %358 = vmatmul.mubr.bf16.gmra.mxu0 %v172
    %v359 = vpop.f32.mrf.mxu0
    %v360 = vadd.f32 %v288, %v359
    %v361 = vpop.f32.mrf.mxu0
    %v362 = vpop.f32.mrf.mxu0
    %v363 = vadd.f32 %v288, %v362
    %v364 = vpop.f32.mrf.mxu0
    %365 = vmatprep.mubr.bf16.mxu0 0
    %366 = vmatmul.mubr.bf16.gmra.mxu0 %v175
    %v367 = vpop.f32.mrf.mxu0
    %v368 = vadd.f32 %v288, %v367
    %v369 = vpop.f32.mrf.mxu0
    %v370 = vpop.f32.mrf.mxu0
    %v371 = vadd.f32 %v288, %v370
    %v372 = vpop.f32.mrf.mxu0
    %373 = vmatprep.mubr.bf16.mxu0 0
    %374 = vmatmul.mubr.bf16.gmra.mxu0 %v178
    %v375 = vpop.f32.mrf.mxu0
    %v376 = vadd.f32 %v288, %v375
    %v377 = vpop.f32.mrf.mxu0
    %v378 = vpop.f32.mrf.mxu0
    %v379 = vadd.f32 %v288, %v378
    %v380 = vpop.f32.mrf.mxu0
    %381 = vmatprep.mubr.bf16.mxu0 0
    %382 = vmatmul.mubr.bf16.gmra.mxu0 %v181
    %v383 = vpop.f32.mrf.mxu0
    %v384 = vadd.f32 %v288, %v383
    %v385 = vpop.f32.mrf.mxu0
    %v386 = vpop.f32.mrf.mxu0
    %v387 = vadd.f32 %v288, %v386
    %v388 = vpop.f32.mrf.mxu0
    %389 = vdwg.mxu0
    %v390 = vpack.c.bf16 %v225, %v222
    %v391 = vpack.c.bf16 %v233, %v230
    %v392 = vpack.c.bf16 %v241, %v238
    %v393 = vpack.c.bf16 %v249, %v246
    %v394 = vpack.c.bf16 %v257, %v254
    %v395 = vpack.c.bf16 %v265, %v262
    %v396 = vpack.c.bf16 %v273, %v270
    %v397 = vpack.c.bf16 %v281, %v278
    %v398 = vpack.c.bf16 %v331, %v328
    %v399 = vpack.c.bf16 %v339, %v336
    %v400 = vpack.c.bf16 %v347, %v344
    %v401 = vpack.c.bf16 %v355, %v352
    %v402 = vpack.c.bf16 %v363, %v360
    %v403 = vpack.c.bf16 %v371, %v368
    %v404 = vpack.c.bf16 %v379, %v376
    %v405 = vpack.c.bf16 %v387, %v384
    %v407 = vsel %vm158, %v390, 0
    %v410 = vsel %vm158, %v391, 0
    %v413 = vsel %vm158, %v392, 0
    %v416 = vsel %vm158, %v393, 0
    %418 = vmatprep.subr.bf16.mxu0 0
    %419 = vmatpush1.bf16.xpose.msra.mxu0 0
    %420 = vmatprep.subr.bf16.mxu0 0
    %421 = vmatpush1.bf16.xpose.msra.mxu0 0
    %422 = vmatprep.subr.bf16.mxu0 0
    %423 = vmatpush1.bf16.xpose.msra.mxu0 0
    %424 = vmatprep.subr.bf16.mxu0 0
    %425 = vmatpush1.bf16.xpose.msra.mxu0 0
    %426 = vmatprep.subr.bf16.mxu0 0
    %427 = vmatpush1.bf16.xpose.msra.mxu0 0
    %428 = vmatprep.subr.bf16.mxu0 0
    %429 = vmatpush1.bf16.xpose.msra.mxu0 0
    %430 = vmatprep.subr.bf16.mxu0 0
    %431 = vmatpush1.bf16.xpose.msra.mxu0 %v163
    %432 = vmatprep.subr.bf16.mxu0 0
    %433 = vmatpush1.bf16.xpose.msra.mxu0 %v160
    %434 = vmatprep.subr.bf16.mxu0 0
    %435 = vmatpush2.bf16.xpose.msra.mxu0 0
    %436 = vmatprep.subr.bf16.mxu0 0
    %437 = vmatpush2.bf16.xpose.msra.mxu0 0
    %438 = vmatprep.subr.bf16.mxu0 0
    %439 = vmatpush2.bf16.xpose.msra.mxu0 0
    %440 = vmatprep.subr.bf16.mxu0 0
    %441 = vmatpush2.bf16.xpose.msra.mxu0 0
    %442 = vmatprep.subr.bf16.mxu0 0
    %443 = vmatpush2.bf16.xpose.msra.mxu0 0
    %444 = vmatprep.subr.bf16.mxu0 0
    %445 = vmatpush2.bf16.xpose.msra.mxu0 0
    %446 = vmatprep.subr.bf16.mxu0 0
    %447 = vmatpush2.bf16.xpose.msra.mxu0 0
    %448 = vmatprep.subr.bf16.mxu0 0
    %449 = vmatpush2.bf16.xpose.msra.mxu0 0
    %450 = vmatprep.mubr.bf16.mxu0 0
    %451 = vmatmul.mubr.bf16.gmra.mxu0 %v407
    %v452 = vpop.f32.mrf.mxu0
    %v453 = vadd.f32 0.0, %v452
    %v454 = vpop.f32.mrf.mxu0
    %v455 = vpop.f32.mrf.mxu0
    %v456 = vadd.f32 0.0, %v455
    %v457 = vpop.f32.mrf.mxu0
    %458 = vmatprep.mubr.bf16.mxu0 0
    %459 = vmatmul.mubr.bf16.gmra.mxu0 %v410
    %v460 = vpop.f32.mrf.mxu0
    %v461 = vadd.f32 0.0, %v460
    %v462 = vpop.f32.mrf.mxu0
    %v463 = vpop.f32.mrf.mxu0
    %v464 = vadd.f32 0.0, %v463
    %v465 = vpop.f32.mrf.mxu0
    %466 = vmatprep.mubr.bf16.mxu0 0
    %467 = vmatmul.mubr.bf16.gmra.mxu0 %v413
    %v468 = vpop.f32.mrf.mxu0
    %v469 = vadd.f32 0.0, %v468
    %v470 = vpop.f32.mrf.mxu0
    %v471 = vpop.f32.mrf.mxu0
    %v472 = vadd.f32 0.0, %v471
    %v473 = vpop.f32.mrf.mxu0
    %474 = vmatprep.mubr.bf16.mxu0 0
    %475 = vmatmul.mubr.bf16.gmra.mxu0 %v416
    %v476 = vpop.f32.mrf.mxu0
    %v477 = vadd.f32 0.0, %v476
    %v478 = vpop.f32.mrf.mxu0
    %v479 = vpop.f32.mrf.mxu0
    %v480 = vadd.f32 0.0, %v479
    %v481 = vpop.f32.mrf.mxu0
    %482 = vdwg.mxu0
    %v484 = vsel %vm158, %v394, 0
    %v487 = vsel %vm158, %v395, 0
    %v490 = vsel %vm158, %v396, 0
    %v493 = vsel %vm158, %v397, 0
    %495 = vmatprep.subr.bf16.mxu0 0
    %496 = vmatpush1.bf16.xpose.msra.mxu0 0
    %497 = vmatprep.subr.bf16.mxu0 0
    %498 = vmatpush1.bf16.xpose.msra.mxu0 0
    %499 = vmatprep.subr.bf16.mxu0 0
    %500 = vmatpush1.bf16.xpose.msra.mxu0 0
    %501 = vmatprep.subr.bf16.mxu0 0
    %502 = vmatpush1.bf16.xpose.msra.mxu0 0
    %503 = vmatprep.subr.bf16.mxu0 0
    %504 = vmatpush1.bf16.xpose.msra.mxu0 0
    %505 = vmatprep.subr.bf16.mxu0 0
    %506 = vmatpush1.bf16.xpose.msra.mxu0 0
    %507 = vmatprep.subr.bf16.mxu0 0
    %508 = vmatpush1.bf16.xpose.msra.mxu0 %v175
    %509 = vmatprep.subr.bf16.mxu0 0
    %510 = vmatpush1.bf16.xpose.msra.mxu0 %v172
    %511 = vmatprep.subr.bf16.mxu0 0
    %512 = vmatpush2.bf16.xpose.msra.mxu0 0
    %513 = vmatprep.subr.bf16.mxu0 0
    %514 = vmatpush2.bf16.xpose.msra.mxu0 0
    %515 = vmatprep.subr.bf16.mxu0 0
    %516 = vmatpush2.bf16.xpose.msra.mxu0 0
    %517 = vmatprep.subr.bf16.mxu0 0
    %518 = vmatpush2.bf16.xpose.msra.mxu0 0
    %519 = vmatprep.subr.bf16.mxu0 0
    %520 = vmatpush2.bf16.xpose.msra.mxu0 0
    %521 = vmatprep.subr.bf16.mxu0 0
    %522 = vmatpush2.bf16.xpose.msra.mxu0 0
    %523 = vmatprep.subr.bf16.mxu0 0
    %524 = vmatpush2.bf16.xpose.msra.mxu0 0
    %525 = vmatprep.subr.bf16.mxu0 0
    %526 = vmatpush2.bf16.xpose.msra.mxu0 0
    %527 = vmatprep.mubr.bf16.mxu0 0
    %528 = vmatmul.mubr.bf16.gmra.mxu0 %v484
    %v529 = vpop.f32.mrf.mxu0
    %v530 = vadd.f32 0.0, %v529
    %v531 = vpop.f32.mrf.mxu0
    %v532 = vpop.f32.mrf.mxu0
    %v533 = vadd.f32 0.0, %v532
    %v534 = vpop.f32.mrf.mxu0
    %535 = vmatprep.mubr.bf16.mxu0 0
    %536 = vmatmul.mubr.bf16.gmra.mxu0 %v487
    %v537 = vpop.f32.mrf.mxu0
    %v538 = vadd.f32 0.0, %v537
    %v539 = vpop.f32.mrf.mxu0
    %v540 = vpop.f32.mrf.mxu0
    %v541 = vadd.f32 0.0, %v540
    %v542 = vpop.f32.mrf.mxu0
    %543 = vmatprep.mubr.bf16.mxu0 0
    %544 = vmatmul.mubr.bf16.gmra.mxu0 %v490
    %v545 = vpop.f32.mrf.mxu0
    %v546 = vadd.f32 0.0, %v545
    %v547 = vpop.f32.mrf.mxu0
    %v548 = vpop.f32.mrf.mxu0
    %v549 = vadd.f32 0.0, %v548
    %v550 = vpop.f32.mrf.mxu0
    %551 = vmatprep.mubr.bf16.mxu0 0
    %552 = vmatmul.mubr.bf16.gmra.mxu0 %v493
    %v553 = vpop.f32.mrf.mxu0
    %v554 = vadd.f32 0.0, %v553
    %v555 = vpop.f32.mrf.mxu0
    %v556 = vpop.f32.mrf.mxu0
    %v557 = vadd.f32 0.0, %v556
    %v558 = vpop.f32.mrf.mxu0
    %559 = vdwg.mxu0
    %vm560 = vcmask 261120
    %v561 = vsel %vm560, %v453, -inf
    %562 = vmax.xlane.f32.xlu0 %v561
    %v563 = vpop.xlane.xlu0 %562
    %v564 = vsel %vm560, %v456, -inf
    %565 = vmax.xlane.f32.xlu0 %v564
    %v566 = vpop.xlane.xlu0 %565
    %v567 = vsel %vm560, %v461, -inf
    %568 = vmax.xlane.f32.xlu0 %v567
    %v569 = vpop.xlane.xlu0 %568
    %v570 = vsel %vm560, %v464, -inf
    %571 = vmax.xlane.f32.xlu0 %v570
    %v572 = vpop.xlane.xlu0 %571
    %v573 = vsel %vm560, %v469, -inf
    %574 = vmax.xlane.f32.xlu0 %v573
    %v575 = vpop.xlane.xlu0 %574
    %v576 = vsel %vm560, %v472, -inf
    %577 = vmax.xlane.f32.xlu0 %v576
    %v578 = vpop.xlane.xlu0 %577
    %v579 = vsel %vm560, %v477, -inf
    %580 = vmax.xlane.f32.xlu0 %v579
    %v581 = vpop.xlane.xlu0 %580
    %v582 = vsel %vm560, %v480, -inf
    %583 = vmax.xlane.f32.xlu0 %v582
    %v584 = vpop.xlane.xlu0 %583
    %v585 = vsel %vm560, %v530, -inf
    %586 = vmax.xlane.f32.xlu0 %v585
    %v587 = vpop.xlane.xlu0 %586
    %v588 = vsel %vm560, %v533, -inf
    %589 = vmax.xlane.f32.xlu0 %v588
    %v590 = vpop.xlane.xlu0 %589
    %v591 = vsel %vm560, %v538, -inf
    %592 = vmax.xlane.f32.xlu0 %v591
    %v593 = vpop.xlane.xlu0 %592
    %v594 = vsel %vm560, %v541, -inf
    %595 = vmax.xlane.f32.xlu0 %v594
    %v596 = vpop.xlane.xlu0 %595
    %v597 = vsel %vm560, %v546, -inf
    %598 = vmax.xlane.f32.xlu0 %v597
    %v599 = vpop.xlane.xlu0 %598
    %v600 = vsel %vm560, %v549, -inf
    %601 = vmax.xlane.f32.xlu0 %v600
    %v602 = vpop.xlane.xlu0 %601
    %v603 = vsel %vm560, %v554, -inf
    %604 = vmax.xlane.f32.xlu0 %v603
    %v605 = vpop.xlane.xlu0 %604
    %v606 = vsel %vm560, %v557, -inf
    %607 = vmax.xlane.f32.xlu0 %v606
    %v608 = vpop.xlane.xlu0 %607
    %v609 = vsub.f32 -inf, %v563
    %v610 = vsub.f32 -inf, %v566
    %v611 = vsub.f32 -inf, %v569
    %v612 = vsub.f32 -inf, %v572
    %v613 = vsub.f32 -inf, %v575
    %v614 = vsub.f32 -inf, %v578
    %v615 = vsub.f32 -inf, %v581
    %v616 = vsub.f32 -inf, %v584
    %v617 = vsub.f32 -inf, %v587
    %v618 = vsub.f32 -inf, %v590
    %v619 = vsub.f32 -inf, %v593
    %v620 = vsub.f32 -inf, %v596
    %v621 = vsub.f32 -inf, %v599
    %v622 = vsub.f32 -inf, %v602
    %v623 = vsub.f32 -inf, %v605
    %v624 = vsub.f32 -inf, %v608
    %v625 = vmul.f32 %v609, 1.442695
    %v626 = vpow.pop %v625
    %v627 = vmul.f32 %v610, 1.442695
    %v628 = vpow.pop %v627
    %v629 = vmul.f32 %v611, 1.442695
    %v630 = vpow.pop %v629
    %v631 = vmul.f32 %v612, 1.442695
    %v632 = vpow.pop %v631
    %v633 = vmul.f32 %v613, 1.442695
    %v634 = vpow.pop %v633
    %v635 = vmul.f32 %v614, 1.442695
    %v636 = vpow.pop %v635
    %v637 = vmul.f32 %v615, 1.442695
    %v638 = vpow.pop %v637
    %v639 = vmul.f32 %v616, 1.442695
    %v640 = vpow.pop %v639
    %v641 = vmul.f32 %v617, 1.442695
    %v642 = vpow.pop %v641
    %v643 = vmul.f32 %v618, 1.442695
    %v644 = vpow.pop %v643
    %v645 = vmul.f32 %v619, 1.442695
    %v646 = vpow.pop %v645
    %v647 = vmul.f32 %v620, 1.442695
    %v648 = vpow.pop %v647
    %v649 = vmul.f32 %v621, 1.442695
    %v650 = vpow.pop %v649
    %v651 = vmul.f32 %v622, 1.442695
    %v652 = vpow.pop %v651
    %v653 = vmul.f32 %v623, 1.442695
    %v654 = vpow.pop %v653
    %v655 = vmul.f32 %v624, 1.442695
    %v656 = vpow.pop %v655
    %v657 = vsub.f32 %v453, %v563
    %v658 = vsub.f32 %v456, %v566
    %v659 = vsub.f32 %v461, %v569
    %v660 = vsub.f32 %v464, %v572
    %v661 = vsub.f32 %v469, %v575
    %v662 = vsub.f32 %v472, %v578
    %v663 = vsub.f32 %v477, %v581
    %v664 = vsub.f32 %v480, %v584
    %v665 = vsub.f32 %v530, %v587
    %v666 = vsub.f32 %v533, %v590
    %v667 = vsub.f32 %v538, %v593
    %v668 = vsub.f32 %v541, %v596
    %v669 = vsub.f32 %v546, %v599
    %v670 = vsub.f32 %v549, %v602
    %v671 = vsub.f32 %v554, %v605
    %v672 = vsub.f32 %v557, %v608
    %v673 = vmul.f32 %v657, 1.442695
    %v674 = vpow.pop %v673
    %v675 = vmul.f32 %v658, 1.442695
    %v676 = vpow.pop %v675
    %v677 = vmul.f32 %v659, 1.442695
    %v678 = vpow.pop %v677
    %v679 = vmul.f32 %v660, 1.442695
    %v680 = vpow.pop %v679
    %v681 = vmul.f32 %v661, 1.442695
    %v682 = vpow.pop %v681
    %v683 = vmul.f32 %v662, 1.442695
    %v684 = vpow.pop %v683
    %v685 = vmul.f32 %v663, 1.442695
    %v686 = vpow.pop %v685
    %v687 = vmul.f32 %v664, 1.442695
    %v688 = vpow.pop %v687
    %v689 = vmul.f32 %v665, 1.442695
    %v690 = vpow.pop %v689
    %v691 = vmul.f32 %v666, 1.442695
    %v692 = vpow.pop %v691
    %v693 = vmul.f32 %v667, 1.442695
    %v694 = vpow.pop %v693
    %v695 = vmul.f32 %v668, 1.442695
    %v696 = vpow.pop %v695
    %v697 = vmul.f32 %v669, 1.442695
    %v698 = vpow.pop %v697
    %v699 = vmul.f32 %v670, 1.442695
    %v700 = vpow.pop %v699
    %v701 = vmul.f32 %v671, 1.442695
    %v702 = vpow.pop %v701
    %v703 = vmul.f32 %v672, 1.442695
    %v704 = vpow.pop %v703
    %v705 = vmul.f32 %v626, 0.0
    %v706 = vmul.f32 %v628, 0.0
    %v707 = vmul.f32 %v630, 0.0
    %v708 = vmul.f32 %v632, 0.0
    %v709 = vmul.f32 %v634, 0.0
    %v710 = vmul.f32 %v636, 0.0
    %v711 = vmul.f32 %v638, 0.0
    %v712 = vmul.f32 %v640, 0.0
    %v713 = vmul.f32 %v642, 0.0
    %v714 = vmul.f32 %v644, 0.0
    %v715 = vmul.f32 %v646, 0.0
    %v716 = vmul.f32 %v648, 0.0
    %v717 = vmul.f32 %v650, 0.0
    %v718 = vmul.f32 %v652, 0.0
    %v719 = vmul.f32 %v654, 0.0
    %v720 = vmul.f32 %v656, 0.0
    %v721 = vsel %vm560, %v674, 0.0
    %722 = vadd.xlane.f32.xlu0 %v721
    %v723 = vpop.xlane.xlu0 %722
    %v724 = vsel %vm560, %v676, 0.0
    %725 = vadd.xlane.f32.xlu0 %v724
    %v726 = vpop.xlane.xlu0 %725
    %v727 = vsel %vm560, %v678, 0.0
    %728 = vadd.xlane.f32.xlu0 %v727
    %v729 = vpop.xlane.xlu0 %728
    %v730 = vsel %vm560, %v680, 0.0
    %731 = vadd.xlane.f32.xlu0 %v730
    %v732 = vpop.xlane.xlu0 %731
    %v733 = vsel %vm560, %v682, 0.0
    %734 = vadd.xlane.f32.xlu0 %v733
    %v735 = vpop.xlane.xlu0 %734
    %v736 = vsel %vm560, %v684, 0.0
    %737 = vadd.xlane.f32.xlu0 %v736
    %v738 = vpop.xlane.xlu0 %737
    %v739 = vsel %vm560, %v686, 0.0
    %740 = vadd.xlane.f32.xlu0 %v739
    %v741 = vpop.xlane.xlu0 %740
    %v742 = vsel %vm560, %v688, 0.0
    %743 = vadd.xlane.f32.xlu0 %v742
    %v744 = vpop.xlane.xlu0 %743
    %v745 = vsel %vm560, %v690, 0.0
    %746 = vadd.xlane.f32.xlu0 %v745
    %v747 = vpop.xlane.xlu0 %746
    %v748 = vsel %vm560, %v692, 0.0
    %749 = vadd.xlane.f32.xlu0 %v748
    %v750 = vpop.xlane.xlu0 %749
    %v751 = vsel %vm560, %v694, 0.0
    %752 = vadd.xlane.f32.xlu0 %v751
    %v753 = vpop.xlane.xlu0 %752
    %v754 = vsel %vm560, %v696, 0.0
    %755 = vadd.xlane.f32.xlu0 %v754
    %v756 = vpop.xlane.xlu0 %755
    %v757 = vsel %vm560, %v698, 0.0
    %758 = vadd.xlane.f32.xlu0 %v757
    %v759 = vpop.xlane.xlu0 %758
    %v760 = vsel %vm560, %v700, 0.0
    %761 = vadd.xlane.f32.xlu0 %v760
    %v762 = vpop.xlane.xlu0 %761
    %v763 = vsel %vm560, %v702, 0.0
    %764 = vadd.xlane.f32.xlu0 %v763
    %v765 = vpop.xlane.xlu0 %764
    %v766 = vsel %vm560, %v704, 0.0
    %767 = vadd.xlane.f32.xlu0 %v766
    %v768 = vpop.xlane.xlu0 %767
    %v769 = vadd.f32 %v705, %v723
    %v770 = vadd.f32 %v706, %v726
    %v771 = vadd.f32 %v707, %v729
    %v772 = vadd.f32 %v708, %v732
    %v773 = vadd.f32 %v709, %v735
    %v774 = vadd.f32 %v710, %v738
    %v775 = vadd.f32 %v711, %v741
    %v776 = vadd.f32 %v712, %v744
    %v777 = vadd.f32 %v713, %v747
    %v778 = vadd.f32 %v714, %v750
    %v779 = vadd.f32 %v715, %v753
    %v780 = vadd.f32 %v716, %v756
    %v781 = vadd.f32 %v717, %v759
    %v782 = vadd.f32 %v718, %v762
    %v783 = vadd.f32 %v719, %v765
    %v784 = vadd.f32 %v720, %v768
    %v785 = vpack.c.bf16 %v676, %v674
    %v786 = vpack.c.bf16 %v680, %v678
    %v787 = vpack.c.bf16 %v684, %v682
    %v788 = vpack.c.bf16 %v688, %v686
    %v789 = vpack.c.bf16 %v692, %v690
    %v790 = vpack.c.bf16 %v696, %v694
    %v791 = vpack.c.bf16 %v700, %v698
    %v792 = vpack.c.bf16 %v704, %v702
    %v794 = vsel %vm560, %v785, 0
    %v797 = vsel %vm560, %v786, 0
    %v800 = vsel %vm560, %v787, 0
    %v803 = vsel %vm560, %v788, 0
    %805 = vmatprep.subr.bf16.mxu0 0
    %806 = vmatpush1.bf16.msra.mxu0 0
    %807 = vmatprep.subr.bf16.mxu0 0
    %808 = vmatpush1.bf16.msra.mxu0 0
    %809 = vmatprep.subr.bf16.mxu0 0
    %810 = vmatpush1.bf16.msra.mxu0 0
    %811 = vmatprep.subr.bf16.mxu0 0
    %812 = vmatpush1.bf16.msra.mxu0 0
    %813 = vmatprep.subr.bf16.mxu0 0
    %814 = vmatpush1.bf16.msra.mxu0 0
    %815 = vmatprep.subr.bf16.mxu0 0
    %816 = vmatpush1.bf16.msra.mxu0 0
    %817 = vmatprep.subr.bf16.mxu0 0
    %818 = vmatpush1.bf16.msra.mxu0 %v399
    %819 = vmatprep.subr.bf16.mxu0 0
    %820 = vmatpush1.bf16.msra.mxu0 %v398
    %821 = vmatprep.subr.bf16.mxu0 0
    %822 = vmatpush2.bf16.msra.mxu0 0
    %823 = vmatprep.subr.bf16.mxu0 0
    %824 = vmatpush2.bf16.msra.mxu0 0
    %825 = vmatprep.subr.bf16.mxu0 0
    %826 = vmatpush2.bf16.msra.mxu0 0
    %827 = vmatprep.subr.bf16.mxu0 0
    %828 = vmatpush2.bf16.msra.mxu0 0
    %829 = vmatprep.subr.bf16.mxu0 0
    %830 = vmatpush2.bf16.msra.mxu0 0
    %831 = vmatprep.subr.bf16.mxu0 0
    %832 = vmatpush2.bf16.msra.mxu0 0
    %833 = vmatprep.subr.bf16.mxu0 0
    %834 = vmatpush2.bf16.msra.mxu0 0
    %835 = vmatprep.subr.bf16.mxu0 0
    %836 = vmatpush2.bf16.msra.mxu0 0
    %837 = vmatprep.mubr.bf16.mxu0 0
    %838 = vmatmul.mubr.bf16.gmra.mxu0 %v794
    %v839 = vpop.f32.mrf.mxu0
    %v840 = vadd.f32 0.0, %v839
    %v841 = vpop.f32.mrf.mxu0
    %v842 = vpop.f32.mrf.mxu0
    %v843 = vadd.f32 0.0, %v842
    %v844 = vpop.f32.mrf.mxu0
    %845 = vmatprep.mubr.bf16.mxu0 0
    %846 = vmatmul.mubr.bf16.gmra.mxu0 %v797
    %v847 = vpop.f32.mrf.mxu0
    %v848 = vadd.f32 0.0, %v847
    %v849 = vpop.f32.mrf.mxu0
    %v850 = vpop.f32.mrf.mxu0
    %v851 = vadd.f32 0.0, %v850
    %v852 = vpop.f32.mrf.mxu0
    %853 = vmatprep.mubr.bf16.mxu0 0
    %854 = vmatmul.mubr.bf16.gmra.mxu0 %v800
    %v855 = vpop.f32.mrf.mxu0
    %v856 = vadd.f32 0.0, %v855
    %v857 = vpop.f32.mrf.mxu0
    %v858 = vpop.f32.mrf.mxu0
    %v859 = vadd.f32 0.0, %v858
    %v860 = vpop.f32.mrf.mxu0
    %861 = vmatprep.mubr.bf16.mxu0 0
    %862 = vmatmul.mubr.bf16.gmra.mxu0 %v803
    %v863 = vpop.f32.mrf.mxu0
    %v864 = vadd.f32 0.0, %v863
    %v865 = vpop.f32.mrf.mxu0
    %v866 = vpop.f32.mrf.mxu0
    %v867 = vadd.f32 0.0, %v866
    %v868 = vpop.f32.mrf.mxu0
    %869 = vdwg.mxu0
    %v871 = vsel %vm560, %v789, 0
    %v874 = vsel %vm560, %v790, 0
    %v877 = vsel %vm560, %v791, 0
    %v880 = vsel %vm560, %v792, 0
    %882 = vmatprep.subr.bf16.mxu0 0
    %883 = vmatpush1.bf16.msra.mxu0 0
    %884 = vmatprep.subr.bf16.mxu0 0
    %885 = vmatpush1.bf16.msra.mxu0 0
    %886 = vmatprep.subr.bf16.mxu0 0
    %887 = vmatpush1.bf16.msra.mxu0 0
    %888 = vmatprep.subr.bf16.mxu0 0
    %889 = vmatpush1.bf16.msra.mxu0 0
    %890 = vmatprep.subr.bf16.mxu0 0
    %891 = vmatpush1.bf16.msra.mxu0 0
    %892 = vmatprep.subr.bf16.mxu0 0
    %893 = vmatpush1.bf16.msra.mxu0 0
    %894 = vmatprep.subr.bf16.mxu0 0
    %895 = vmatpush1.bf16.msra.mxu0 %v403
    %896 = vmatprep.subr.bf16.mxu0 0
    %897 = vmatpush1.bf16.msra.mxu0 %v402
    %898 = vmatprep.subr.bf16.mxu0 0
    %899 = vmatpush2.bf16.msra.mxu0 0
    %900 = vmatprep.subr.bf16.mxu0 0
    %901 = vmatpush2.bf16.msra.mxu0 0
    %902 = vmatprep.subr.bf16.mxu0 0
    %903 = vmatpush2.bf16.msra.mxu0 0
    %904 = vmatprep.subr.bf16.mxu0 0
    %905 = vmatpush2.bf16.msra.mxu0 0
    %906 = vmatprep.subr.bf16.mxu0 0
    %907 = vmatpush2.bf16.msra.mxu0 0
    %908 = vmatprep.subr.bf16.mxu0 0
    %909 = vmatpush2.bf16.msra.mxu0 0
    %910 = vmatprep.subr.bf16.mxu0 0
    %911 = vmatpush2.bf16.msra.mxu0 0
    %912 = vmatprep.subr.bf16.mxu0 0
    %913 = vmatpush2.bf16.msra.mxu0 0
    %914 = vmatprep.mubr.bf16.mxu0 0
    %915 = vmatmul.mubr.bf16.gmra.mxu0 %v871
    %v916 = vpop.f32.mrf.mxu0
    %v917 = vadd.f32 0.0, %v916
    %v918 = vpop.f32.mrf.mxu0
    %v919 = vpop.f32.mrf.mxu0
    %v920 = vadd.f32 0.0, %v919
    %v921 = vpop.f32.mrf.mxu0
    %922 = vmatprep.mubr.bf16.mxu0 0
    %923 = vmatmul.mubr.bf16.gmra.mxu0 %v874
    %v924 = vpop.f32.mrf.mxu0
    %v925 = vadd.f32 0.0, %v924
    %v926 = vpop.f32.mrf.mxu0
    %v927 = vpop.f32.mrf.mxu0
    %v928 = vadd.f32 0.0, %v927
    %v929 = vpop.f32.mrf.mxu0
    %930 = vmatprep.mubr.bf16.mxu0 0
    %931 = vmatmul.mubr.bf16.gmra.mxu0 %v877
    %v932 = vpop.f32.mrf.mxu0
    %v933 = vadd.f32 0.0, %v932
    %v934 = vpop.f32.mrf.mxu0
    %v935 = vpop.f32.mrf.mxu0
    %v936 = vadd.f32 0.0, %v935
    %v937 = vpop.f32.mrf.mxu0
    %938 = vmatprep.mubr.bf16.mxu0 0
    %939 = vmatmul.mubr.bf16.gmra.mxu0 %v880
    %v940 = vpop.f32.mrf.mxu0
    %v941 = vadd.f32 0.0, %v940
    %v942 = vpop.f32.mrf.mxu0
    %v943 = vpop.f32.mrf.mxu0
    %v944 = vadd.f32 0.0, %v943
    %v945 = vpop.f32.mrf.mxu0
    %946 = vdwg.mxu0
    %v947 = vadd.f32 %v705, %v840
    %v948 = vadd.f32 %v706, %v843
    %v949 = vadd.f32 %v707, %v848
    %v950 = vadd.f32 %v708, %v851
    %v951 = vadd.f32 %v709, %v856
    %v952 = vadd.f32 %v710, %v859
    %v953 = vadd.f32 %v711, %v864
    %v954 = vadd.f32 %v712, %v867
    %v955 = vadd.f32 %v713, %v917
    %v956 = vadd.f32 %v714, %v920
    %v957 = vadd.f32 %v715, %v925
    %v958 = vadd.f32 %v716, %v928
    %v959 = vadd.f32 %v717, %v933
    %v960 = vadd.f32 %v718, %v936
    %v961 = vadd.f32 %v719, %v941
    %v962 = vadd.f32 %v720, %v944
    %963 = vmatprep.subr.bf16.mxu0 0
    %964 = vmatpush1.bf16.xpose.msra.mxu0 0
    %965 = vmatprep.subr.bf16.mxu0 0
    %966 = vmatpush1.bf16.xpose.msra.mxu0 0
    %967 = vmatprep.subr.bf16.mxu0 0
    %968 = vmatpush1.bf16.xpose.msra.mxu0 0
    %969 = vmatprep.subr.bf16.mxu0 0
    %970 = vmatpush1.bf16.xpose.msra.mxu0 0
    %971 = vmatprep.subr.bf16.mxu0 0
    %972 = vmatpush1.bf16.xpose.msra.mxu0 0
    %973 = vmatprep.subr.bf16.mxu0 0
    %974 = vmatpush1.bf16.xpose.msra.mxu0 0
    %975 = vmatprep.subr.bf16.mxu0 0
    %976 = vmatpush1.bf16.xpose.msra.mxu0 %v169
    %977 = vmatprep.subr.bf16.mxu0 0
    %978 = vmatpush1.bf16.xpose.msra.mxu0 %v166
    %979 = vmatprep.subr.bf16.mxu0 0
    %980 = vmatpush2.bf16.xpose.msra.mxu0 0
    %981 = vmatprep.subr.bf16.mxu0 0
    %982 = vmatpush2.bf16.xpose.msra.mxu0 0
    %983 = vmatprep.subr.bf16.mxu0 0
    %984 = vmatpush2.bf16.xpose.msra.mxu0 0
    %985 = vmatprep.subr.bf16.mxu0 0
    %986 = vmatpush2.bf16.xpose.msra.mxu0 0
    %987 = vmatprep.subr.bf16.mxu0 0
    %988 = vmatpush2.bf16.xpose.msra.mxu0 0
    %989 = vmatprep.subr.bf16.mxu0 0
    %990 = vmatpush2.bf16.xpose.msra.mxu0 0
    %991 = vmatprep.subr.bf16.mxu0 0
    %992 = vmatpush2.bf16.xpose.msra.mxu0 0
    %993 = vmatprep.subr.bf16.mxu0 0
    %994 = vmatpush2.bf16.xpose.msra.mxu0 0
    %995 = vmatprep.mubr.bf16.mxu0 0
    %996 = vmatmul.mubr.bf16.gmra.mxu0 %v407
    %v997 = vpop.f32.mrf.mxu0
    %v998 = vadd.f32 0.0, %v997
    %v999 = vpop.f32.mrf.mxu0
    %v1000 = vpop.f32.mrf.mxu0
    %v1001 = vadd.f32 0.0, %v1000
    %v1002 = vpop.f32.mrf.mxu0
    %1003 = vmatprep.mubr.bf16.mxu0 0
    %1004 = vmatmul.mubr.bf16.gmra.mxu0 %v410
    %v1005 = vpop.f32.mrf.mxu0
    %v1006 = vadd.f32 0.0, %v1005
    %v1007 = vpop.f32.mrf.mxu0
    %v1008 = vpop.f32.mrf.mxu0
    %v1009 = vadd.f32 0.0, %v1008
    %v1010 = vpop.f32.mrf.mxu0
    %1011 = vmatprep.mubr.bf16.mxu0 0
    %1012 = vmatmul.mubr.bf16.gmra.mxu0 %v413
    %v1013 = vpop.f32.mrf.mxu0
    %v1014 = vadd.f32 0.0, %v1013
    %v1015 = vpop.f32.mrf.mxu0
    %v1016 = vpop.f32.mrf.mxu0
    %v1017 = vadd.f32 0.0, %v1016
    %v1018 = vpop.f32.mrf.mxu0
    %1019 = vmatprep.mubr.bf16.mxu0 0
    %1020 = vmatmul.mubr.bf16.gmra.mxu0 %v416
    %v1021 = vpop.f32.mrf.mxu0
    %v1022 = vadd.f32 0.0, %v1021
    %v1023 = vpop.f32.mrf.mxu0
    %v1024 = vpop.f32.mrf.mxu0
    %v1025 = vadd.f32 0.0, %v1024
    %v1026 = vpop.f32.mrf.mxu0
    %1027 = vdwg.mxu0
    %1028 = vmatprep.subr.bf16.mxu0 0
    %1029 = vmatpush1.bf16.xpose.msra.mxu0 0
    %1030 = vmatprep.subr.bf16.mxu0 0
    %1031 = vmatpush1.bf16.xpose.msra.mxu0 0
    %1032 = vmatprep.subr.bf16.mxu0 0
    %1033 = vmatpush1.bf16.xpose.msra.mxu0 0
    %1034 = vmatprep.subr.bf16.mxu0 0
    %1035 = vmatpush1.bf16.xpose.msra.mxu0 0
    %1036 = vmatprep.subr.bf16.mxu0 0
    %1037 = vmatpush1.bf16.xpose.msra.mxu0 0
    %1038 = vmatprep.subr.bf16.mxu0 0
    %1039 = vmatpush1.bf16.xpose.msra.mxu0 0
    %1040 = vmatprep.subr.bf16.mxu0 0
    %1041 = vmatpush1.bf16.xpose.msra.mxu0 %v181
    %1042 = vmatprep.subr.bf16.mxu0 0
    %1043 = vmatpush1.bf16.xpose.msra.mxu0 %v178
    %1044 = vmatprep.subr.bf16.mxu0 0
    %1045 = vmatpush2.bf16.xpose.msra.mxu0 0
    %1046 = vmatprep.subr.bf16.mxu0 0
    %1047 = vmatpush2.bf16.xpose.msra.mxu0 0
    %1048 = vmatprep.subr.bf16.mxu0 0
    %1049 = vmatpush2.bf16.xpose.msra.mxu0 0
    %1050 = vmatprep.subr.bf16.mxu0 0
    %1051 = vmatpush2.bf16.xpose.msra.mxu0 0
    %1052 = vmatprep.subr.bf16.mxu0 0
    %1053 = vmatpush2.bf16.xpose.msra.mxu0 0
    %1054 = vmatprep.subr.bf16.mxu0 0
    %1055 = vmatpush2.bf16.xpose.msra.mxu0 0
    %1056 = vmatprep.subr.bf16.mxu0 0
    %1057 = vmatpush2.bf16.xpose.msra.mxu0 0
    %1058 = vmatprep.subr.bf16.mxu0 0
    %1059 = vmatpush2.bf16.xpose.msra.mxu0 0
    %1060 = vmatprep.mubr.bf16.mxu0 0
    %1061 = vmatmul.mubr.bf16.gmra.mxu0 %v484
    %v1062 = vpop.f32.mrf.mxu0
    %v1063 = vadd.f32 0.0, %v1062
    %v1064 = vpop.f32.mrf.mxu0
    %v1065 = vpop.f32.mrf.mxu0
    %v1066 = vadd.f32 0.0, %v1065
    %v1067 = vpop.f32.mrf.mxu0
    %1068 = vmatprep.mubr.bf16.mxu0 0
    %1069 = vmatmul.mubr.bf16.gmra.mxu0 %v487
    %v1070 = vpop.f32.mrf.mxu0
    %v1071 = vadd.f32 0.0, %v1070
    %v1072 = vpop.f32.mrf.mxu0
    %v1073 = vpop.f32.mrf.mxu0
    %v1074 = vadd.f32 0.0, %v1073
    %v1075 = vpop.f32.mrf.mxu0
    %1076 = vmatprep.mubr.bf16.mxu0 0
    %1077 = vmatmul.mubr.bf16.gmra.mxu0 %v490
    %v1078 = vpop.f32.mrf.mxu0
    %v1079 = vadd.f32 0.0, %v1078
    %v1080 = vpop.f32.mrf.mxu0
    %v1081 = vpop.f32.mrf.mxu0
    %v1082 = vadd.f32 0.0, %v1081
    %v1083 = vpop.f32.mrf.mxu0
    %1084 = vmatprep.mubr.bf16.mxu0 0
    %1085 = vmatmul.mubr.bf16.gmra.mxu0 %v493
    %v1086 = vpop.f32.mrf.mxu0
    %v1087 = vadd.f32 0.0, %v1086
    %v1088 = vpop.f32.mrf.mxu0
    %v1089 = vpop.f32.mrf.mxu0
    %v1090 = vadd.f32 0.0, %v1089
    %v1091 = vpop.f32.mrf.mxu0
    %1092 = vdwg.mxu0
    %v1093 = vsel %vm560, %v998, -inf
    %1094 = vmax.xlane.f32.xlu0 %v1093
    %v1095 = vpop.xlane.xlu0 %1094
    %v1096 = vsel %vm560, %v1001, -inf
    %1097 = vmax.xlane.f32.xlu0 %v1096
    %v1098 = vpop.xlane.xlu0 %1097
    %v1099 = vsel %vm560, %v1006, -inf
    %1100 = vmax.xlane.f32.xlu0 %v1099
    %v1101 = vpop.xlane.xlu0 %1100
    %v1102 = vsel %vm560, %v1009, -inf
    %1103 = vmax.xlane.f32.xlu0 %v1102
    %v1104 = vpop.xlane.xlu0 %1103
    %v1105 = vsel %vm560, %v1014, -inf
    %1106 = vmax.xlane.f32.xlu0 %v1105
    %v1107 = vpop.xlane.xlu0 %1106
    %v1108 = vsel %vm560, %v1017, -inf
    %1109 = vmax.xlane.f32.xlu0 %v1108
    %v1110 = vpop.xlane.xlu0 %1109
    %v1111 = vsel %vm560, %v1022, -inf
    %1112 = vmax.xlane.f32.xlu0 %v1111
    %v1113 = vpop.xlane.xlu0 %1112
    %v1114 = vsel %vm560, %v1025, -inf
    %1115 = vmax.xlane.f32.xlu0 %v1114
    %v1116 = vpop.xlane.xlu0 %1115
    %v1117 = vsel %vm560, %v1063, -inf
    %1118 = vmax.xlane.f32.xlu0 %v1117
    %v1119 = vpop.xlane.xlu0 %1118
    %v1120 = vsel %vm560, %v1066, -inf
    %1121 = vmax.xlane.f32.xlu0 %v1120
    %v1122 = vpop.xlane.xlu0 %1121
    %v1123 = vsel %vm560, %v1071, -inf
    %1124 = vmax.xlane.f32.xlu0 %v1123
    %v1125 = vpop.xlane.xlu0 %1124
    %v1126 = vsel %vm560, %v1074, -inf
    %1127 = vmax.xlane.f32.xlu0 %v1126
    %v1128 = vpop.xlane.xlu0 %1127
    %v1129 = vsel %vm560, %v1079, -inf
    %1130 = vmax.xlane.f32.xlu0 %v1129
    %v1131 = vpop.xlane.xlu0 %1130
    %v1132 = vsel %vm560, %v1082, -inf
    %1133 = vmax.xlane.f32.xlu0 %v1132
    %v1134 = vpop.xlane.xlu0 %1133
    %v1135 = vsel %vm560, %v1087, -inf
    %1136 = vmax.xlane.f32.xlu0 %v1135
    %v1137 = vpop.xlane.xlu0 %1136
    %v1138 = vsel %vm560, %v1090, -inf
    %1139 = vmax.xlane.f32.xlu0 %v1138
    %v1140 = vpop.xlane.xlu0 %1139
    %v1141 = vmax.f32 %v563, %v1095
    %v1142 = vmax.f32 %v566, %v1098
    %v1143 = vmax.f32 %v569, %v1101
    %v1144 = vmax.f32 %v572, %v1104
    %v1145 = vmax.f32 %v575, %v1107
    %v1146 = vmax.f32 %v578, %v1110
    %v1147 = vmax.f32 %v581, %v1113
    %v1148 = vmax.f32 %v584, %v1116
    %v1149 = vmax.f32 %v587, %v1119
    %v1150 = vmax.f32 %v590, %v1122
    %v1151 = vmax.f32 %v593, %v1125
    %v1152 = vmax.f32 %v596, %v1128
    %v1153 = vmax.f32 %v599, %v1131
    %v1154 = vmax.f32 %v602, %v1134
    %v1155 = vmax.f32 %v605, %v1137
    %v1156 = vmax.f32 %v608, %v1140
    %v1157 = vsub.f32 %v563, %v1141
    %v1158 = vsub.f32 %v566, %v1142
    %v1159 = vsub.f32 %v569, %v1143
    %v1160 = vsub.f32 %v572, %v1144
    %v1161 = vsub.f32 %v575, %v1145
    %v1162 = vsub.f32 %v578, %v1146
    %v1163 = vsub.f32 %v581, %v1147
    %v1164 = vsub.f32 %v584, %v1148
    %v1165 = vsub.f32 %v587, %v1149
    %v1166 = vsub.f32 %v590, %v1150
    %v1167 = vsub.f32 %v593, %v1151
    %v1168 = vsub.f32 %v596, %v1152
    %v1169 = vsub.f32 %v599, %v1153
    %v1170 = vsub.f32 %v602, %v1154
    %v1171 = vsub.f32 %v605, %v1155
    %v1172 = vsub.f32 %v608, %v1156
    %v1173 = vmul.f32 %v1157, 1.442695
    %v1174 = vpow.pop %v1173
    %v1175 = vmul.f32 %v1158, 1.442695
    %v1176 = vpow.pop %v1175
    %v1177 = vmul.f32 %v1159, 1.442695
    %v1178 = vpow.pop %v1177
    %v1179 = vmul.f32 %v1160, 1.442695
    %v1180 = vpow.pop %v1179
    %v1181 = vmul.f32 %v1161, 1.442695
    %v1182 = vpow.pop %v1181
    %v1183 = vmul.f32 %v1162, 1.442695
    %v1184 = vpow.pop %v1183
    %v1185 = vmul.f32 %v1163, 1.442695
    %v1186 = vpow.pop %v1185
    %v1187 = vmul.f32 %v1164, 1.442695
    %v1188 = vpow.pop %v1187
    %v1189 = vmul.f32 %v1165, 1.442695
    %v1190 = vpow.pop %v1189
    %v1191 = vmul.f32 %v1166, 1.442695
    %v1192 = vpow.pop %v1191
    %v1193 = vmul.f32 %v1167, 1.442695
    %v1194 = vpow.pop %v1193
    %v1195 = vmul.f32 %v1168, 1.442695
    %v1196 = vpow.pop %v1195
    %v1197 = vmul.f32 %v1169, 1.442695
    %v1198 = vpow.pop %v1197
    %v1199 = vmul.f32 %v1170, 1.442695
    %v1200 = vpow.pop %v1199
    %v1201 = vmul.f32 %v1171, 1.442695
    %v1202 = vpow.pop %v1201
    %v1203 = vmul.f32 %v1172, 1.442695
    %v1204 = vpow.pop %v1203
    %v1205 = vsub.f32 %v998, %v1141
    %v1206 = vsub.f32 %v1001, %v1142
    %v1207 = vsub.f32 %v1006, %v1143
    %v1208 = vsub.f32 %v1009, %v1144
    %v1209 = vsub.f32 %v1014, %v1145
    %v1210 = vsub.f32 %v1017, %v1146
    %v1211 = vsub.f32 %v1022, %v1147
    %v1212 = vsub.f32 %v1025, %v1148
    %v1213 = vsub.f32 %v1063, %v1149
    %v1214 = vsub.f32 %v1066, %v1150
    %v1215 = vsub.f32 %v1071, %v1151
    %v1216 = vsub.f32 %v1074, %v1152
    %v1217 = vsub.f32 %v1079, %v1153
    %v1218 = vsub.f32 %v1082, %v1154
    %v1219 = vsub.f32 %v1087, %v1155
    %v1220 = vsub.f32 %v1090, %v1156
    %v1221 = vmul.f32 %v1205, 1.442695
    %v1222 = vpow.pop %v1221
    %v1223 = vmul.f32 %v1206, 1.442695
    %v1224 = vpow.pop %v1223
    %v1225 = vmul.f32 %v1207, 1.442695
    %v1226 = vpow.pop %v1225
    %v1227 = vmul.f32 %v1208, 1.442695
    %v1228 = vpow.pop %v1227
    %v1229 = vmul.f32 %v1209, 1.442695
    %v1230 = vpow.pop %v1229
    %v1231 = vmul.f32 %v1210, 1.442695
    %v1232 = vpow.pop %v1231
    %v1233 = vmul.f32 %v1211, 1.442695
    %v1234 = vpow.pop %v1233
    %v1235 = vmul.f32 %v1212, 1.442695
    %v1236 = vpow.pop %v1235
    %v1237 = vmul.f32 %v1213, 1.442695
    %v1238 = vpow.pop %v1237
    %v1239 = vmul.f32 %v1214, 1.442695
    %v1240 = vpow.pop %v1239
    %v1241 = vmul.f32 %v1215, 1.442695
    %v1242 = vpow.pop %v1241
    %v1243 = vmul.f32 %v1216, 1.442695
    %v1244 = vpow.pop %v1243
    %v1245 = vmul.f32 %v1217, 1.442695
    %v1246 = vpow.pop %v1245
    %v1247 = vmul.f32 %v1218, 1.442695
    %v1248 = vpow.pop %v1247
    %v1249 = vmul.f32 %v1219, 1.442695
    %v1250 = vpow.pop %v1249
    %v1251 = vmul.f32 %v1220, 1.442695
    %v1252 = vpow.pop %v1251
    %v1253 = vmul.f32 %v1174, %v769
    %v1254 = vmul.f32 %v1176, %v770
    %v1255 = vmul.f32 %v1178, %v771
    %v1256 = vmul.f32 %v1180, %v772
    %v1257 = vmul.f32 %v1182, %v773
    %v1258 = vmul.f32 %v1184, %v774
    %v1259 = vmul.f32 %v1186, %v775
    %v1260 = vmul.f32 %v1188, %v776
    %v1261 = vmul.f32 %v1190, %v777
    %v1262 = vmul.f32 %v1192, %v778
    %v1263 = vmul.f32 %v1194, %v779
    %v1264 = vmul.f32 %v1196, %v780
    %v1265 = vmul.f32 %v1198, %v781
    %v1266 = vmul.f32 %v1200, %v782
    %v1267 = vmul.f32 %v1202, %v783
    %v1268 = vmul.f32 %v1204, %v784
    %v1269 = vsel %vm560, %v1222, 0.0
    %1270 = vadd.xlane.f32.xlu0 %v1269
    %v1271 = vpop.xlane.xlu0 %1270
    %v1272 = vsel %vm560, %v1224, 0.0
    %1273 = vadd.xlane.f32.xlu0 %v1272
    %v1274 = vpop.xlane.xlu0 %1273
    %v1275 = vsel %vm560, %v1226, 0.0
    %1276 = vadd.xlane.f32.xlu0 %v1275
    %v1277 = vpop.xlane.xlu0 %1276
    %v1278 = vsel %vm560, %v1228, 0.0
    %1279 = vadd.xlane.f32.xlu0 %v1278
    %v1280 = vpop.xlane.xlu0 %1279
    %v1281 = vsel %vm560, %v1230, 0.0
    %1282 = vadd.xlane.f32.xlu0 %v1281
    %v1283 = vpop.xlane.xlu0 %1282
    %v1284 = vsel %vm560, %v1232, 0.0
    %1285 = vadd.xlane.f32.xlu0 %v1284
    %v1286 = vpop.xlane.xlu0 %1285
    %v1287 = vsel %vm560, %v1234, 0.0
    %1288 = vadd.xlane.f32.xlu0 %v1287
    %v1289 = vpop.xlane.xlu0 %1288
    %v1290 = vsel %vm560, %v1236, 0.0
    %1291 = vadd.xlane.f32.xlu0 %v1290
    %v1292 = vpop.xlane.xlu0 %1291
    %v1293 = vsel %vm560, %v1238, 0.0
    %1294 = vadd.xlane.f32.xlu0 %v1293
    %v1295 = vpop.xlane.xlu0 %1294
    %v1296 = vsel %vm560, %v1240, 0.0
    %1297 = vadd.xlane.f32.xlu0 %v1296
    %v1298 = vpop.xlane.xlu0 %1297
    %v1299 = vsel %vm560, %v1242, 0.0
    %1300 = vadd.xlane.f32.xlu0 %v1299
    %v1301 = vpop.xlane.xlu0 %1300
    %v1302 = vsel %vm560, %v1244, 0.0
    %1303 = vadd.xlane.f32.xlu0 %v1302
    %v1304 = vpop.xlane.xlu0 %1303
    %v1305 = vsel %vm560, %v1246, 0.0
    %1306 = vadd.xlane.f32.xlu0 %v1305
    %v1307 = vpop.xlane.xlu0 %1306
    %v1308 = vsel %vm560, %v1248, 0.0
    %1309 = vadd.xlane.f32.xlu0 %v1308
    %v1310 = vpop.xlane.xlu0 %1309
    %v1311 = vsel %vm560, %v1250, 0.0
    %1312 = vadd.xlane.f32.xlu0 %v1311
    %v1313 = vpop.xlane.xlu0 %1312
    %v1314 = vsel %vm560, %v1252, 0.0
    %1315 = vadd.xlane.f32.xlu0 %v1314
    %v1316 = vpop.xlane.xlu0 %1315
    %v1317 = vadd.f32 %v1253, %v1271
    %v1318 = vadd.f32 %v1254, %v1274
    %v1319 = vadd.f32 %v1255, %v1277
    %v1320 = vadd.f32 %v1256, %v1280
    %v1321 = vadd.f32 %v1257, %v1283
    %v1322 = vadd.f32 %v1258, %v1286
    %v1323 = vadd.f32 %v1259, %v1289
    %v1324 = vadd.f32 %v1260, %v1292
    %v1325 = vadd.f32 %v1261, %v1295
    %v1326 = vadd.f32 %v1262, %v1298
    %v1327 = vadd.f32 %v1263, %v1301
    %v1328 = vadd.f32 %v1264, %v1304
    %v1329 = vadd.f32 %v1265, %v1307
    %v1330 = vadd.f32 %v1266, %v1310
    %v1331 = vadd.f32 %v1267, %v1313
    %v1332 = vadd.f32 %v1268, %v1316
    %v1333 = vmul.f32 %v1174, %v947
    %v1334 = vmul.f32 %v1176, %v948
    %v1335 = vmul.f32 %v1178, %v949
    %v1336 = vmul.f32 %v1180, %v950
    %v1337 = vmul.f32 %v1182, %v951
    %v1338 = vmul.f32 %v1184, %v952
    %v1339 = vmul.f32 %v1186, %v953
    %v1340 = vmul.f32 %v1188, %v954
    %v1341 = vmul.f32 %v1190, %v955
    %v1342 = vmul.f32 %v1192, %v956
    %v1343 = vmul.f32 %v1194, %v957
    %v1344 = vmul.f32 %v1196, %v958
    %v1345 = vmul.f32 %v1198, %v959
    %v1346 = vmul.f32 %v1200, %v960
    %v1347 = vmul.f32 %v1202, %v961
    %v1348 = vmul.f32 %v1204, %v962
    %v1349 = vpack.c.bf16 %v1224, %v1222
    %v1350 = vpack.c.bf16 %v1228, %v1226
    %v1351 = vpack.c.bf16 %v1232, %v1230
    %v1352 = vpack.c.bf16 %v1236, %v1234
    %v1353 = vpack.c.bf16 %v1240, %v1238
    %v1354 = vpack.c.bf16 %v1244, %v1242
    %v1355 = vpack.c.bf16 %v1248, %v1246
    %v1356 = vpack.c.bf16 %v1252, %v1250
    %v1358 = vsel %vm560, %v1349, 0
    %v1361 = vsel %vm560, %v1350, 0
    %v1364 = vsel %vm560, %v1351, 0
    %v1367 = vsel %vm560, %v1352, 0
    %1369 = vmatprep.subr.bf16.mxu0 0
    %1370 = vmatpush1.bf16.msra.mxu0 0
    %1371 = vmatprep.subr.bf16.mxu0 0
    %1372 = vmatpush1.bf16.msra.mxu0 0
    %1373 = vmatprep.subr.bf16.mxu0 0
    %1374 = vmatpush1.bf16.msra.mxu0 0
    %1375 = vmatprep.subr.bf16.mxu0 0
    %1376 = vmatpush1.bf16.msra.mxu0 0
    %1377 = vmatprep.subr.bf16.mxu0 0
    %1378 = vmatpush1.bf16.msra.mxu0 0
    %1379 = vmatprep.subr.bf16.mxu0 0
    %1380 = vmatpush1.bf16.msra.mxu0 0
    %1381 = vmatprep.subr.bf16.mxu0 0
    %1382 = vmatpush1.bf16.msra.mxu0 %v401
    %1383 = vmatprep.subr.bf16.mxu0 0
    %1384 = vmatpush1.bf16.msra.mxu0 %v400
    %1385 = vmatprep.subr.bf16.mxu0 0
    %1386 = vmatpush2.bf16.msra.mxu0 0
    %1387 = vmatprep.subr.bf16.mxu0 0
    %1388 = vmatpush2.bf16.msra.mxu0 0
    %1389 = vmatprep.subr.bf16.mxu0 0
    %1390 = vmatpush2.bf16.msra.mxu0 0
    %1391 = vmatprep.subr.bf16.mxu0 0
    %1392 = vmatpush2.bf16.msra.mxu0 0
    %1393 = vmatprep.subr.bf16.mxu0 0
    %1394 = vmatpush2.bf16.msra.mxu0 0
    %1395 = vmatprep.subr.bf16.mxu0 0
    %1396 = vmatpush2.bf16.msra.mxu0 0
    %1397 = vmatprep.subr.bf16.mxu0 0
    %1398 = vmatpush2.bf16.msra.mxu0 0
    %1399 = vmatprep.subr.bf16.mxu0 0
    %1400 = vmatpush2.bf16.msra.mxu0 0
    %1401 = vmatprep.mubr.bf16.mxu0 0
    %1402 = vmatmul.mubr.bf16.gmra.mxu0 %v1358
    %v1403 = vpop.f32.mrf.mxu0
    %v1404 = vadd.f32 0.0, %v1403
    %v1405 = vpop.f32.mrf.mxu0
    %v1406 = vpop.f32.mrf.mxu0
    %v1407 = vadd.f32 0.0, %v1406
    %v1408 = vpop.f32.mrf.mxu0
    %1409 = vmatprep.mubr.bf16.mxu0 0
    %1410 = vmatmul.mubr.bf16.gmra.mxu0 %v1361
    %v1411 = vpop.f32.mrf.mxu0
    %v1412 = vadd.f32 0.0, %v1411
    %v1413 = vpop.f32.mrf.mxu0
    %v1414 = vpop.f32.mrf.mxu0
    %v1415 = vadd.f32 0.0, %v1414
    %v1416 = vpop.f32.mrf.mxu0
    %1417 = vmatprep.mubr.bf16.mxu0 0
    %1418 = vmatmul.mubr.bf16.gmra.mxu0 %v1364
    %v1419 = vpop.f32.mrf.mxu0
    %v1420 = vadd.f32 0.0, %v1419
    %v1421 = vpop.f32.mrf.mxu0
    %v1422 = vpop.f32.mrf.mxu0
    %v1423 = vadd.f32 0.0, %v1422
    %v1424 = vpop.f32.mrf.mxu0
    %1425 = vmatprep.mubr.bf16.mxu0 0
    %1426 = vmatmul.mubr.bf16.gmra.mxu0 %v1367
    %v1427 = vpop.f32.mrf.mxu0
    %v1428 = vadd.f32 0.0, %v1427
    %v1429 = vpop.f32.mrf.mxu0
    %v1430 = vpop.f32.mrf.mxu0
    %v1431 = vadd.f32 0.0, %v1430
    %v1432 = vpop.f32.mrf.mxu0
    %1433 = vdwg.mxu0
    %v1435 = vsel %vm560, %v1353, 0
    %v1438 = vsel %vm560, %v1354, 0
    %v1441 = vsel %vm560, %v1355, 0
    %v1444 = vsel %vm560, %v1356, 0
    %1446 = vmatprep.subr.bf16.mxu0 0
    %1447 = vmatpush1.bf16.msra.mxu0 0
    %1448 = vmatprep.subr.bf16.mxu0 0
    %1449 = vmatpush1.bf16.msra.mxu0 0
    %1450 = vmatprep.subr.bf16.mxu0 0
    %1451 = vmatpush1.bf16.msra.mxu0 0
    %1452 = vmatprep.subr.bf16.mxu0 0
    %1453 = vmatpush1.bf16.msra.mxu0 0
    %1454 = vmatprep.subr.bf16.mxu0 0
    %1455 = vmatpush1.bf16.msra.mxu0 0
    %1456 = vmatprep.subr.bf16.mxu0 0
    %1457 = vmatpush1.bf16.msra.mxu0 0
    %1458 = vmatprep.subr.bf16.mxu0 0
    %1459 = vmatpush1.bf16.msra.mxu0 %v405
    %1460 = vmatprep.subr.bf16.mxu0 0
    %1461 = vmatpush1.bf16.msra.mxu0 %v404
    %1462 = vmatprep.subr.bf16.mxu0 0
    %1463 = vmatpush2.bf16.msra.mxu0 0
    %1464 = vmatprep.subr.bf16.mxu0 0
    %1465 = vmatpush2.bf16.msra.mxu0 0
    %1466 = vmatprep.subr.bf16.mxu0 0
    %1467 = vmatpush2.bf16.msra.mxu0 0
    %1468 = vmatprep.subr.bf16.mxu0 0
    %1469 = vmatpush2.bf16.msra.mxu0 0
    %1470 = vmatprep.subr.bf16.mxu0 0
    %1471 = vmatpush2.bf16.msra.mxu0 0
    %1472 = vmatprep.subr.bf16.mxu0 0
    %1473 = vmatpush2.bf16.msra.mxu0 0
    %1474 = vmatprep.subr.bf16.mxu0 0
    %1475 = vmatpush2.bf16.msra.mxu0 0
    %1476 = vmatprep.subr.bf16.mxu0 0
    %1477 = vmatpush2.bf16.msra.mxu0 0
    %1478 = vmatprep.mubr.bf16.mxu0 0
    %1479 = vmatmul.mubr.bf16.gmra.mxu0 %v1435
    %v1480 = vpop.f32.mrf.mxu0
    %v1481 = vadd.f32 0.0, %v1480
    %v1482 = vpop.f32.mrf.mxu0
    %v1483 = vpop.f32.mrf.mxu0
    %v1484 = vadd.f32 0.0, %v1483
    %v1485 = vpop.f32.mrf.mxu0
    %1486 = vmatprep.mubr.bf16.mxu0 0
    %1487 = vmatmul.mubr.bf16.gmra.mxu0 %v1438
    %v1488 = vpop.f32.mrf.mxu0
    %v1489 = vadd.f32 0.0, %v1488
    %v1490 = vpop.f32.mrf.mxu0
    %v1491 = vpop.f32.mrf.mxu0
    %v1492 = vadd.f32 0.0, %v1491
    %v1493 = vpop.f32.mrf.mxu0
    %1494 = vmatprep.mubr.bf16.mxu0 0
    %1495 = vmatmul.mubr.bf16.gmra.mxu0 %v1441
    %v1496 = vpop.f32.mrf.mxu0
    %v1497 = vadd.f32 0.0, %v1496
    %v1498 = vpop.f32.mrf.mxu0
    %v1499 = vpop.f32.mrf.mxu0
    %v1500 = vadd.f32 0.0, %v1499
    %v1501 = vpop.f32.mrf.mxu0
    %1502 = vmatprep.mubr.bf16.mxu0 0
    %1503 = vmatmul.mubr.bf16.gmra.mxu0 %v1444
    %v1504 = vpop.f32.mrf.mxu0
    %v1505 = vadd.f32 0.0, %v1504
    %v1506 = vpop.f32.mrf.mxu0
    %v1507 = vpop.f32.mrf.mxu0
    %v1508 = vadd.f32 0.0, %v1507
    %v1509 = vpop.f32.mrf.mxu0
    %1510 = vdwg.mxu0
    %v1511 = vadd.f32 %v1333, %v1404
    %v1512 = vadd.f32 %v1334, %v1407
    %v1513 = vadd.f32 %v1335, %v1412
    %v1514 = vadd.f32 %v1336, %v1415
    %v1515 = vadd.f32 %v1337, %v1420
    %v1516 = vadd.f32 %v1338, %v1423
    %v1517 = vadd.f32 %v1339, %v1428
    %v1518 = vadd.f32 %v1340, %v1431
    %v1519 = vadd.f32 %v1341, %v1481
    %v1520 = vadd.f32 %v1342, %v1484
    %v1521 = vadd.f32 %v1343, %v1489
    %v1522 = vadd.f32 %v1344, %v1492
    %v1523 = vadd.f32 %v1345, %v1497
    %v1524 = vadd.f32 %v1346, %v1500
    %v1525 = vadd.f32 %v1347, %v1505
    %v1526 = vadd.f32 %v1348, %v1508
    %v1527 = vrcp.pop %v1317
    %v1528 = vrcp.pop %v1318
    %v1529 = vrcp.pop %v1319
    %v1530 = vrcp.pop %v1320
    %v1531 = vrcp.pop %v1321
    %v1532 = vrcp.pop %v1322
    %v1533 = vrcp.pop %v1323
    %v1534 = vrcp.pop %v1324
    %v1535 = vrcp.pop %v1325
    %v1536 = vrcp.pop %v1326
    %v1537 = vrcp.pop %v1327
    %v1538 = vrcp.pop %v1328
    %v1539 = vrcp.pop %v1329
    %v1540 = vrcp.pop %v1330
    %v1541 = vrcp.pop %v1331
    %v1542 = vrcp.pop %v1332
    %v1543 = vmul.f32 %v1511, %v1527
    %v1544 = vmul.f32 %v1512, %v1528
    %v1545 = vmul.f32 %v1513, %v1529
    %v1546 = vmul.f32 %v1514, %v1530
    %v1547 = vmul.f32 %v1515, %v1531
    %v1548 = vmul.f32 %v1516, %v1532
    %v1549 = vmul.f32 %v1517, %v1533
    %v1550 = vmul.f32 %v1518, %v1534
    %v1551 = vmul.f32 %v1519, %v1535
    %v1552 = vmul.f32 %v1520, %v1536
    %v1553 = vmul.f32 %v1521, %v1537
    %v1554 = vmul.f32 %v1522, %v1538
    %v1555 = vmul.f32 %v1523, %v1539
    %v1556 = vmul.f32 %v1524, %v1540
    %v1557 = vmul.f32 %v1525, %v1541
    %v1558 = vmul.f32 %v1526, %v1542
    %v1559 = vstv %s111
    %v1560 = vmul.f32 %v1559, %v1543
    %v1561 = vmul.f32 %v1559, %v1544
    %v1562 = vmul.f32 %v1559, %v1545
    %v1563 = vmul.f32 %v1559, %v1546
    %v1564 = vmul.f32 %v1559, %v1547
    %v1565 = vmul.f32 %v1559, %v1548
    %v1566 = vmul.f32 %v1559, %v1549
    %v1567 = vmul.f32 %v1559, %v1550
    %v1568 = vmul.f32 %v1559, %v1551
    %v1569 = vmul.f32 %v1559, %v1552
    %v1570 = vmul.f32 %v1559, %v1553
    %v1571 = vmul.f32 %v1559, %v1554
    %v1572 = vmul.f32 %v1559, %v1555
    %v1573 = vmul.f32 %v1559, %v1556
    %v1574 = vmul.f32 %v1559, %v1557
    %v1575 = vmul.f32 %v1559, %v1558
    %v1576 = vadd.f32 %v1560, %v91
    %v1577 = vadd.f32 %v1561, %v92
    %v1578 = vadd.f32 %v1562, %v93
    %v1579 = vadd.f32 %v1563, %v94
    %v1580 = vadd.f32 %v1564, %v95
    %v1581 = vadd.f32 %v1565, %v96
    %v1582 = vadd.f32 %v1566, %v97
    %v1583 = vadd.f32 %v1567, %v98
    %v1584 = vadd.f32 %v1568, %v99
    %v1585 = vadd.f32 %v1569, %v100
    %v1586 = vadd.f32 %v1570, %v101
    %v1587 = vadd.f32 %v1571, %v102
    %v1588 = vadd.f32 %v1572, %v103
    %v1589 = vadd.f32 %v1573, %v104
    %v1590 = vadd.f32 %v1574, %v105
    %v1591 = vadd.f32 %v1575, %v106
    %v1592 = vld [vmem:[%s6] sm:$0xf]
    %v1593 = vld [vmem:[%s7] sm:$0x1]
    %v1594 = vpack.c.bf16 %v1577, %v1576
    %v1595 = vpack.c.bf16 %v1579, %v1578
    %v1596 = vpack.c.bf16 %v1581, %v1580
    %v1597 = vpack.c.bf16 %v1583, %v1582
    %v1598 = vpack.c.bf16 %v1585, %v1584
    %v1599 = vpack.c.bf16 %v1587, %v1586
    %v1600 = vpack.c.bf16 %v1589, %v1588
    %v1601 = vpack.c.bf16 %v1591, %v1590
    %v1603 = vlaneseq
    %v1604 = vshrl.u32 %v1603, 7
    %v1605 = vsub.s32 0, %v1604
    %v1606 = vrot.slane %v1593, %v1605
    %v1609 = vsel %vm158, %v1594, 0
    %v1612 = vsel %vm158, %v1595, 0
    %v1615 = vsel %vm158, %v1596, 0
    %v1618 = vsel %vm158, %v1597, 0
    %v1621 = vsel %vm158, %v1598, 0
    %v1624 = vsel %vm158, %v1599, 0
    %v1627 = vsel %vm158, %v1600, 0
    %v1630 = vsel %vm158, %v1601, 0
    %v1633 = vsel %vm183, %v1592, 0
    %1635 = vmatprep.subr.bf16.mxu0 0
    %1636 = vmatpush1.bf16.msra.mxu0 0
    %1637 = vmatprep.subr.bf16.mxu0 0
    %1638 = vmatpush1.bf16.msra.mxu0 0
    %1639 = vmatprep.subr.bf16.mxu0 0
    %1640 = vmatpush1.bf16.msra.mxu0 0
    %1641 = vmatprep.subr.bf16.mxu0 0
    %1642 = vmatpush1.bf16.msra.mxu0 0
    %1643 = vmatprep.subr.bf16.mxu0 0
    %1644 = vmatpush1.bf16.msra.mxu0 0
    %1645 = vmatprep.subr.bf16.mxu0 0
    %1646 = vmatpush1.bf16.msra.mxu0 0
    %1647 = vmatprep.subr.bf16.mxu0 0
    %1648 = vmatpush1.bf16.msra.mxu0 0
    %1649 = vmatprep.subr.bf16.mxu0 0
    %1650 = vmatpush1.bf16.msra.mxu0 %v1633
    %1651 = vmatprep.subr.bf16.mxu0 0
    %1652 = vmatpush2.bf16.msra.mxu0 0
    %1653 = vmatprep.subr.bf16.mxu0 0
    %1654 = vmatpush2.bf16.msra.mxu0 0
    %1655 = vmatprep.subr.bf16.mxu0 0
    %1656 = vmatpush2.bf16.msra.mxu0 0
    %1657 = vmatprep.subr.bf16.mxu0 0
    %1658 = vmatpush2.bf16.msra.mxu0 0
    %1659 = vmatprep.subr.bf16.mxu0 0
    %1660 = vmatpush2.bf16.msra.mxu0 0
    %1661 = vmatprep.subr.bf16.mxu0 0
    %1662 = vmatpush2.bf16.msra.mxu0 0
    %1663 = vmatprep.subr.bf16.mxu0 0
    %1664 = vmatpush2.bf16.msra.mxu0 0
    %1665 = vmatprep.subr.bf16.mxu0 0
    %1666 = vmatpush2.bf16.msra.mxu0 0
    %1667 = vmatprep.mubr.bf16.mxu0 0
    %1668 = vmatmul.mubr.bf16.gmra.mxu0 %v1609
    %v1669 = vpop.f32.mrf.mxu0
    %v1670 = vadd.f32 %v1606, %v1669
    %v1671 = vpop.f32.mrf.mxu0
    %v1672 = vpop.f32.mrf.mxu0
    %v1673 = vadd.f32 %v1606, %v1672
    %v1674 = vpop.f32.mrf.mxu0
    %1675 = vmatprep.mubr.bf16.mxu0 0
    %1676 = vmatmul.mubr.bf16.gmra.mxu0 %v1612
    %v1677 = vpop.f32.mrf.mxu0
    %v1678 = vadd.f32 %v1606, %v1677
    %v1679 = vpop.f32.mrf.mxu0
    %v1680 = vpop.f32.mrf.mxu0
    %v1681 = vadd.f32 %v1606, %v1680
    %v1682 = vpop.f32.mrf.mxu0
    %1683 = vmatprep.mubr.bf16.mxu0 0
    %1684 = vmatmul.mubr.bf16.gmra.mxu0 %v1615
    %v1685 = vpop.f32.mrf.mxu0
    %v1686 = vadd.f32 %v1606, %v1685
    %v1687 = vpop.f32.mrf.mxu0
    %v1688 = vpop.f32.mrf.mxu0
    %v1689 = vadd.f32 %v1606, %v1688
    %v1690 = vpop.f32.mrf.mxu0
    %1691 = vmatprep.mubr.bf16.mxu0 0
    %1692 = vmatmul.mubr.bf16.gmra.mxu0 %v1618
    %v1693 = vpop.f32.mrf.mxu0
    %v1694 = vadd.f32 %v1606, %v1693
    %v1695 = vpop.f32.mrf.mxu0
    %v1696 = vpop.f32.mrf.mxu0
    %v1697 = vadd.f32 %v1606, %v1696
    %v1698 = vpop.f32.mrf.mxu0
    %1699 = vmatprep.mubr.bf16.mxu0 0
    %1700 = vmatmul.mubr.bf16.gmra.mxu0 %v1621
    %v1701 = vpop.f32.mrf.mxu0
    %v1702 = vadd.f32 %v1606, %v1701
    %v1703 = vpop.f32.mrf.mxu0
    %v1704 = vpop.f32.mrf.mxu0
    %v1705 = vadd.f32 %v1606, %v1704
    %v1706 = vpop.f32.mrf.mxu0
    %1707 = vmatprep.mubr.bf16.mxu0 0
    %1708 = vmatmul.mubr.bf16.gmra.mxu0 %v1624
    %v1709 = vpop.f32.mrf.mxu0
    %v1710 = vadd.f32 %v1606, %v1709
    %v1711 = vpop.f32.mrf.mxu0
    %v1712 = vpop.f32.mrf.mxu0
    %v1713 = vadd.f32 %v1606, %v1712
    %v1714 = vpop.f32.mrf.mxu0
    %1715 = vmatprep.mubr.bf16.mxu0 0
    %1716 = vmatmul.mubr.bf16.gmra.mxu0 %v1627
    %v1717 = vpop.f32.mrf.mxu0
    %v1718 = vadd.f32 %v1606, %v1717
    %v1719 = vpop.f32.mrf.mxu0
    %v1720 = vpop.f32.mrf.mxu0
    %v1721 = vadd.f32 %v1606, %v1720
    %v1722 = vpop.f32.mrf.mxu0
    %1723 = vmatprep.mubr.bf16.mxu0 0
    %1724 = vmatmul.mubr.bf16.gmra.mxu0 %v1630
    %v1725 = vpop.f32.mrf.mxu0
    %v1726 = vadd.f32 %v1606, %v1725
    %v1727 = vpop.f32.mrf.mxu0
    %v1728 = vpop.f32.mrf.mxu0
    %v1729 = vadd.f32 %v1606, %v1728
    %v1730 = vpop.f32.mrf.mxu0
    %1731 = vdwg.mxu0
    %v1732 = vmul.f32 %v1670, 0.01
    %v1733 = vmul.f32 %v1673, 0.01
    %v1734 = vmul.f32 %v1678, 0.01
    %v1735 = vmul.f32 %v1681, 0.01
    %v1736 = vmul.f32 %v1686, 0.01
    %v1737 = vmul.f32 %v1689, 0.01
    %v1738 = vmul.f32 %v1694, 0.01
    %v1739 = vmul.f32 %v1697, 0.01
    %v1740 = vmul.f32 %v1702, 0.01
    %v1741 = vmul.f32 %v1705, 0.01
    %v1742 = vmul.f32 %v1710, 0.01
    %v1743 = vmul.f32 %v1713, 0.01
    %v1744 = vmul.f32 %v1718, 0.01
    %v1745 = vmul.f32 %v1721, 0.01
    %v1746 = vmul.f32 %v1726, 0.01
    %v1747 = vmul.f32 %v1729, 0.01
    %v1748 = vmax.f32 %v1670, %v1732
    %v1749 = vmax.f32 %v1673, %v1733
    %v1750 = vmax.f32 %v1678, %v1734
    %v1751 = vmax.f32 %v1681, %v1735
    %v1752 = vmax.f32 %v1686, %v1736
    %v1753 = vmax.f32 %v1689, %v1737
    %v1754 = vmax.f32 %v1694, %v1738
    %v1755 = vmax.f32 %v1697, %v1739
    %v1756 = vmax.f32 %v1702, %v1740
    %v1757 = vmax.f32 %v1705, %v1741
    %v1758 = vmax.f32 %v1710, %v1742
    %v1759 = vmax.f32 %v1713, %v1743
    %v1760 = vmax.f32 %v1718, %v1744
    %v1761 = vmax.f32 %v1721, %v1745
    %v1762 = vmax.f32 %v1726, %v1746
    %v1763 = vmax.f32 %v1729, %v1747
    %v1764 = vld [vmem:[%s8] sm:$0xf]
    %v1765 = vld [vmem:[%s8 + $0x4] sm:$0xf]
    %v1766 = vld [vmem:[%s9] sm:$0x1]
    %v1767 = vpack.c.bf16 %v1749, %v1748
    %v1768 = vpack.c.bf16 %v1751, %v1750
    %v1769 = vpack.c.bf16 %v1753, %v1752
    %v1770 = vpack.c.bf16 %v1755, %v1754
    %v1771 = vpack.c.bf16 %v1757, %v1756
    %v1772 = vpack.c.bf16 %v1759, %v1758
    %v1773 = vpack.c.bf16 %v1761, %v1760
    %v1774 = vpack.c.bf16 %v1763, %v1762
    %v1776 = vlaneseq
    %v1777 = vshrl.u32 %v1776, 7
    %v1778 = vsub.s32 0, %v1777
    %v1779 = vrot.slane %v1766, %v1778
    %v1783 = vunpack.c.l.b16 %v1764
    %v1784 = vunpack.c.l.b16 %v1765
    %v1785 = vpack.c.b16 %v1784, %v1783
    %vm1787 = vcmask 130048
    %v1789 = vsel %vm1787, %v1767, 0
    %v1792 = vsel %vm1787, %v1768, 0
    %v1795 = vsel %vm1787, %v1769, 0
    %v1798 = vsel %vm1787, %v1770, 0
    %v1801 = vsel %vm1787, %v1771, 0
    %v1804 = vsel %vm1787, %v1772, 0
    %v1807 = vsel %vm1787, %v1773, 0
    %v1810 = vsel %vm1787, %v1774, 0
    %1812 = vmatprep.subr.bf16.mxu0 0
    %1813 = vmatpush1.bf16.msra.mxu0 0
    %1814 = vmatprep.subr.bf16.mxu0 0
    %1815 = vmatpush1.bf16.msra.mxu0 0
    %1816 = vmatprep.subr.bf16.mxu0 0
    %1817 = vmatpush1.bf16.msra.mxu0 0
    %1818 = vmatprep.subr.bf16.mxu0 0
    %1819 = vmatpush1.bf16.msra.mxu0 0
    %1820 = vmatprep.subr.bf16.mxu0 0
    %1821 = vmatpush1.bf16.msra.mxu0 0
    %1822 = vmatprep.subr.bf16.mxu0 0
    %1823 = vmatpush1.bf16.msra.mxu0 0
    %1824 = vmatprep.subr.bf16.mxu0 0
    %1825 = vmatpush1.bf16.msra.mxu0 0
    %1826 = vmatprep.subr.bf16.mxu0 0
    %1827 = vmatpush1.bf16.msra.mxu0 %v1785
    %1828 = vmatprep.subr.bf16.mxu0 0
    %1829 = vmatpush2.bf16.msra.mxu0 0
    %1830 = vmatprep.subr.bf16.mxu0 0
    %1831 = vmatpush2.bf16.msra.mxu0 0
    %1832 = vmatprep.subr.bf16.mxu0 0
    %1833 = vmatpush2.bf16.msra.mxu0 0
    %1834 = vmatprep.subr.bf16.mxu0 0
    %1835 = vmatpush2.bf16.msra.mxu0 0
    %1836 = vmatprep.subr.bf16.mxu0 0
    %1837 = vmatpush2.bf16.msra.mxu0 0
    %1838 = vmatprep.subr.bf16.mxu0 0
    %1839 = vmatpush2.bf16.msra.mxu0 0
    %1840 = vmatprep.subr.bf16.mxu0 0
    %1841 = vmatpush2.bf16.msra.mxu0 0
    %1842 = vmatprep.subr.bf16.mxu0 0
    %1843 = vmatpush2.bf16.msra.mxu0 0
    %1844 = vmatprep.mubr.bf16.mxu0 0
    %1845 = vmatmul.mubr.bf16.gmra.mxu0 %v1789
    %v1846 = vpop.f32.mrf.mxu0
    %v1847 = vadd.f32 %v1779, %v1846
    %v1848 = vpop.f32.mrf.mxu0
    %v1849 = vpop.f32.mrf.mxu0
    %v1850 = vadd.f32 %v1779, %v1849
    %v1851 = vpop.f32.mrf.mxu0
    %1852 = vmatprep.mubr.bf16.mxu0 0
    %1853 = vmatmul.mubr.bf16.gmra.mxu0 %v1792
    %v1854 = vpop.f32.mrf.mxu0
    %v1855 = vadd.f32 %v1779, %v1854
    %v1856 = vpop.f32.mrf.mxu0
    %v1857 = vpop.f32.mrf.mxu0
    %v1858 = vadd.f32 %v1779, %v1857
    %v1859 = vpop.f32.mrf.mxu0
    %1860 = vmatprep.mubr.bf16.mxu0 0
    %1861 = vmatmul.mubr.bf16.gmra.mxu0 %v1795
    %v1862 = vpop.f32.mrf.mxu0
    %v1863 = vadd.f32 %v1779, %v1862
    %v1864 = vpop.f32.mrf.mxu0
    %v1865 = vpop.f32.mrf.mxu0
    %v1866 = vadd.f32 %v1779, %v1865
    %v1867 = vpop.f32.mrf.mxu0
    %1868 = vmatprep.mubr.bf16.mxu0 0
    %1869 = vmatmul.mubr.bf16.gmra.mxu0 %v1798
    %v1870 = vpop.f32.mrf.mxu0
    %v1871 = vadd.f32 %v1779, %v1870
    %v1872 = vpop.f32.mrf.mxu0
    %v1873 = vpop.f32.mrf.mxu0
    %v1874 = vadd.f32 %v1779, %v1873
    %v1875 = vpop.f32.mrf.mxu0
    %1876 = vmatprep.mubr.bf16.mxu0 0
    %1877 = vmatmul.mubr.bf16.gmra.mxu0 %v1801
    %v1878 = vpop.f32.mrf.mxu0
    %v1879 = vadd.f32 %v1779, %v1878
    %v1880 = vpop.f32.mrf.mxu0
    %v1881 = vpop.f32.mrf.mxu0
    %v1882 = vadd.f32 %v1779, %v1881
    %v1883 = vpop.f32.mrf.mxu0
    %1884 = vmatprep.mubr.bf16.mxu0 0
    %1885 = vmatmul.mubr.bf16.gmra.mxu0 %v1804
    %v1886 = vpop.f32.mrf.mxu0
    %v1887 = vadd.f32 %v1779, %v1886
    %v1888 = vpop.f32.mrf.mxu0
    %v1889 = vpop.f32.mrf.mxu0
    %v1890 = vadd.f32 %v1779, %v1889
    %v1891 = vpop.f32.mrf.mxu0
    %1892 = vmatprep.mubr.bf16.mxu0 0
    %1893 = vmatmul.mubr.bf16.gmra.mxu0 %v1807
    %v1894 = vpop.f32.mrf.mxu0
    %v1895 = vadd.f32 %v1779, %v1894
    %v1896 = vpop.f32.mrf.mxu0
    %v1897 = vpop.f32.mrf.mxu0
    %v1898 = vadd.f32 %v1779, %v1897
    %v1899 = vpop.f32.mrf.mxu0
    %1900 = vmatprep.mubr.bf16.mxu0 0
    %1901 = vmatmul.mubr.bf16.gmra.mxu0 %v1810
    %v1902 = vpop.f32.mrf.mxu0
    %v1903 = vadd.f32 %v1779, %v1902
    %v1904 = vpop.f32.mrf.mxu0
    %v1905 = vpop.f32.mrf.mxu0
    %v1906 = vadd.f32 %v1779, %v1905
    %v1907 = vpop.f32.mrf.mxu0
    %1908 = vdwg.mxu0
    %v1909 = vmul.f32 %v1847, 0.01
    %v1910 = vmul.f32 %v1850, 0.01
    %v1911 = vmul.f32 %v1855, 0.01
    %v1912 = vmul.f32 %v1858, 0.01
    %v1913 = vmul.f32 %v1863, 0.01
    %v1914 = vmul.f32 %v1866, 0.01
    %v1915 = vmul.f32 %v1871, 0.01
    %v1916 = vmul.f32 %v1874, 0.01
    %v1917 = vmul.f32 %v1879, 0.01
    %v1918 = vmul.f32 %v1882, 0.01
    %v1919 = vmul.f32 %v1887, 0.01
    %v1920 = vmul.f32 %v1890, 0.01
    %v1921 = vmul.f32 %v1895, 0.01
    %v1922 = vmul.f32 %v1898, 0.01
    %v1923 = vmul.f32 %v1903, 0.01
    %v1924 = vmul.f32 %v1906, 0.01
    %v1925 = vmax.f32 %v1847, %v1909
    %v1926 = vmax.f32 %v1850, %v1910
    %v1927 = vmax.f32 %v1855, %v1911
    %v1928 = vmax.f32 %v1858, %v1912
    %v1929 = vmax.f32 %v1863, %v1913
    %v1930 = vmax.f32 %v1866, %v1914
    %v1931 = vmax.f32 %v1871, %v1915
    %v1932 = vmax.f32 %v1874, %v1916
    %v1933 = vmax.f32 %v1879, %v1917
    %v1934 = vmax.f32 %v1882, %v1918
    %v1935 = vmax.f32 %v1887, %v1919
    %v1936 = vmax.f32 %v1890, %v1920
    %v1937 = vmax.f32 %v1895, %v1921
    %v1938 = vmax.f32 %v1898, %v1922
    %v1939 = vmax.f32 %v1903, %v1923
    %v1940 = vmax.f32 %v1906, %v1924
    %v1941 = vld [vmem:[%s10] sm:$0xf]
    %v1942 = vld [vmem:[%s10 + $0x4] sm:$0xf]
    %v1943 = vld [vmem:[%s10 + $0x8] sm:$0xf]
    %v1944 = vld [vmem:[%s10 + $0xc] sm:$0xf]
    %v1945 = vld [vmem:[%s11] sm:$0x1]
    %v1946 = vld [vmem:[%s12] sm:$0xf]
    %v1947 = vld [vmem:[%s12 + $0x4] sm:$0xf]
    %v1948 = vld [vmem:[%s12 + $0x8] sm:$0xf]
    %v1949 = vld [vmem:[%s12 + $0xc] sm:$0xf]
    %v1950 = vld [vmem:[%s13] sm:$0x1]
    %s1951 = sld [smem:[#allocation3 + $0x1]]
    %v1952 = vpack.c.bf16 %v1926, %v1925
    %v1953 = vpack.c.bf16 %v1928, %v1927
    %v1954 = vpack.c.bf16 %v1930, %v1929
    %v1955 = vpack.c.bf16 %v1932, %v1931
    %v1956 = vpack.c.bf16 %v1934, %v1933
    %v1957 = vpack.c.bf16 %v1936, %v1935
    %v1958 = vpack.c.bf16 %v1938, %v1937
    %v1959 = vpack.c.bf16 %v1940, %v1939
    %v1961 = vlaneseq
    %v1962 = vshrl.u32 %v1961, 7
    %v1963 = vsub.s32 0, %v1962
    %v1964 = vrot.slane %v1945, %v1963
    %v1970 = vunpack.c.l.b16 %v1941
    %v1971 = vunpack.c.l.b16 %v1942
    %v1972 = vunpack.c.l.b16 %v1943
    %v1973 = vunpack.c.l.b16 %v1944
    %v1974 = vpack.c.b16 %v1971, %v1970
    %v1975 = vpack.c.b16 %v1973, %v1972
    %v1979 = vsel %vm560, %v1952, 0
    %v1982 = vsel %vm560, %v1953, 0
    %v1985 = vsel %vm560, %v1954, 0
    %v1988 = vsel %vm560, %v1955, 0
    %v1991 = vsel %vm560, %v1956, 0
    %v1994 = vsel %vm560, %v1957, 0
    %v1997 = vsel %vm560, %v1958, 0
    %v2000 = vsel %vm560, %v1959, 0
    %2002 = vmatprep.subr.bf16.mxu0 0
    %2003 = vmatpush1.bf16.msra.mxu0 0
    %2004 = vmatprep.subr.bf16.mxu0 0
    %2005 = vmatpush1.bf16.msra.mxu0 0
    %2006 = vmatprep.subr.bf16.mxu0 0
    %2007 = vmatpush1.bf16.msra.mxu0 0
    %2008 = vmatprep.subr.bf16.mxu0 0
    %2009 = vmatpush1.bf16.msra.mxu0 0
    %2010 = vmatprep.subr.bf16.mxu0 0
    %2011 = vmatpush1.bf16.msra.mxu0 0
    %2012 = vmatprep.subr.bf16.mxu0 0
    %2013 = vmatpush1.bf16.msra.mxu0 0
    %2014 = vmatprep.subr.bf16.mxu0 0
    %2015 = vmatpush1.bf16.msra.mxu0 %v1975
    %2016 = vmatprep.subr.bf16.mxu0 0
    %2017 = vmatpush1.bf16.msra.mxu0 %v1974
    %2018 = vmatprep.subr.bf16.mxu0 0
    %2019 = vmatpush2.bf16.msra.mxu0 0
    %2020 = vmatprep.subr.bf16.mxu0 0
    %2021 = vmatpush2.bf16.msra.mxu0 0
    %2022 = vmatprep.subr.bf16.mxu0 0
    %2023 = vmatpush2.bf16.msra.mxu0 0
    %2024 = vmatprep.subr.bf16.mxu0 0
    %2025 = vmatpush2.bf16.msra.mxu0 0
    %2026 = vmatprep.subr.bf16.mxu0 0
    %2027 = vmatpush2.bf16.msra.mxu0 0
    %2028 = vmatprep.subr.bf16.mxu0 0
    %2029 = vmatpush2.bf16.msra.mxu0 0
    %2030 = vmatprep.subr.bf16.mxu0 0
    %2031 = vmatpush2.bf16.msra.mxu0 0
    %2032 = vmatprep.subr.bf16.mxu0 0
    %2033 = vmatpush2.bf16.msra.mxu0 0
    %2034 = vmatprep.mubr.bf16.mxu0 0
    %2035 = vmatmul.mubr.bf16.gmra.mxu0 %v1979
    %v2036 = vpop.f32.mrf.mxu0
    %v2037 = vadd.f32 %v1964, %v2036
    %v2038 = vpop.f32.mrf.mxu0
    %v2039 = vpop.f32.mrf.mxu0
    %v2040 = vadd.f32 %v1964, %v2039
    %v2041 = vpop.f32.mrf.mxu0
    %2042 = vmatprep.mubr.bf16.mxu0 0
    %2043 = vmatmul.mubr.bf16.gmra.mxu0 %v1982
    %v2044 = vpop.f32.mrf.mxu0
    %v2045 = vadd.f32 %v1964, %v2044
    %v2046 = vpop.f32.mrf.mxu0
    %v2047 = vpop.f32.mrf.mxu0
    %v2048 = vadd.f32 %v1964, %v2047
    %v2049 = vpop.f32.mrf.mxu0
    %2050 = vmatprep.mubr.bf16.mxu0 0
    %2051 = vmatmul.mubr.bf16.gmra.mxu0 %v1985
    %v2052 = vpop.f32.mrf.mxu0
    %v2053 = vadd.f32 %v1964, %v2052
    %v2054 = vpop.f32.mrf.mxu0
    %v2055 = vpop.f32.mrf.mxu0
    %v2056 = vadd.f32 %v1964, %v2055
    %v2057 = vpop.f32.mrf.mxu0
    %2058 = vmatprep.mubr.bf16.mxu0 0
    %2059 = vmatmul.mubr.bf16.gmra.mxu0 %v1988
    %v2060 = vpop.f32.mrf.mxu0
    %v2061 = vadd.f32 %v1964, %v2060
    %v2062 = vpop.f32.mrf.mxu0
    %v2063 = vpop.f32.mrf.mxu0
    %v2064 = vadd.f32 %v1964, %v2063
    %v2065 = vpop.f32.mrf.mxu0
    %2066 = vmatprep.mubr.bf16.mxu0 0
    %2067 = vmatmul.mubr.bf16.gmra.mxu0 %v1991
    %v2068 = vpop.f32.mrf.mxu0
    %v2069 = vadd.f32 %v1964, %v2068
    %v2070 = vpop.f32.mrf.mxu0
    %v2071 = vpop.f32.mrf.mxu0
    %v2072 = vadd.f32 %v1964, %v2071
    %v2073 = vpop.f32.mrf.mxu0
    %2074 = vmatprep.mubr.bf16.mxu0 0
    %2075 = vmatmul.mubr.bf16.gmra.mxu0 %v1994
    %v2076 = vpop.f32.mrf.mxu0
    %v2077 = vadd.f32 %v1964, %v2076
    %v2078 = vpop.f32.mrf.mxu0
    %v2079 = vpop.f32.mrf.mxu0
    %v2080 = vadd.f32 %v1964, %v2079
    %v2081 = vpop.f32.mrf.mxu0
    %2082 = vmatprep.mubr.bf16.mxu0 0
    %2083 = vmatmul.mubr.bf16.gmra.mxu0 %v1997
    %v2084 = vpop.f32.mrf.mxu0
    %v2085 = vadd.f32 %v1964, %v2084
    %v2086 = vpop.f32.mrf.mxu0
    %v2087 = vpop.f32.mrf.mxu0
    %v2088 = vadd.f32 %v1964, %v2087
    %v2089 = vpop.f32.mrf.mxu0
    %2090 = vmatprep.mubr.bf16.mxu0 0
    %2091 = vmatmul.mubr.bf16.gmra.mxu0 %v2000
    %v2092 = vpop.f32.mrf.mxu0
    %v2093 = vadd.f32 %v1964, %v2092
    %v2094 = vpop.f32.mrf.mxu0
    %v2095 = vpop.f32.mrf.mxu0
    %v2096 = vadd.f32 %v1964, %v2095
    %v2097 = vpop.f32.mrf.mxu0
    %2098 = vdwg.mxu0
    %v2100 = vlaneseq
    %v2101 = vshrl.u32 %v2100, 7
    %v2102 = vsub.s32 0, %v2101
    %v2103 = vrot.slane %v1950, %v2102
    %v2109 = vunpack.c.l.b16 %v1946
    %v2110 = vunpack.c.l.b16 %v1947
    %v2111 = vunpack.c.l.b16 %v1948
    %v2112 = vunpack.c.l.b16 %v1949
    %v2113 = vpack.c.b16 %v2110, %v2109
    %v2114 = vpack.c.b16 %v2112, %v2111
    %2117 = vmatprep.subr.bf16.mxu0 0
    %2118 = vmatpush1.bf16.msra.mxu0 0
    %2119 = vmatprep.subr.bf16.mxu0 0
    %2120 = vmatpush1.bf16.msra.mxu0 0
    %2121 = vmatprep.subr.bf16.mxu0 0
    %2122 = vmatpush1.bf16.msra.mxu0 0
    %2123 = vmatprep.subr.bf16.mxu0 0
    %2124 = vmatpush1.bf16.msra.mxu0 0
    %2125 = vmatprep.subr.bf16.mxu0 0
    %2126 = vmatpush1.bf16.msra.mxu0 0
    %2127 = vmatprep.subr.bf16.mxu0 0
    %2128 = vmatpush1.bf16.msra.mxu0 0
    %2129 = vmatprep.subr.bf16.mxu0 0
    %2130 = vmatpush1.bf16.msra.mxu0 %v2114
    %2131 = vmatprep.subr.bf16.mxu0 0
    %2132 = vmatpush1.bf16.msra.mxu0 %v2113
    %2133 = vmatprep.subr.bf16.mxu0 0
    %2134 = vmatpush2.bf16.msra.mxu0 0
    %2135 = vmatprep.subr.bf16.mxu0 0
    %2136 = vmatpush2.bf16.msra.mxu0 0
    %2137 = vmatprep.subr.bf16.mxu0 0
    %2138 = vmatpush2.bf16.msra.mxu0 0
    %2139 = vmatprep.subr.bf16.mxu0 0
    %2140 = vmatpush2.bf16.msra.mxu0 0
    %2141 = vmatprep.subr.bf16.mxu0 0
    %2142 = vmatpush2.bf16.msra.mxu0 0
    %2143 = vmatprep.subr.bf16.mxu0 0
    %2144 = vmatpush2.bf16.msra.mxu0 0
    %2145 = vmatprep.subr.bf16.mxu0 0
    %2146 = vmatpush2.bf16.msra.mxu0 0
    %2147 = vmatprep.subr.bf16.mxu0 0
    %2148 = vmatpush2.bf16.msra.mxu0 0
    %2149 = vmatprep.mubr.bf16.mxu0 0
    %2150 = vmatmul.mubr.bf16.gmra.mxu0 %v1979
    %v2151 = vpop.f32.mrf.mxu0
    %v2152 = vadd.f32 %v2103, %v2151
    %v2153 = vpop.f32.mrf.mxu0
    %v2154 = vpop.f32.mrf.mxu0
    %v2155 = vadd.f32 %v2103, %v2154
    %v2156 = vpop.f32.mrf.mxu0
    %2157 = vmatprep.mubr.bf16.mxu0 0
    %2158 = vmatmul.mubr.bf16.gmra.mxu0 %v1982
    %v2159 = vpop.f32.mrf.mxu0
    %v2160 = vadd.f32 %v2103, %v2159
    %v2161 = vpop.f32.mrf.mxu0
    %v2162 = vpop.f32.mrf.mxu0
    %v2163 = vadd.f32 %v2103, %v2162
    %v2164 = vpop.f32.mrf.mxu0
    %2165 = vmatprep.mubr.bf16.mxu0 0
    %2166 = vmatmul.mubr.bf16.gmra.mxu0 %v1985
    %v2167 = vpop.f32.mrf.mxu0
    %v2168 = vadd.f32 %v2103, %v2167
    %v2169 = vpop.f32.mrf.mxu0
    %v2170 = vpop.f32.mrf.mxu0
    %v2171 = vadd.f32 %v2103, %v2170
    %v2172 = vpop.f32.mrf.mxu0
    %2173 = vmatprep.mubr.bf16.mxu0 0
    %2174 = vmatmul.mubr.bf16.gmra.mxu0 %v1988
    %v2175 = vpop.f32.mrf.mxu0
    %v2176 = vadd.f32 %v2103, %v2175
    %v2177 = vpop.f32.mrf.mxu0
    %v2178 = vpop.f32.mrf.mxu0
    %v2179 = vadd.f32 %v2103, %v2178
    %v2180 = vpop.f32.mrf.mxu0
    %2181 = vmatprep.mubr.bf16.mxu0 0
    %2182 = vmatmul.mubr.bf16.gmra.mxu0 %v1991
    %v2183 = vpop.f32.mrf.mxu0
    %v2184 = vadd.f32 %v2103, %v2183
    %v2185 = vpop.f32.mrf.mxu0
    %v2186 = vpop.f32.mrf.mxu0
    %v2187 = vadd.f32 %v2103, %v2186
    %v2188 = vpop.f32.mrf.mxu0
    %2189 = vmatprep.mubr.bf16.mxu0 0
    %2190 = vmatmul.mubr.bf16.gmra.mxu0 %v1994
    %v2191 = vpop.f32.mrf.mxu0
    %v2192 = vadd.f32 %v2103, %v2191
    %v2193 = vpop.f32.mrf.mxu0
    %v2194 = vpop.f32.mrf.mxu0
    %v2195 = vadd.f32 %v2103, %v2194
    %v2196 = vpop.f32.mrf.mxu0
    %2197 = vmatprep.mubr.bf16.mxu0 0
    %2198 = vmatmul.mubr.bf16.gmra.mxu0 %v1997
    %v2199 = vpop.f32.mrf.mxu0
    %v2200 = vadd.f32 %v2103, %v2199
    %v2201 = vpop.f32.mrf.mxu0
    %v2202 = vpop.f32.mrf.mxu0
    %v2203 = vadd.f32 %v2103, %v2202
    %v2204 = vpop.f32.mrf.mxu0
    %2205 = vmatprep.mubr.bf16.mxu0 0
    %2206 = vmatmul.mubr.bf16.gmra.mxu0 %v2000
    %v2207 = vpop.f32.mrf.mxu0
    %v2208 = vadd.f32 %v2103, %v2207
    %v2209 = vpop.f32.mrf.mxu0
    %v2210 = vpop.f32.mrf.mxu0
    %v2211 = vadd.f32 %v2103, %v2210
    %v2212 = vpop.f32.mrf.mxu0
    %2213 = vdwg.mxu0
    %v2214 = vpack.c.bf16 %v2040, %v2037
    %v2215 = vpack.c.bf16 %v2048, %v2045
    %v2216 = vpack.c.bf16 %v2056, %v2053
    %v2217 = vpack.c.bf16 %v2064, %v2061
    %v2218 = vpack.c.bf16 %v2072, %v2069
    %v2219 = vpack.c.bf16 %v2080, %v2077
    %v2220 = vpack.c.bf16 %v2088, %v2085
    %v2221 = vpack.c.bf16 %v2096, %v2093
    %v2222 = vpack.c.bf16 %v2155, %v2152
    %v2223 = vpack.c.bf16 %v2163, %v2160
    %v2224 = vpack.c.bf16 %v2171, %v2168
    %v2225 = vpack.c.bf16 %v2179, %v2176
    %v2226 = vpack.c.bf16 %v2187, %v2184
    %v2227 = vpack.c.bf16 %v2195, %v2192
    %v2228 = vpack.c.bf16 %v2203, %v2200
    %v2229 = vpack.c.bf16 %v2211, %v2208
    %v2231 = vsel %vm560, %v2214, 0
    %v2234 = vsel %vm560, %v2215, 0
    %v2237 = vsel %vm560, %v2216, 0
    %v2240 = vsel %vm560, %v2217, 0
    %2242 = vmatprep.subr.bf16.mxu0 0
    %2243 = vmatpush1.bf16.xpose.msra.mxu0 0
    %2244 = vmatprep.subr.bf16.mxu0 0
    %2245 = vmatpush1.bf16.xpose.msra.mxu0 0
    %2246 = vmatprep.subr.bf16.mxu0 0
    %2247 = vmatpush1.bf16.xpose.msra.mxu0 0
    %2248 = vmatprep.subr.bf16.mxu0 0
    %2249 = vmatpush1.bf16.xpose.msra.mxu0 0
    %2250 = vmatprep.subr.bf16.mxu0 0
    %2251 = vmatpush1.bf16.xpose.msra.mxu0 0
    %2252 = vmatprep.subr.bf16.mxu0 0
    %2253 = vmatpush1.bf16.xpose.msra.mxu0 0
    %2254 = vmatprep.subr.bf16.mxu0 0
    %2255 = vmatpush1.bf16.xpose.msra.mxu0 %v1982
    %2256 = vmatprep.subr.bf16.mxu0 0
    %2257 = vmatpush1.bf16.xpose.msra.mxu0 %v1979
    %2258 = vmatprep.subr.bf16.mxu0 0
    %2259 = vmatpush2.bf16.xpose.msra.mxu0 0
    %2260 = vmatprep.subr.bf16.mxu0 0
    %2261 = vmatpush2.bf16.xpose.msra.mxu0 0
    %2262 = vmatprep.subr.bf16.mxu0 0
    %2263 = vmatpush2.bf16.xpose.msra.mxu0 0
    %2264 = vmatprep.subr.bf16.mxu0 0
    %2265 = vmatpush2.bf16.xpose.msra.mxu0 0
    %2266 = vmatprep.subr.bf16.mxu0 0
    %2267 = vmatpush2.bf16.xpose.msra.mxu0 0
    %2268 = vmatprep.subr.bf16.mxu0 0
    %2269 = vmatpush2.bf16.xpose.msra.mxu0 0
    %2270 = vmatprep.subr.bf16.mxu0 0
    %2271 = vmatpush2.bf16.xpose.msra.mxu0 0
    %2272 = vmatprep.subr.bf16.mxu0 0
    %2273 = vmatpush2.bf16.xpose.msra.mxu0 0
    %2274 = vmatprep.mubr.bf16.mxu0 0
    %2275 = vmatmul.mubr.bf16.gmra.mxu0 %v2231
    %v2276 = vpop.f32.mrf.mxu0
    %v2277 = vadd.f32 0.0, %v2276
    %v2278 = vpop.f32.mrf.mxu0
    %v2279 = vpop.f32.mrf.mxu0
    %v2280 = vadd.f32 0.0, %v2279
    %v2281 = vpop.f32.mrf.mxu0
    %2282 = vmatprep.mubr.bf16.mxu0 0
    %2283 = vmatmul.mubr.bf16.gmra.mxu0 %v2234
    %v2284 = vpop.f32.mrf.mxu0
    %v2285 = vadd.f32 0.0, %v2284
    %v2286 = vpop.f32.mrf.mxu0
    %v2287 = vpop.f32.mrf.mxu0
    %v2288 = vadd.f32 0.0, %v2287
    %v2289 = vpop.f32.mrf.mxu0
    %2290 = vmatprep.mubr.bf16.mxu0 0
    %2291 = vmatmul.mubr.bf16.gmra.mxu0 %v2237
    %v2292 = vpop.f32.mrf.mxu0
    %v2293 = vadd.f32 0.0, %v2292
    %v2294 = vpop.f32.mrf.mxu0
    %v2295 = vpop.f32.mrf.mxu0
    %v2296 = vadd.f32 0.0, %v2295
    %v2297 = vpop.f32.mrf.mxu0
    %2298 = vmatprep.mubr.bf16.mxu0 0
    %2299 = vmatmul.mubr.bf16.gmra.mxu0 %v2240
    %v2300 = vpop.f32.mrf.mxu0
    %v2301 = vadd.f32 0.0, %v2300
    %v2302 = vpop.f32.mrf.mxu0
    %v2303 = vpop.f32.mrf.mxu0
    %v2304 = vadd.f32 0.0, %v2303
    %v2305 = vpop.f32.mrf.mxu0
    %2306 = vdwg.mxu0
    %v2308 = vsel %vm560, %v2218, 0
    %v2311 = vsel %vm560, %v2219, 0
    %v2314 = vsel %vm560, %v2220, 0
    %v2317 = vsel %vm560, %v2221, 0
    %2319 = vmatprep.subr.bf16.mxu0 0
    %2320 = vmatpush1.bf16.xpose.msra.mxu0 0
    %2321 = vmatprep.subr.bf16.mxu0 0
    %2322 = vmatpush1.bf16.xpose.msra.mxu0 0
    %2323 = vmatprep.subr.bf16.mxu0 0
    %2324 = vmatpush1.bf16.xpose.msra.mxu0 0
    %2325 = vmatprep.subr.bf16.mxu0 0
    %2326 = vmatpush1.bf16.xpose.msra.mxu0 0
    %2327 = vmatprep.subr.bf16.mxu0 0
    %2328 = vmatpush1.bf16.xpose.msra.mxu0 0
    %2329 = vmatprep.subr.bf16.mxu0 0
    %2330 = vmatpush1.bf16.xpose.msra.mxu0 0
    %2331 = vmatprep.subr.bf16.mxu0 0
    %2332 = vmatpush1.bf16.xpose.msra.mxu0 %v1994
    %2333 = vmatprep.subr.bf16.mxu0 0
    %2334 = vmatpush1.bf16.xpose.msra.mxu0 %v1991
    %2335 = vmatprep.subr.bf16.mxu0 0
    %2336 = vmatpush2.bf16.xpose.msra.mxu0 0
    %2337 = vmatprep.subr.bf16.mxu0 0
    %2338 = vmatpush2.bf16.xpose.msra.mxu0 0
    %2339 = vmatprep.subr.bf16.mxu0 0
    %2340 = vmatpush2.bf16.xpose.msra.mxu0 0
    %2341 = vmatprep.subr.bf16.mxu0 0
    %2342 = vmatpush2.bf16.xpose.msra.mxu0 0
    %2343 = vmatprep.subr.bf16.mxu0 0
    %2344 = vmatpush2.bf16.xpose.msra.mxu0 0
    %2345 = vmatprep.subr.bf16.mxu0 0
    %2346 = vmatpush2.bf16.xpose.msra.mxu0 0
    %2347 = vmatprep.subr.bf16.mxu0 0
    %2348 = vmatpush2.bf16.xpose.msra.mxu0 0
    %2349 = vmatprep.subr.bf16.mxu0 0
    %2350 = vmatpush2.bf16.xpose.msra.mxu0 0
    %2351 = vmatprep.mubr.bf16.mxu0 0
    %2352 = vmatmul.mubr.bf16.gmra.mxu0 %v2308
    %v2353 = vpop.f32.mrf.mxu0
    %v2354 = vadd.f32 0.0, %v2353
    %v2355 = vpop.f32.mrf.mxu0
    %v2356 = vpop.f32.mrf.mxu0
    %v2357 = vadd.f32 0.0, %v2356
    %v2358 = vpop.f32.mrf.mxu0
    %2359 = vmatprep.mubr.bf16.mxu0 0
    %2360 = vmatmul.mubr.bf16.gmra.mxu0 %v2311
    %v2361 = vpop.f32.mrf.mxu0
    %v2362 = vadd.f32 0.0, %v2361
    %v2363 = vpop.f32.mrf.mxu0
    %v2364 = vpop.f32.mrf.mxu0
    %v2365 = vadd.f32 0.0, %v2364
    %v2366 = vpop.f32.mrf.mxu0
    %2367 = vmatprep.mubr.bf16.mxu0 0
    %2368 = vmatmul.mubr.bf16.gmra.mxu0 %v2314
    %v2369 = vpop.f32.mrf.mxu0
    %v2370 = vadd.f32 0.0, %v2369
    %v2371 = vpop.f32.mrf.mxu0
    %v2372 = vpop.f32.mrf.mxu0
    %v2373 = vadd.f32 0.0, %v2372
    %v2374 = vpop.f32.mrf.mxu0
    %2375 = vmatprep.mubr.bf16.mxu0 0
    %2376 = vmatmul.mubr.bf16.gmra.mxu0 %v2317
    %v2377 = vpop.f32.mrf.mxu0
    %v2378 = vadd.f32 0.0, %v2377
    %v2379 = vpop.f32.mrf.mxu0
    %v2380 = vpop.f32.mrf.mxu0
    %v2381 = vadd.f32 0.0, %v2380
    %v2382 = vpop.f32.mrf.mxu0
    %2383 = vdwg.mxu0
    %v2384 = vsel %vm560, %v2277, -inf
    %2385 = vmax.xlane.f32.xlu0 %v2384
    %v2386 = vpop.xlane.xlu0 %2385
    %v2387 = vsel %vm560, %v2280, -inf
    %2388 = vmax.xlane.f32.xlu0 %v2387
    %v2389 = vpop.xlane.xlu0 %2388
    %v2390 = vsel %vm560, %v2285, -inf
    %2391 = vmax.xlane.f32.xlu0 %v2390
    %v2392 = vpop.xlane.xlu0 %2391
    %v2393 = vsel %vm560, %v2288, -inf
    %2394 = vmax.xlane.f32.xlu0 %v2393
    %v2395 = vpop.xlane.xlu0 %2394
    %v2396 = vsel %vm560, %v2293, -inf
    %2397 = vmax.xlane.f32.xlu0 %v2396
    %v2398 = vpop.xlane.xlu0 %2397
    %v2399 = vsel %vm560, %v2296, -inf
    %2400 = vmax.xlane.f32.xlu0 %v2399
    %v2401 = vpop.xlane.xlu0 %2400
    %v2402 = vsel %vm560, %v2301, -inf
    %2403 = vmax.xlane.f32.xlu0 %v2402
    %v2404 = vpop.xlane.xlu0 %2403
    %v2405 = vsel %vm560, %v2304, -inf
    %2406 = vmax.xlane.f32.xlu0 %v2405
    %v2407 = vpop.xlane.xlu0 %2406
    %v2408 = vsel %vm560, %v2354, -inf
    %2409 = vmax.xlane.f32.xlu0 %v2408
    %v2410 = vpop.xlane.xlu0 %2409
    %v2411 = vsel %vm560, %v2357, -inf
    %2412 = vmax.xlane.f32.xlu0 %v2411
    %v2413 = vpop.xlane.xlu0 %2412
    %v2414 = vsel %vm560, %v2362, -inf
    %2415 = vmax.xlane.f32.xlu0 %v2414
    %v2416 = vpop.xlane.xlu0 %2415
    %v2417 = vsel %vm560, %v2365, -inf
    %2418 = vmax.xlane.f32.xlu0 %v2417
    %v2419 = vpop.xlane.xlu0 %2418
    %v2420 = vsel %vm560, %v2370, -inf
    %2421 = vmax.xlane.f32.xlu0 %v2420
    %v2422 = vpop.xlane.xlu0 %2421
    %v2423 = vsel %vm560, %v2373, -inf
    %2424 = vmax.xlane.f32.xlu0 %v2423
    %v2425 = vpop.xlane.xlu0 %2424
    %v2426 = vsel %vm560, %v2378, -inf
    %2427 = vmax.xlane.f32.xlu0 %v2426
    %v2428 = vpop.xlane.xlu0 %2427
    %v2429 = vsel %vm560, %v2381, -inf
    %2430 = vmax.xlane.f32.xlu0 %v2429
    %v2431 = vpop.xlane.xlu0 %2430
    %v2432 = vsub.f32 -inf, %v2386
    %v2433 = vsub.f32 -inf, %v2389
    %v2434 = vsub.f32 -inf, %v2392
    %v2435 = vsub.f32 -inf, %v2395
    %v2436 = vsub.f32 -inf, %v2398
    %v2437 = vsub.f32 -inf, %v2401
    %v2438 = vsub.f32 -inf, %v2404
    %v2439 = vsub.f32 -inf, %v2407
    %v2440 = vsub.f32 -inf, %v2410
    %v2441 = vsub.f32 -inf, %v2413
    %v2442 = vsub.f32 -inf, %v2416
    %v2443 = vsub.f32 -inf, %v2419
    %v2444 = vsub.f32 -inf, %v2422
    %v2445 = vsub.f32 -inf, %v2425
    %v2446 = vsub.f32 -inf, %v2428
    %v2447 = vsub.f32 -inf, %v2431
    %v2448 = vmul.f32 %v2432, 1.442695
    %v2449 = vpow.pop %v2448
    %v2450 = vmul.f32 %v2433, 1.442695
    %v2451 = vpow.pop %v2450
    %v2452 = vmul.f32 %v2434, 1.442695
    %v2453 = vpow.pop %v2452
    %v2454 = vmul.f32 %v2435, 1.442695
    %v2455 = vpow.pop %v2454
    %v2456 = vmul.f32 %v2436, 1.442695
    %v2457 = vpow.pop %v2456
    %v2458 = vmul.f32 %v2437, 1.442695
    %v2459 = vpow.pop %v2458
    %v2460 = vmul.f32 %v2438, 1.442695
    %v2461 = vpow.pop %v2460
    %v2462 = vmul.f32 %v2439, 1.442695
    %v2463 = vpow.pop %v2462
    %v2464 = vmul.f32 %v2440, 1.442695
    %v2465 = vpow.pop %v2464
    %v2466 = vmul.f32 %v2441, 1.442695
    %v2467 = vpow.pop %v2466
    %v2468 = vmul.f32 %v2442, 1.442695
    %v2469 = vpow.pop %v2468
    %v2470 = vmul.f32 %v2443, 1.442695
    %v2471 = vpow.pop %v2470
    %v2472 = vmul.f32 %v2444, 1.442695
    %v2473 = vpow.pop %v2472
    %v2474 = vmul.f32 %v2445, 1.442695
    %v2475 = vpow.pop %v2474
    %v2476 = vmul.f32 %v2446, 1.442695
    %v2477 = vpow.pop %v2476
    %v2478 = vmul.f32 %v2447, 1.442695
    %v2479 = vpow.pop %v2478
    %v2480 = vsub.f32 %v2277, %v2386
    %v2481 = vsub.f32 %v2280, %v2389
    %v2482 = vsub.f32 %v2285, %v2392
    %v2483 = vsub.f32 %v2288, %v2395
    %v2484 = vsub.f32 %v2293, %v2398
    %v2485 = vsub.f32 %v2296, %v2401
    %v2486 = vsub.f32 %v2301, %v2404
    %v2487 = vsub.f32 %v2304, %v2407
    %v2488 = vsub.f32 %v2354, %v2410
    %v2489 = vsub.f32 %v2357, %v2413
    %v2490 = vsub.f32 %v2362, %v2416
    %v2491 = vsub.f32 %v2365, %v2419
    %v2492 = vsub.f32 %v2370, %v2422
    %v2493 = vsub.f32 %v2373, %v2425
    %v2494 = vsub.f32 %v2378, %v2428
    %v2495 = vsub.f32 %v2381, %v2431
    %v2496 = vmul.f32 %v2480, 1.442695
    %v2497 = vpow.pop %v2496
    %v2498 = vmul.f32 %v2481, 1.442695
    %v2499 = vpow.pop %v2498
    %v2500 = vmul.f32 %v2482, 1.442695
    %v2501 = vpow.pop %v2500
    %v2502 = vmul.f32 %v2483, 1.442695
    %v2503 = vpow.pop %v2502
    %v2504 = vmul.f32 %v2484, 1.442695
    %v2505 = vpow.pop %v2504
    %v2506 = vmul.f32 %v2485, 1.442695
    %v2507 = vpow.pop %v2506
    %v2508 = vmul.f32 %v2486, 1.442695
    %v2509 = vpow.pop %v2508
    %v2510 = vmul.f32 %v2487, 1.442695
    %v2511 = vpow.pop %v2510
    %v2512 = vmul.f32 %v2488, 1.442695
    %v2513 = vpow.pop %v2512
    %v2514 = vmul.f32 %v2489, 1.442695
    %v2515 = vpow.pop %v2514
    %v2516 = vmul.f32 %v2490, 1.442695
    %v2517 = vpow.pop %v2516
    %v2518 = vmul.f32 %v2491, 1.442695
    %v2519 = vpow.pop %v2518
    %v2520 = vmul.f32 %v2492, 1.442695
    %v2521 = vpow.pop %v2520
    %v2522 = vmul.f32 %v2493, 1.442695
    %v2523 = vpow.pop %v2522
    %v2524 = vmul.f32 %v2494, 1.442695
    %v2525 = vpow.pop %v2524
    %v2526 = vmul.f32 %v2495, 1.442695
    %v2527 = vpow.pop %v2526
    %v2528 = vmul.f32 %v2449, 0.0
    %v2529 = vmul.f32 %v2451, 0.0
    %v2530 = vmul.f32 %v2453, 0.0
    %v2531 = vmul.f32 %v2455, 0.0
    %v2532 = vmul.f32 %v2457, 0.0
    %v2533 = vmul.f32 %v2459, 0.0
    %v2534 = vmul.f32 %v2461, 0.0
    %v2535 = vmul.f32 %v2463, 0.0
    %v2536 = vmul.f32 %v2465, 0.0
    %v2537 = vmul.f32 %v2467, 0.0
    %v2538 = vmul.f32 %v2469, 0.0
    %v2539 = vmul.f32 %v2471, 0.0
    %v2540 = vmul.f32 %v2473, 0.0
    %v2541 = vmul.f32 %v2475, 0.0
    %v2542 = vmul.f32 %v2477, 0.0
    %v2543 = vmul.f32 %v2479, 0.0
    %v2544 = vsel %vm560, %v2497, 0.0
    %2545 = vadd.xlane.f32.xlu0 %v2544
    %v2546 = vpop.xlane.xlu0 %2545
    %v2547 = vsel %vm560, %v2499, 0.0
    %2548 = vadd.xlane.f32.xlu0 %v2547
    %v2549 = vpop.xlane.xlu0 %2548
    %v2550 = vsel %vm560, %v2501, 0.0
    %2551 = vadd.xlane.f32.xlu0 %v2550
    %v2552 = vpop.xlane.xlu0 %2551
    %v2553 = vsel %vm560, %v2503, 0.0
    %2554 = vadd.xlane.f32.xlu0 %v2553
    %v2555 = vpop.xlane.xlu0 %2554
    %v2556 = vsel %vm560, %v2505, 0.0
    %2557 = vadd.xlane.f32.xlu0 %v2556
    %v2558 = vpop.xlane.xlu0 %2557
    %v2559 = vsel %vm560, %v2507, 0.0
    %2560 = vadd.xlane.f32.xlu0 %v2559
    %v2561 = vpop.xlane.xlu0 %2560
    %v2562 = vsel %vm560, %v2509, 0.0
    %2563 = vadd.xlane.f32.xlu0 %v2562
    %v2564 = vpop.xlane.xlu0 %2563
    %v2565 = vsel %vm560, %v2511, 0.0
    %2566 = vadd.xlane.f32.xlu0 %v2565
    %v2567 = vpop.xlane.xlu0 %2566
    %v2568 = vsel %vm560, %v2513, 0.0
    %2569 = vadd.xlane.f32.xlu0 %v2568
    %v2570 = vpop.xlane.xlu0 %2569
    %v2571 = vsel %vm560, %v2515, 0.0
    %2572 = vadd.xlane.f32.xlu0 %v2571
    %v2573 = vpop.xlane.xlu0 %2572
    %v2574 = vsel %vm560, %v2517, 0.0
    %2575 = vadd.xlane.f32.xlu0 %v2574
    %v2576 = vpop.xlane.xlu0 %2575
    %v2577 = vsel %vm560, %v2519, 0.0
    %2578 = vadd.xlane.f32.xlu0 %v2577
    %v2579 = vpop.xlane.xlu0 %2578
    %v2580 = vsel %vm560, %v2521, 0.0
    %2581 = vadd.xlane.f32.xlu0 %v2580
    %v2582 = vpop.xlane.xlu0 %2581
    %v2583 = vsel %vm560, %v2523, 0.0
    %2584 = vadd.xlane.f32.xlu0 %v2583
    %v2585 = vpop.xlane.xlu0 %2584
    %v2586 = vsel %vm560, %v2525, 0.0
    %2587 = vadd.xlane.f32.xlu0 %v2586
    %v2588 = vpop.xlane.xlu0 %2587
    %v2589 = vsel %vm560, %v2527, 0.0
    %2590 = vadd.xlane.f32.xlu0 %v2589
    %v2591 = vpop.xlane.xlu0 %2590
    %v2592 = vadd.f32 %v2528, %v2546
    %v2593 = vadd.f32 %v2529, %v2549
    %v2594 = vadd.f32 %v2530, %v2552
    %v2595 = vadd.f32 %v2531, %v2555
    %v2596 = vadd.f32 %v2532, %v2558
    %v2597 = vadd.f32 %v2533, %v2561
    %v2598 = vadd.f32 %v2534, %v2564
    %v2599 = vadd.f32 %v2535, %v2567
    %v2600 = vadd.f32 %v2536, %v2570
    %v2601 = vadd.f32 %v2537, %v2573
    %v2602 = vadd.f32 %v2538, %v2576
    %v2603 = vadd.f32 %v2539, %v2579
    %v2604 = vadd.f32 %v2540, %v2582
    %v2605 = vadd.f32 %v2541, %v2585
    %v2606 = vadd.f32 %v2542, %v2588
    %v2607 = vadd.f32 %v2543, %v2591
    %v2608 = vpack.c.bf16 %v2499, %v2497
    %v2609 = vpack.c.bf16 %v2503, %v2501
    %v2610 = vpack.c.bf16 %v2507, %v2505
    %v2611 = vpack.c.bf16 %v2511, %v2509
    %v2612 = vpack.c.bf16 %v2515, %v2513
    %v2613 = vpack.c.bf16 %v2519, %v2517
    %v2614 = vpack.c.bf16 %v2523, %v2521
    %v2615 = vpack.c.bf16 %v2527, %v2525
    %v2617 = vsel %vm560, %v2608, 0
    %v2620 = vsel %vm560, %v2609, 0
    %v2623 = vsel %vm560, %v2610, 0
    %v2626 = vsel %vm560, %v2611, 0
    %2628 = vmatprep.subr.bf16.mxu0 0
    %2629 = vmatpush1.bf16.msra.mxu0 0
    %2630 = vmatprep.subr.bf16.mxu0 0
    %2631 = vmatpush1.bf16.msra.mxu0 0
    %2632 = vmatprep.subr.bf16.mxu0 0
    %2633 = vmatpush1.bf16.msra.mxu0 0
    %2634 = vmatprep.subr.bf16.mxu0 0
    %2635 = vmatpush1.bf16.msra.mxu0 0
    %2636 = vmatprep.subr.bf16.mxu0 0
    %2637 = vmatpush1.bf16.msra.mxu0 0
    %2638 = vmatprep.subr.bf16.mxu0 0
    %2639 = vmatpush1.bf16.msra.mxu0 0
    %2640 = vmatprep.subr.bf16.mxu0 0
    %2641 = vmatpush1.bf16.msra.mxu0 %v2223
    %2642 = vmatprep.subr.bf16.mxu0 0
    %2643 = vmatpush1.bf16.msra.mxu0 %v2222
    %2644 = vmatprep.subr.bf16.mxu0 0
    %2645 = vmatpush2.bf16.msra.mxu0 0
    %2646 = vmatprep.subr.bf16.mxu0 0
    %2647 = vmatpush2.bf16.msra.mxu0 0
    %2648 = vmatprep.subr.bf16.mxu0 0
    %2649 = vmatpush2.bf16.msra.mxu0 0
    %2650 = vmatprep.subr.bf16.mxu0 0
    %2651 = vmatpush2.bf16.msra.mxu0 0
    %2652 = vmatprep.subr.bf16.mxu0 0
    %2653 = vmatpush2.bf16.msra.mxu0 0
    %2654 = vmatprep.subr.bf16.mxu0 0
    %2655 = vmatpush2.bf16.msra.mxu0 0
    %2656 = vmatprep.subr.bf16.mxu0 0
    %2657 = vmatpush2.bf16.msra.mxu0 0
    %2658 = vmatprep.subr.bf16.mxu0 0
    %2659 = vmatpush2.bf16.msra.mxu0 0
    %2660 = vmatprep.mubr.bf16.mxu0 0
    %2661 = vmatmul.mubr.bf16.gmra.mxu0 %v2617
    %v2662 = vpop.f32.mrf.mxu0
    %v2663 = vadd.f32 0.0, %v2662
    %v2664 = vpop.f32.mrf.mxu0
    %v2665 = vpop.f32.mrf.mxu0
    %v2666 = vadd.f32 0.0, %v2665
    %v2667 = vpop.f32.mrf.mxu0
    %2668 = vmatprep.mubr.bf16.mxu0 0
    %2669 = vmatmul.mubr.bf16.gmra.mxu0 %v2620
    %v2670 = vpop.f32.mrf.mxu0
    %v2671 = vadd.f32 0.0, %v2670
    %v2672 = vpop.f32.mrf.mxu0
    %v2673 = vpop.f32.mrf.mxu0
    %v2674 = vadd.f32 0.0, %v2673
    %v2675 = vpop.f32.mrf.mxu0
    %2676 = vmatprep.mubr.bf16.mxu0 0
    %2677 = vmatmul.mubr.bf16.gmra.mxu0 %v2623
    %v2678 = vpop.f32.mrf.mxu0
    %v2679 = vadd.f32 0.0, %v2678
    %v2680 = vpop.f32.mrf.mxu0
    %v2681 = vpop.f32.mrf.mxu0
    %v2682 = vadd.f32 0.0, %v2681
    %v2683 = vpop.f32.mrf.mxu0
    %2684 = vmatprep.mubr.bf16.mxu0 0
    %2685 = vmatmul.mubr.bf16.gmra.mxu0 %v2626
    %v2686 = vpop.f32.mrf.mxu0
    %v2687 = vadd.f32 0.0, %v2686
    %v2688 = vpop.f32.mrf.mxu0
    %v2689 = vpop.f32.mrf.mxu0
    %v2690 = vadd.f32 0.0, %v2689
    %v2691 = vpop.f32.mrf.mxu0
    %2692 = vdwg.mxu0
    %v2694 = vsel %vm560, %v2612, 0
    %v2697 = vsel %vm560, %v2613, 0
    %v2700 = vsel %vm560, %v2614, 0
    %v2703 = vsel %vm560, %v2615, 0
    %2705 = vmatprep.subr.bf16.mxu0 0
    %2706 = vmatpush1.bf16.msra.mxu0 0
    %2707 = vmatprep.subr.bf16.mxu0 0
    %2708 = vmatpush1.bf16.msra.mxu0 0
    %2709 = vmatprep.subr.bf16.mxu0 0
    %2710 = vmatpush1.bf16.msra.mxu0 0
    %2711 = vmatprep.subr.bf16.mxu0 0
    %2712 = vmatpush1.bf16.msra.mxu0 0
    %2713 = vmatprep.subr.bf16.mxu0 0
    %2714 = vmatpush1.bf16.msra.mxu0 0
    %2715 = vmatprep.subr.bf16.mxu0 0
    %2716 = vmatpush1.bf16.msra.mxu0 0
    %2717 = vmatprep.subr.bf16.mxu0 0
    %2718 = vmatpush1.bf16.msra.mxu0 %v2227
    %2719 = vmatprep.subr.bf16.mxu0 0
    %2720 = vmatpush1.bf16.msra.mxu0 %v2226
    %2721 = vmatprep.subr.bf16.mxu0 0
    %2722 = vmatpush2.bf16.msra.mxu0 0
    %2723 = vmatprep.subr.bf16.mxu0 0
    %2724 = vmatpush2.bf16.msra.mxu0 0
    %2725 = vmatprep.subr.bf16.mxu0 0
    %2726 = vmatpush2.bf16.msra.mxu0 0
    %2727 = vmatprep.subr.bf16.mxu0 0
    %2728 = vmatpush2.bf16.msra.mxu0 0
    %2729 = vmatprep.subr.bf16.mxu0 0
    %2730 = vmatpush2.bf16.msra.mxu0 0
    %2731 = vmatprep.subr.bf16.mxu0 0
    %2732 = vmatpush2.bf16.msra.mxu0 0
    %2733 = vmatprep.subr.bf16.mxu0 0
    %2734 = vmatpush2.bf16.msra.mxu0 0
    %2735 = vmatprep.subr.bf16.mxu0 0
    %2736 = vmatpush2.bf16.msra.mxu0 0
    %2737 = vmatprep.mubr.bf16.mxu0 0
    %2738 = vmatmul.mubr.bf16.gmra.mxu0 %v2694
    %v2739 = vpop.f32.mrf.mxu0
    %v2740 = vadd.f32 0.0, %v2739
    %v2741 = vpop.f32.mrf.mxu0
    %v2742 = vpop.f32.mrf.mxu0
    %v2743 = vadd.f32 0.0, %v2742
    %v2744 = vpop.f32.mrf.mxu0
    %2745 = vmatprep.mubr.bf16.mxu0 0
    %2746 = vmatmul.mubr.bf16.gmra.mxu0 %v2697
    %v2747 = vpop.f32.mrf.mxu0
    %v2748 = vadd.f32 0.0, %v2747
    %v2749 = vpop.f32.mrf.mxu0
    %v2750 = vpop.f32.mrf.mxu0
    %v2751 = vadd.f32 0.0, %v2750
    %v2752 = vpop.f32.mrf.mxu0
    %2753 = vmatprep.mubr.bf16.mxu0 0
    %2754 = vmatmul.mubr.bf16.gmra.mxu0 %v2700
    %v2755 = vpop.f32.mrf.mxu0
    %v2756 = vadd.f32 0.0, %v2755
    %v2757 = vpop.f32.mrf.mxu0
    %v2758 = vpop.f32.mrf.mxu0
    %v2759 = vadd.f32 0.0, %v2758
    %v2760 = vpop.f32.mrf.mxu0
    %2761 = vmatprep.mubr.bf16.mxu0 0
    %2762 = vmatmul.mubr.bf16.gmra.mxu0 %v2703
    %v2763 = vpop.f32.mrf.mxu0
    %v2764 = vadd.f32 0.0, %v2763
    %v2765 = vpop.f32.mrf.mxu0
    %v2766 = vpop.f32.mrf.mxu0
    %v2767 = vadd.f32 0.0, %v2766
    %v2768 = vpop.f32.mrf.mxu0
    %2769 = vdwg.mxu0
    %v2770 = vadd.f32 %v2528, %v2663
    %v2771 = vadd.f32 %v2529, %v2666
    %v2772 = vadd.f32 %v2530, %v2671
    %v2773 = vadd.f32 %v2531, %v2674
    %v2774 = vadd.f32 %v2532, %v2679
    %v2775 = vadd.f32 %v2533, %v2682
    %v2776 = vadd.f32 %v2534, %v2687
    %v2777 = vadd.f32 %v2535, %v2690
    %v2778 = vadd.f32 %v2536, %v2740
    %v2779 = vadd.f32 %v2537, %v2743
    %v2780 = vadd.f32 %v2538, %v2748
    %v2781 = vadd.f32 %v2539, %v2751
    %v2782 = vadd.f32 %v2540, %v2756
    %v2783 = vadd.f32 %v2541, %v2759
    %v2784 = vadd.f32 %v2542, %v2764
    %v2785 = vadd.f32 %v2543, %v2767
    %2786 = vmatprep.subr.bf16.mxu0 0
    %2787 = vmatpush1.bf16.xpose.msra.mxu0 0
    %2788 = vmatprep.subr.bf16.mxu0 0
    %2789 = vmatpush1.bf16.xpose.msra.mxu0 0
    %2790 = vmatprep.subr.bf16.mxu0 0
    %2791 = vmatpush1.bf16.xpose.msra.mxu0 0
    %2792 = vmatprep.subr.bf16.mxu0 0
    %2793 = vmatpush1.bf16.xpose.msra.mxu0 0
    %2794 = vmatprep.subr.bf16.mxu0 0
    %2795 = vmatpush1.bf16.xpose.msra.mxu0 0
    %2796 = vmatprep.subr.bf16.mxu0 0
    %2797 = vmatpush1.bf16.xpose.msra.mxu0 0
    %2798 = vmatprep.subr.bf16.mxu0 0
    %2799 = vmatpush1.bf16.xpose.msra.mxu0 %v1988
    %2800 = vmatprep.subr.bf16.mxu0 0
    %2801 = vmatpush1.bf16.xpose.msra.mxu0 %v1985
    %2802 = vmatprep.subr.bf16.mxu0 0
    %2803 = vmatpush2.bf16.xpose.msra.mxu0 0
    %2804 = vmatprep.subr.bf16.mxu0 0
    %2805 = vmatpush2.bf16.xpose.msra.mxu0 0
    %2806 = vmatprep.subr.bf16.mxu0 0
    %2807 = vmatpush2.bf16.xpose.msra.mxu0 0
    %2808 = vmatprep.subr.bf16.mxu0 0
    %2809 = vmatpush2.bf16.xpose.msra.mxu0 0
    %2810 = vmatprep.subr.bf16.mxu0 0
    %2811 = vmatpush2.bf16.xpose.msra.mxu0 0
    %2812 = vmatprep.subr.bf16.mxu0 0
    %2813 = vmatpush2.bf16.xpose.msra.mxu0 0
    %2814 = vmatprep.subr.bf16.mxu0 0
    %2815 = vmatpush2.bf16.xpose.msra.mxu0 0
    %2816 = vmatprep.subr.bf16.mxu0 0
    %2817 = vmatpush2.bf16.xpose.msra.mxu0 0
    %2818 = vmatprep.mubr.bf16.mxu0 0
    %2819 = vmatmul.mubr.bf16.gmra.mxu0 %v2231
    %v2820 = vpop.f32.mrf.mxu0
    %v2821 = vadd.f32 0.0, %v2820
    %v2822 = vpop.f32.mrf.mxu0
    %v2823 = vpop.f32.mrf.mxu0
    %v2824 = vadd.f32 0.0, %v2823
    %v2825 = vpop.f32.mrf.mxu0
    %2826 = vmatprep.mubr.bf16.mxu0 0
    %2827 = vmatmul.mubr.bf16.gmra.mxu0 %v2234
    %v2828 = vpop.f32.mrf.mxu0
    %v2829 = vadd.f32 0.0, %v2828
    %v2830 = vpop.f32.mrf.mxu0
    %v2831 = vpop.f32.mrf.mxu0
    %v2832 = vadd.f32 0.0, %v2831
    %v2833 = vpop.f32.mrf.mxu0
    %2834 = vmatprep.mubr.bf16.mxu0 0
    %2835 = vmatmul.mubr.bf16.gmra.mxu0 %v2237
    %v2836 = vpop.f32.mrf.mxu0
    %v2837 = vadd.f32 0.0, %v2836
    %v2838 = vpop.f32.mrf.mxu0
    %v2839 = vpop.f32.mrf.mxu0
    %v2840 = vadd.f32 0.0, %v2839
    %v2841 = vpop.f32.mrf.mxu0
    %2842 = vmatprep.mubr.bf16.mxu0 0
    %2843 = vmatmul.mubr.bf16.gmra.mxu0 %v2240
    %v2844 = vpop.f32.mrf.mxu0
    %v2845 = vadd.f32 0.0, %v2844
    %v2846 = vpop.f32.mrf.mxu0
    %v2847 = vpop.f32.mrf.mxu0
    %v2848 = vadd.f32 0.0, %v2847
    %v2849 = vpop.f32.mrf.mxu0
    %2850 = vdwg.mxu0
    %2851 = vmatprep.subr.bf16.mxu0 0
    %2852 = vmatpush1.bf16.xpose.msra.mxu0 0
    %2853 = vmatprep.subr.bf16.mxu0 0
    %2854 = vmatpush1.bf16.xpose.msra.mxu0 0
    %2855 = vmatprep.subr.bf16.mxu0 0
    %2856 = vmatpush1.bf16.xpose.msra.mxu0 0
    %2857 = vmatprep.subr.bf16.mxu0 0
    %2858 = vmatpush1.bf16.xpose.msra.mxu0 0
    %2859 = vmatprep.subr.bf16.mxu0 0
    %2860 = vmatpush1.bf16.xpose.msra.mxu0 0
    %2861 = vmatprep.subr.bf16.mxu0 0
    %2862 = vmatpush1.bf16.xpose.msra.mxu0 0
    %2863 = vmatprep.subr.bf16.mxu0 0
    %2864 = vmatpush1.bf16.xpose.msra.mxu0 %v2000
    %2865 = vmatprep.subr.bf16.mxu0 0
    %2866 = vmatpush1.bf16.xpose.msra.mxu0 %v1997
    %2867 = vmatprep.subr.bf16.mxu0 0
    %2868 = vmatpush2.bf16.xpose.msra.mxu0 0
    %2869 = vmatprep.subr.bf16.mxu0 0
    %2870 = vmatpush2.bf16.xpose.msra.mxu0 0
    %2871 = vmatprep.subr.bf16.mxu0 0
    %2872 = vmatpush2.bf16.xpose.msra.mxu0 0
    %2873 = vmatprep.subr.bf16.mxu0 0
    %2874 = vmatpush2.bf16.xpose.msra.mxu0 0
    %2875 = vmatprep.subr.bf16.mxu0 0
    %2876 = vmatpush2.bf16.xpose.msra.mxu0 0
    %2877 = vmatprep.subr.bf16.mxu0 0
    %2878 = vmatpush2.bf16.xpose.msra.mxu0 0
    %2879 = vmatprep.subr.bf16.mxu0 0
    %2880 = vmatpush2.bf16.xpose.msra.mxu0 0
    %2881 = vmatprep.subr.bf16.mxu0 0
    %2882 = vmatpush2.bf16.xpose.msra.mxu0 0
    %2883 = vmatprep.mubr.bf16.mxu0 0
    %2884 = vmatmul.mubr.bf16.gmra.mxu0 %v2308
    %v2885 = vpop.f32.mrf.mxu0
    %v2886 = vadd.f32 0.0, %v2885
    %v2887 = vpop.f32.mrf.mxu0
    %v2888 = vpop.f32.mrf.mxu0
    %v2889 = vadd.f32 0.0, %v2888
    %v2890 = vpop.f32.mrf.mxu0
    %2891 = vmatprep.mubr.bf16.mxu0 0
    %2892 = vmatmul.mubr.bf16.gmra.mxu0 %v2311
    %v2893 = vpop.f32.mrf.mxu0
    %v2894 = vadd.f32 0.0, %v2893
    %v2895 = vpop.f32.mrf.mxu0
    %v2896 = vpop.f32.mrf.mxu0
    %v2897 = vadd.f32 0.0, %v2896
    %v2898 = vpop.f32.mrf.mxu0
    %2899 = vmatprep.mubr.bf16.mxu0 0
    %2900 = vmatmul.mubr.bf16.gmra.mxu0 %v2314
    %v2901 = vpop.f32.mrf.mxu0
    %v2902 = vadd.f32 0.0, %v2901
    %v2903 = vpop.f32.mrf.mxu0
    %v2904 = vpop.f32.mrf.mxu0
    %v2905 = vadd.f32 0.0, %v2904
    %v2906 = vpop.f32.mrf.mxu0
    %2907 = vmatprep.mubr.bf16.mxu0 0
    %2908 = vmatmul.mubr.bf16.gmra.mxu0 %v2317
    %v2909 = vpop.f32.mrf.mxu0
    %v2910 = vadd.f32 0.0, %v2909
    %v2911 = vpop.f32.mrf.mxu0
    %v2912 = vpop.f32.mrf.mxu0
    %v2913 = vadd.f32 0.0, %v2912
    %v2914 = vpop.f32.mrf.mxu0
    %2915 = vdwg.mxu0
    %v2916 = vsel %vm560, %v2821, -inf
    %2917 = vmax.xlane.f32.xlu0 %v2916
    %v2918 = vpop.xlane.xlu0 %2917
    %v2919 = vsel %vm560, %v2824, -inf
    %2920 = vmax.xlane.f32.xlu0 %v2919
    %v2921 = vpop.xlane.xlu0 %2920
    %v2922 = vsel %vm560, %v2829, -inf
    %2923 = vmax.xlane.f32.xlu0 %v2922
    %v2924 = vpop.xlane.xlu0 %2923
    %v2925 = vsel %vm560, %v2832, -inf
    %2926 = vmax.xlane.f32.xlu0 %v2925
    %v2927 = vpop.xlane.xlu0 %2926
    %v2928 = vsel %vm560, %v2837, -inf
    %2929 = vmax.xlane.f32.xlu0 %v2928
    %v2930 = vpop.xlane.xlu0 %2929
    %v2931 = vsel %vm560, %v2840, -inf
    %2932 = vmax.xlane.f32.xlu0 %v2931
    %v2933 = vpop.xlane.xlu0 %2932
    %v2934 = vsel %vm560, %v2845, -inf
    %2935 = vmax.xlane.f32.xlu0 %v2934
    %v2936 = vpop.xlane.xlu0 %2935
    %v2937 = vsel %vm560, %v2848, -inf
    %2938 = vmax.xlane.f32.xlu0 %v2937
    %v2939 = vpop.xlane.xlu0 %2938
    %v2940 = vsel %vm560, %v2886, -inf
    %2941 = vmax.xlane.f32.xlu0 %v2940
    %v2942 = vpop.xlane.xlu0 %2941
    %v2943 = vsel %vm560, %v2889, -inf
    %2944 = vmax.xlane.f32.xlu0 %v2943
    %v2945 = vpop.xlane.xlu0 %2944
    %v2946 = vsel %vm560, %v2894, -inf
    %2947 = vmax.xlane.f32.xlu0 %v2946
    %v2948 = vpop.xlane.xlu0 %2947
    %v2949 = vsel %vm560, %v2897, -inf
    %2950 = vmax.xlane.f32.xlu0 %v2949
    %v2951 = vpop.xlane.xlu0 %2950
    %v2952 = vsel %vm560, %v2902, -inf
    %2953 = vmax.xlane.f32.xlu0 %v2952
    %v2954 = vpop.xlane.xlu0 %2953
    %v2955 = vsel %vm560, %v2905, -inf
    %2956 = vmax.xlane.f32.xlu0 %v2955
    %v2957 = vpop.xlane.xlu0 %2956
    %v2958 = vsel %vm560, %v2910, -inf
    %2959 = vmax.xlane.f32.xlu0 %v2958
    %v2960 = vpop.xlane.xlu0 %2959
    %v2961 = vsel %vm560, %v2913, -inf
    %2962 = vmax.xlane.f32.xlu0 %v2961
    %v2963 = vpop.xlane.xlu0 %2962
    %v2964 = vmax.f32 %v2386, %v2918
    %v2965 = vmax.f32 %v2389, %v2921
    %v2966 = vmax.f32 %v2392, %v2924
    %v2967 = vmax.f32 %v2395, %v2927
    %v2968 = vmax.f32 %v2398, %v2930
    %v2969 = vmax.f32 %v2401, %v2933
    %v2970 = vmax.f32 %v2404, %v2936
    %v2971 = vmax.f32 %v2407, %v2939
    %v2972 = vmax.f32 %v2410, %v2942
    %v2973 = vmax.f32 %v2413, %v2945
    %v2974 = vmax.f32 %v2416, %v2948
    %v2975 = vmax.f32 %v2419, %v2951
    %v2976 = vmax.f32 %v2422, %v2954
    %v2977 = vmax.f32 %v2425, %v2957
    %v2978 = vmax.f32 %v2428, %v2960
    %v2979 = vmax.f32 %v2431, %v2963
    %v2980 = vsub.f32 %v2386, %v2964
    %v2981 = vsub.f32 %v2389, %v2965
    %v2982 = vsub.f32 %v2392, %v2966
    %v2983 = vsub.f32 %v2395, %v2967
    %v2984 = vsub.f32 %v2398, %v2968
    %v2985 = vsub.f32 %v2401, %v2969
    %v2986 = vsub.f32 %v2404, %v2970
    %v2987 = vsub.f32 %v2407, %v2971
    %v2988 = vsub.f32 %v2410, %v2972
    %v2989 = vsub.f32 %v2413, %v2973
    %v2990 = vsub.f32 %v2416, %v2974
    %v2991 = vsub.f32 %v2419, %v2975
    %v2992 = vsub.f32 %v2422, %v2976
    %v2993 = vsub.f32 %v2425, %v2977
    %v2994 = vsub.f32 %v2428, %v2978
    %v2995 = vsub.f32 %v2431, %v2979
    %v2996 = vmul.f32 %v2980, 1.442695
    %v2997 = vpow.pop %v2996
    %v2998 = vmul.f32 %v2981, 1.442695
    %v2999 = vpow.pop %v2998
    %v3000 = vmul.f32 %v2982, 1.442695
    %v3001 = vpow.pop %v3000
    %v3002 = vmul.f32 %v2983, 1.442695
    %v3003 = vpow.pop %v3002
    %v3004 = vmul.f32 %v2984, 1.442695
    %v3005 = vpow.pop %v3004
    %v3006 = vmul.f32 %v2985, 1.442695
    %v3007 = vpow.pop %v3006
    %v3008 = vmul.f32 %v2986, 1.442695
    %v3009 = vpow.pop %v3008
    %v3010 = vmul.f32 %v2987, 1.442695
    %v3011 = vpow.pop %v3010
    %v3012 = vmul.f32 %v2988, 1.442695
    %v3013 = vpow.pop %v3012
    %v3014 = vmul.f32 %v2989, 1.442695
    %v3015 = vpow.pop %v3014
    %v3016 = vmul.f32 %v2990, 1.442695
    %v3017 = vpow.pop %v3016
    %v3018 = vmul.f32 %v2991, 1.442695
    %v3019 = vpow.pop %v3018
    %v3020 = vmul.f32 %v2992, 1.442695
    %v3021 = vpow.pop %v3020
    %v3022 = vmul.f32 %v2993, 1.442695
    %v3023 = vpow.pop %v3022
    %v3024 = vmul.f32 %v2994, 1.442695
    %v3025 = vpow.pop %v3024
    %v3026 = vmul.f32 %v2995, 1.442695
    %v3027 = vpow.pop %v3026
    %v3028 = vsub.f32 %v2821, %v2964
    %v3029 = vsub.f32 %v2824, %v2965
    %v3030 = vsub.f32 %v2829, %v2966
    %v3031 = vsub.f32 %v2832, %v2967
    %v3032 = vsub.f32 %v2837, %v2968
    %v3033 = vsub.f32 %v2840, %v2969
    %v3034 = vsub.f32 %v2845, %v2970
    %v3035 = vsub.f32 %v2848, %v2971
    %v3036 = vsub.f32 %v2886, %v2972
    %v3037 = vsub.f32 %v2889, %v2973
    %v3038 = vsub.f32 %v2894, %v2974
    %v3039 = vsub.f32 %v2897, %v2975
    %v3040 = vsub.f32 %v2902, %v2976
    %v3041 = vsub.f32 %v2905, %v2977
    %v3042 = vsub.f32 %v2910, %v2978
    %v3043 = vsub.f32 %v2913, %v2979
    %v3044 = vmul.f32 %v3028, 1.442695
    %v3045 = vpow.pop %v3044
    %v3046 = vmul.f32 %v3029, 1.442695
    %v3047 = vpow.pop %v3046
    %v3048 = vmul.f32 %v3030, 1.442695
    %v3049 = vpow.pop %v3048
    %v3050 = vmul.f32 %v3031, 1.442695
    %v3051 = vpow.pop %v3050
    %v3052 = vmul.f32 %v3032, 1.442695
    %v3053 = vpow.pop %v3052
    %v3054 = vmul.f32 %v3033, 1.442695
    %v3055 = vpow.pop %v3054
    %v3056 = vmul.f32 %v3034, 1.442695
    %v3057 = vpow.pop %v3056
    %v3058 = vmul.f32 %v3035, 1.442695
    %v3059 = vpow.pop %v3058
    %v3060 = vmul.f32 %v3036, 1.442695
    %v3061 = vpow.pop %v3060
    %v3062 = vmul.f32 %v3037, 1.442695
    %v3063 = vpow.pop %v3062
    %v3064 = vmul.f32 %v3038, 1.442695
    %v3065 = vpow.pop %v3064
    %v3066 = vmul.f32 %v3039, 1.442695
    %v3067 = vpow.pop %v3066
    %v3068 = vmul.f32 %v3040, 1.442695
    %v3069 = vpow.pop %v3068
    %v3070 = vmul.f32 %v3041, 1.442695
    %v3071 = vpow.pop %v3070
    %v3072 = vmul.f32 %v3042, 1.442695
    %v3073 = vpow.pop %v3072
    %v3074 = vmul.f32 %v3043, 1.442695
    %v3075 = vpow.pop %v3074
    %v3076 = vmul.f32 %v2997, %v2592
    %v3077 = vmul.f32 %v2999, %v2593
    %v3078 = vmul.f32 %v3001, %v2594
    %v3079 = vmul.f32 %v3003, %v2595
    %v3080 = vmul.f32 %v3005, %v2596
    %v3081 = vmul.f32 %v3007, %v2597
    %v3082 = vmul.f32 %v3009, %v2598
    %v3083 = vmul.f32 %v3011, %v2599
    %v3084 = vmul.f32 %v3013, %v2600
    %v3085 = vmul.f32 %v3015, %v2601
    %v3086 = vmul.f32 %v3017, %v2602
    %v3087 = vmul.f32 %v3019, %v2603
    %v3088 = vmul.f32 %v3021, %v2604
    %v3089 = vmul.f32 %v3023, %v2605
    %v3090 = vmul.f32 %v3025, %v2606
    %v3091 = vmul.f32 %v3027, %v2607
    %v3092 = vsel %vm560, %v3045, 0.0
    %3093 = vadd.xlane.f32.xlu0 %v3092
    %v3094 = vpop.xlane.xlu0 %3093
    %v3095 = vsel %vm560, %v3047, 0.0
    %3096 = vadd.xlane.f32.xlu0 %v3095
    %v3097 = vpop.xlane.xlu0 %3096
    %v3098 = vsel %vm560, %v3049, 0.0
    %3099 = vadd.xlane.f32.xlu0 %v3098
    %v3100 = vpop.xlane.xlu0 %3099
    %v3101 = vsel %vm560, %v3051, 0.0
    %3102 = vadd.xlane.f32.xlu0 %v3101
    %v3103 = vpop.xlane.xlu0 %3102
    %v3104 = vsel %vm560, %v3053, 0.0
    %3105 = vadd.xlane.f32.xlu0 %v3104
    %v3106 = vpop.xlane.xlu0 %3105
    %v3107 = vsel %vm560, %v3055, 0.0
    %3108 = vadd.xlane.f32.xlu0 %v3107
    %v3109 = vpop.xlane.xlu0 %3108
    %v3110 = vsel %vm560, %v3057, 0.0
    %3111 = vadd.xlane.f32.xlu0 %v3110
    %v3112 = vpop.xlane.xlu0 %3111
    %v3113 = vsel %vm560, %v3059, 0.0
    %3114 = vadd.xlane.f32.xlu0 %v3113
    %v3115 = vpop.xlane.xlu0 %3114
    %v3116 = vsel %vm560, %v3061, 0.0
    %3117 = vadd.xlane.f32.xlu0 %v3116
    %v3118 = vpop.xlane.xlu0 %3117
    %v3119 = vsel %vm560, %v3063, 0.0
    %3120 = vadd.xlane.f32.xlu0 %v3119
    %v3121 = vpop.xlane.xlu0 %3120
    %v3122 = vsel %vm560, %v3065, 0.0
    %3123 = vadd.xlane.f32.xlu0 %v3122
    %v3124 = vpop.xlane.xlu0 %3123
    %v3125 = vsel %vm560, %v3067, 0.0
    %3126 = vadd.xlane.f32.xlu0 %v3125
    %v3127 = vpop.xlane.xlu0 %3126
    %v3128 = vsel %vm560, %v3069, 0.0
    %3129 = vadd.xlane.f32.xlu0 %v3128
    %v3130 = vpop.xlane.xlu0 %3129
    %v3131 = vsel %vm560, %v3071, 0.0
    %3132 = vadd.xlane.f32.xlu0 %v3131
    %v3133 = vpop.xlane.xlu0 %3132
    %v3134 = vsel %vm560, %v3073, 0.0
    %3135 = vadd.xlane.f32.xlu0 %v3134
    %v3136 = vpop.xlane.xlu0 %3135
    %v3137 = vsel %vm560, %v3075, 0.0
    %3138 = vadd.xlane.f32.xlu0 %v3137
    %v3139 = vpop.xlane.xlu0 %3138
    %v3140 = vadd.f32 %v3076, %v3094
    %v3141 = vadd.f32 %v3077, %v3097
    %v3142 = vadd.f32 %v3078, %v3100
    %v3143 = vadd.f32 %v3079, %v3103
    %v3144 = vadd.f32 %v3080, %v3106
    %v3145 = vadd.f32 %v3081, %v3109
    %v3146 = vadd.f32 %v3082, %v3112
    %v3147 = vadd.f32 %v3083, %v3115
    %v3148 = vadd.f32 %v3084, %v3118
    %v3149 = vadd.f32 %v3085, %v3121
    %v3150 = vadd.f32 %v3086, %v3124
    %v3151 = vadd.f32 %v3087, %v3127
    %v3152 = vadd.f32 %v3088, %v3130
    %v3153 = vadd.f32 %v3089, %v3133
    %v3154 = vadd.f32 %v3090, %v3136
    %v3155 = vadd.f32 %v3091, %v3139
    %v3156 = vmul.f32 %v2997, %v2770
    %v3157 = vmul.f32 %v2999, %v2771
    %v3158 = vmul.f32 %v3001, %v2772
    %v3159 = vmul.f32 %v3003, %v2773
    %v3160 = vmul.f32 %v3005, %v2774
    %v3161 = vmul.f32 %v3007, %v2775
    %v3162 = vmul.f32 %v3009, %v2776
    %v3163 = vmul.f32 %v3011, %v2777
    %v3164 = vmul.f32 %v3013, %v2778
    %v3165 = vmul.f32 %v3015, %v2779
    %v3166 = vmul.f32 %v3017, %v2780
    %v3167 = vmul.f32 %v3019, %v2781
    %v3168 = vmul.f32 %v3021, %v2782
    %v3169 = vmul.f32 %v3023, %v2783
    %v3170 = vmul.f32 %v3025, %v2784
    %v3171 = vmul.f32 %v3027, %v2785
    %v3172 = vpack.c.bf16 %v3047, %v3045
    %v3173 = vpack.c.bf16 %v3051, %v3049
    %v3174 = vpack.c.bf16 %v3055, %v3053
    %v3175 = vpack.c.bf16 %v3059, %v3057
    %v3176 = vpack.c.bf16 %v3063, %v3061
    %v3177 = vpack.c.bf16 %v3067, %v3065
    %v3178 = vpack.c.bf16 %v3071, %v3069
    %v3179 = vpack.c.bf16 %v3075, %v3073
    %v3181 = vsel %vm560, %v3172, 0
    %v3184 = vsel %vm560, %v3173, 0
    %v3187 = vsel %vm560, %v3174, 0
    %v3190 = vsel %vm560, %v3175, 0
    %3192 = vmatprep.subr.bf16.mxu0 0
    %3193 = vmatpush1.bf16.msra.mxu0 0
    %3194 = vmatprep.subr.bf16.mxu0 0
    %3195 = vmatpush1.bf16.msra.mxu0 0
    %3196 = vmatprep.subr.bf16.mxu0 0
    %3197 = vmatpush1.bf16.msra.mxu0 0
    %3198 = vmatprep.subr.bf16.mxu0 0
    %3199 = vmatpush1.bf16.msra.mxu0 0
    %3200 = vmatprep.subr.bf16.mxu0 0
    %3201 = vmatpush1.bf16.msra.mxu0 0
    %3202 = vmatprep.subr.bf16.mxu0 0
    %3203 = vmatpush1.bf16.msra.mxu0 0
    %3204 = vmatprep.subr.bf16.mxu0 0
    %3205 = vmatpush1.bf16.msra.mxu0 %v2225
    %3206 = vmatprep.subr.bf16.mxu0 0
    %3207 = vmatpush1.bf16.msra.mxu0 %v2224
    %3208 = vmatprep.subr.bf16.mxu0 0
    %3209 = vmatpush2.bf16.msra.mxu0 0
    %3210 = vmatprep.subr.bf16.mxu0 0
    %3211 = vmatpush2.bf16.msra.mxu0 0
    %3212 = vmatprep.subr.bf16.mxu0 0
    %3213 = vmatpush2.bf16.msra.mxu0 0
    %3214 = vmatprep.subr.bf16.mxu0 0
    %3215 = vmatpush2.bf16.msra.mxu0 0
    %3216 = vmatprep.subr.bf16.mxu0 0
    %3217 = vmatpush2.bf16.msra.mxu0 0
    %3218 = vmatprep.subr.bf16.mxu0 0
    %3219 = vmatpush2.bf16.msra.mxu0 0
    %3220 = vmatprep.subr.bf16.mxu0 0
    %3221 = vmatpush2.bf16.msra.mxu0 0
    %3222 = vmatprep.subr.bf16.mxu0 0
    %3223 = vmatpush2.bf16.msra.mxu0 0
    %3224 = vmatprep.mubr.bf16.mxu0 0
    %3225 = vmatmul.mubr.bf16.gmra.mxu0 %v3181
    %v3226 = vpop.f32.mrf.mxu0
    %v3227 = vadd.f32 0.0, %v3226
    %v3228 = vpop.f32.mrf.mxu0
    %v3229 = vpop.f32.mrf.mxu0
    %v3230 = vadd.f32 0.0, %v3229
    %v3231 = vpop.f32.mrf.mxu0
    %3232 = vmatprep.mubr.bf16.mxu0 0
    %3233 = vmatmul.mubr.bf16.gmra.mxu0 %v3184
    %v3234 = vpop.f32.mrf.mxu0
    %v3235 = vadd.f32 0.0, %v3234
    %v3236 = vpop.f32.mrf.mxu0
    %v3237 = vpop.f32.mrf.mxu0
    %v3238 = vadd.f32 0.0, %v3237
    %v3239 = vpop.f32.mrf.mxu0
    %3240 = vmatprep.mubr.bf16.mxu0 0
    %3241 = vmatmul.mubr.bf16.gmra.mxu0 %v3187
    %v3242 = vpop.f32.mrf.mxu0
    %v3243 = vadd.f32 0.0, %v3242
    %v3244 = vpop.f32.mrf.mxu0
    %v3245 = vpop.f32.mrf.mxu0
    %v3246 = vadd.f32 0.0, %v3245
    %v3247 = vpop.f32.mrf.mxu0
    %3248 = vmatprep.mubr.bf16.mxu0 0
    %3249 = vmatmul.mubr.bf16.gmra.mxu0 %v3190
    %v3250 = vpop.f32.mrf.mxu0
    %v3251 = vadd.f32 0.0, %v3250
    %v3252 = vpop.f32.mrf.mxu0
    %v3253 = vpop.f32.mrf.mxu0
    %v3254 = vadd.f32 0.0, %v3253
    %v3255 = vpop.f32.mrf.mxu0
    %3256 = vdwg.mxu0
    %v3258 = vsel %vm560, %v3176, 0
    %v3261 = vsel %vm560, %v3177, 0
    %v3264 = vsel %vm560, %v3178, 0
    %v3267 = vsel %vm560, %v3179, 0
    %3269 = vmatprep.subr.bf16.mxu0 0
    %3270 = vmatpush1.bf16.msra.mxu0 0
    %3271 = vmatprep.subr.bf16.mxu0 0
    %3272 = vmatpush1.bf16.msra.mxu0 0
    %3273 = vmatprep.subr.bf16.mxu0 0
    %3274 = vmatpush1.bf16.msra.mxu0 0
    %3275 = vmatprep.subr.bf16.mxu0 0
    %3276 = vmatpush1.bf16.msra.mxu0 0
    %3277 = vmatprep.subr.bf16.mxu0 0
    %3278 = vmatpush1.bf16.msra.mxu0 0
    %3279 = vmatprep.subr.bf16.mxu0 0
    %3280 = vmatpush1.bf16.msra.mxu0 0
    %3281 = vmatprep.subr.bf16.mxu0 0
    %3282 = vmatpush1.bf16.msra.mxu0 %v2229
    %3283 = vmatprep.subr.bf16.mxu0 0
    %3284 = vmatpush1.bf16.msra.mxu0 %v2228
    %3285 = vmatprep.subr.bf16.mxu0 0
    %3286 = vmatpush2.bf16.msra.mxu0 0
    %3287 = vmatprep.subr.bf16.mxu0 0
    %3288 = vmatpush2.bf16.msra.mxu0 0
    %3289 = vmatprep.subr.bf16.mxu0 0
    %3290 = vmatpush2.bf16.msra.mxu0 0
    %3291 = vmatprep.subr.bf16.mxu0 0
    %3292 = vmatpush2.bf16.msra.mxu0 0
    %3293 = vmatprep.subr.bf16.mxu0 0
    %3294 = vmatpush2.bf16.msra.mxu0 0
    %3295 = vmatprep.subr.bf16.mxu0 0
    %3296 = vmatpush2.bf16.msra.mxu0 0
    %3297 = vmatprep.subr.bf16.mxu0 0
    %3298 = vmatpush2.bf16.msra.mxu0 0
    %3299 = vmatprep.subr.bf16.mxu0 0
    %3300 = vmatpush2.bf16.msra.mxu0 0
    %3301 = vmatprep.mubr.bf16.mxu0 0
    %3302 = vmatmul.mubr.bf16.gmra.mxu0 %v3258
    %v3303 = vpop.f32.mrf.mxu0
    %v3304 = vadd.f32 0.0, %v3303
    %v3305 = vpop.f32.mrf.mxu0
    %v3306 = vpop.f32.mrf.mxu0
    %v3307 = vadd.f32 0.0, %v3306
    %v3308 = vpop.f32.mrf.mxu0
    %3309 = vmatprep.mubr.bf16.mxu0 0
    %3310 = vmatmul.mubr.bf16.gmra.mxu0 %v3261
    %v3311 = vpop.f32.mrf.mxu0
    %v3312 = vadd.f32 0.0, %v3311
    %v3313 = vpop.f32.mrf.mxu0
    %v3314 = vpop.f32.mrf.mxu0
    %v3315 = vadd.f32 0.0, %v3314
    %v3316 = vpop.f32.mrf.mxu0
    %3317 = vmatprep.mubr.bf16.mxu0 0
    %3318 = vmatmul.mubr.bf16.gmra.mxu0 %v3264
    %v3319 = vpop.f32.mrf.mxu0
    %v3320 = vadd.f32 0.0, %v3319
    %v3321 = vpop.f32.mrf.mxu0
    %v3322 = vpop.f32.mrf.mxu0
    %v3323 = vadd.f32 0.0, %v3322
    %v3324 = vpop.f32.mrf.mxu0
    %3325 = vmatprep.mubr.bf16.mxu0 0
    %3326 = vmatmul.mubr.bf16.gmra.mxu0 %v3267
    %v3327 = vpop.f32.mrf.mxu0
    %v3328 = vadd.f32 0.0, %v3327
    %v3329 = vpop.f32.mrf.mxu0
    %v3330 = vpop.f32.mrf.mxu0
    %v3331 = vadd.f32 0.0, %v3330
    %v3332 = vpop.f32.mrf.mxu0
    %3333 = vdwg.mxu0
    %v3334 = vadd.f32 %v3156, %v3227
    %v3335 = vadd.f32 %v3157, %v3230
    %v3336 = vadd.f32 %v3158, %v3235
    %v3337 = vadd.f32 %v3159, %v3238
    %v3338 = vadd.f32 %v3160, %v3243
    %v3339 = vadd.f32 %v3161, %v3246
    %v3340 = vadd.f32 %v3162, %v3251
    %v3341 = vadd.f32 %v3163, %v3254
    %v3342 = vadd.f32 %v3164, %v3304
    %v3343 = vadd.f32 %v3165, %v3307
    %v3344 = vadd.f32 %v3166, %v3312
    %v3345 = vadd.f32 %v3167, %v3315
    %v3346 = vadd.f32 %v3168, %v3320
    %v3347 = vadd.f32 %v3169, %v3323
    %v3348 = vadd.f32 %v3170, %v3328
    %v3349 = vadd.f32 %v3171, %v3331
    %v3350 = vrcp.pop %v3140
    %v3351 = vrcp.pop %v3141
    %v3352 = vrcp.pop %v3142
    %v3353 = vrcp.pop %v3143
    %v3354 = vrcp.pop %v3144
    %v3355 = vrcp.pop %v3145
    %v3356 = vrcp.pop %v3146
    %v3357 = vrcp.pop %v3147
    %v3358 = vrcp.pop %v3148
    %v3359 = vrcp.pop %v3149
    %v3360 = vrcp.pop %v3150
    %v3361 = vrcp.pop %v3151
    %v3362 = vrcp.pop %v3152
    %v3363 = vrcp.pop %v3153
    %v3364 = vrcp.pop %v3154
    %v3365 = vrcp.pop %v3155
    %v3366 = vmul.f32 %v3334, %v3350
    %v3367 = vmul.f32 %v3335, %v3351
    %v3368 = vmul.f32 %v3336, %v3352
    %v3369 = vmul.f32 %v3337, %v3353
    %v3370 = vmul.f32 %v3338, %v3354
    %v3371 = vmul.f32 %v3339, %v3355
    %v3372 = vmul.f32 %v3340, %v3356
    %v3373 = vmul.f32 %v3341, %v3357
    %v3374 = vmul.f32 %v3342, %v3358
    %v3375 = vmul.f32 %v3343, %v3359
    %v3376 = vmul.f32 %v3344, %v3360
    %v3377 = vmul.f32 %v3345, %v3361
    %v3378 = vmul.f32 %v3346, %v3362
    %v3379 = vmul.f32 %v3347, %v3363
    %v3380 = vmul.f32 %v3348, %v3364
    %v3381 = vmul.f32 %v3349, %v3365
    %v3382 = vstv %s1951
    %v3383 = vmul.f32 %v3382, %v3366
    %v3384 = vmul.f32 %v3382, %v3367
    %v3385 = vmul.f32 %v3382, %v3368
    %v3386 = vmul.f32 %v3382, %v3369
    %v3387 = vmul.f32 %v3382, %v3370
    %v3388 = vmul.f32 %v3382, %v3371
    %v3389 = vmul.f32 %v3382, %v3372
    %v3390 = vmul.f32 %v3382, %v3373
    %v3391 = vmul.f32 %v3382, %v3374
    %v3392 = vmul.f32 %v3382, %v3375
    %v3393 = vmul.f32 %v3382, %v3376
    %v3394 = vmul.f32 %v3382, %v3377
    %v3395 = vmul.f32 %v3382, %v3378
    %v3396 = vmul.f32 %v3382, %v3379
    %v3397 = vmul.f32 %v3382, %v3380
    %v3398 = vmul.f32 %v3382, %v3381
    %v3399 = vadd.f32 %v3383, %v1925
    %v3400 = vadd.f32 %v3384, %v1926
    %v3401 = vadd.f32 %v3385, %v1927
    %v3402 = vadd.f32 %v3386, %v1928
    %v3403 = vadd.f32 %v3387, %v1929
    %v3404 = vadd.f32 %v3388, %v1930
    %v3405 = vadd.f32 %v3389, %v1931
    %v3406 = vadd.f32 %v3390, %v1932
    %v3407 = vadd.f32 %v3391, %v1933
    %v3408 = vadd.f32 %v3392, %v1934
    %v3409 = vadd.f32 %v3393, %v1935
    %v3410 = vadd.f32 %v3394, %v1936
    %v3411 = vadd.f32 %v3395, %v1937
    %v3412 = vadd.f32 %v3396, %v1938
    %v3413 = vadd.f32 %v3397, %v1939
    %v3414 = vadd.f32 %v3398, %v1940
    %v3415 = vld [vmem:[%s14] sm:$0xf]
    %v3416 = vld [vmem:[%s14 + $0x4] sm:$0xf]
    %v3417 = vld [vmem:[%s14 + $0x8] sm:$0xf]
    %v3418 = vld [vmem:[%s14 + $0xc] sm:$0xf]
    %v3419 = vld [vmem:[%s15] sm:$0x1]
    %v3420 = vpack.c.bf16 %v3400, %v3399
    %v3421 = vpack.c.bf16 %v3402, %v3401
    %v3422 = vpack.c.bf16 %v3404, %v3403
    %v3423 = vpack.c.bf16 %v3406, %v3405
    %v3424 = vpack.c.bf16 %v3408, %v3407
    %v3425 = vpack.c.bf16 %v3410, %v3409
    %v3426 = vpack.c.bf16 %v3412, %v3411
    %v3427 = vpack.c.bf16 %v3414, %v3413
    %v3429 = vlaneseq
    %v3430 = vshrl.u32 %v3429, 7
    %v3431 = vsub.s32 0, %v3430
    %v3432 = vrot.slane %v3419, %v3431
    %v3438 = vunpack.c.l.b16 %v3415
    %v3439 = vunpack.c.l.b16 %v3416
    %v3440 = vunpack.c.l.b16 %v3417
    %v3441 = vunpack.c.l.b16 %v3418
    %v3442 = vpack.c.b16 %v3439, %v3438
    %v3443 = vpack.c.b16 %v3441, %v3440
    %v3447 = vsel %vm560, %v3420, 0
    %v3450 = vsel %vm560, %v3421, 0
    %v3453 = vsel %vm560, %v3422, 0
    %v3456 = vsel %vm560, %v3423, 0
    %v3459 = vsel %vm560, %v3424, 0
    %v3462 = vsel %vm560, %v3425, 0
    %v3465 = vsel %vm560, %v3426, 0
    %v3468 = vsel %vm560, %v3427, 0
    %3470 = vmatprep.subr.bf16.mxu0 0
    %3471 = vmatpush1.bf16.msra.mxu0 0
    %3472 = vmatprep.subr.bf16.mxu0 0
    %3473 = vmatpush1.bf16.msra.mxu0 0
    %3474 = vmatprep.subr.bf16.mxu0 0
    %3475 = vmatpush1.bf16.msra.mxu0 0
    %3476 = vmatprep.subr.bf16.mxu0 0
    %3477 = vmatpush1.bf16.msra.mxu0 0
    %3478 = vmatprep.subr.bf16.mxu0 0
    %3479 = vmatpush1.bf16.msra.mxu0 0
    %3480 = vmatprep.subr.bf16.mxu0 0
    %3481 = vmatpush1.bf16.msra.mxu0 0
    %3482 = vmatprep.subr.bf16.mxu0 0
    %3483 = vmatpush1.bf16.msra.mxu0 %v3443
    %3484 = vmatprep.subr.bf16.mxu0 0
    %3485 = vmatpush1.bf16.msra.mxu0 %v3442
    %3486 = vmatprep.subr.bf16.mxu0 0
    %3487 = vmatpush2.bf16.msra.mxu0 0
    %3488 = vmatprep.subr.bf16.mxu0 0
    %3489 = vmatpush2.bf16.msra.mxu0 0
    %3490 = vmatprep.subr.bf16.mxu0 0
    %3491 = vmatpush2.bf16.msra.mxu0 0
    %3492 = vmatprep.subr.bf16.mxu0 0
    %3493 = vmatpush2.bf16.msra.mxu0 0
    %3494 = vmatprep.subr.bf16.mxu0 0
    %3495 = vmatpush2.bf16.msra.mxu0 0
    %3496 = vmatprep.subr.bf16.mxu0 0
    %3497 = vmatpush2.bf16.msra.mxu0 0
    %3498 = vmatprep.subr.bf16.mxu0 0
    %3499 = vmatpush2.bf16.msra.mxu0 0
    %3500 = vmatprep.subr.bf16.mxu0 0
    %3501 = vmatpush2.bf16.msra.mxu0 0
    %3502 = vmatprep.mubr.bf16.mxu0 0
    %3503 = vmatmul.mubr.bf16.gmra.mxu0 %v3447
    %v3504 = vpop.f32.mrf.mxu0
    %v3505 = vadd.f32 %v3432, %v3504
    %v3506 = vpop.f32.mrf.mxu0
    %v3507 = vpop.f32.mrf.mxu0
    %v3508 = vadd.f32 %v3432, %v3507
    %v3509 = vpop.f32.mrf.mxu0
    %3510 = vmatprep.mubr.bf16.mxu0 0
    %3511 = vmatmul.mubr.bf16.gmra.mxu0 %v3450
    %v3512 = vpop.f32.mrf.mxu0
    %v3513 = vadd.f32 %v3432, %v3512
    %v3514 = vpop.f32.mrf.mxu0
    %v3515 = vpop.f32.mrf.mxu0
    %v3516 = vadd.f32 %v3432, %v3515
    %v3517 = vpop.f32.mrf.mxu0
    %3518 = vmatprep.mubr.bf16.mxu0 0
    %3519 = vmatmul.mubr.bf16.gmra.mxu0 %v3453
    %v3520 = vpop.f32.mrf.mxu0
    %v3521 = vadd.f32 %v3432, %v3520
    %v3522 = vpop.f32.mrf.mxu0
    %v3523 = vpop.f32.mrf.mxu0
    %v3524 = vadd.f32 %v3432, %v3523
    %v3525 = vpop.f32.mrf.mxu0
    %3526 = vmatprep.mubr.bf16.mxu0 0
    %3527 = vmatmul.mubr.bf16.gmra.mxu0 %v3456
    %v3528 = vpop.f32.mrf.mxu0
    %v3529 = vadd.f32 %v3432, %v3528
    %v3530 = vpop.f32.mrf.mxu0
    %v3531 = vpop.f32.mrf.mxu0
    %v3532 = vadd.f32 %v3432, %v3531
    %v3533 = vpop.f32.mrf.mxu0
    %3534 = vmatprep.mubr.bf16.mxu0 0
    %3535 = vmatmul.mubr.bf16.gmra.mxu0 %v3459
    %v3536 = vpop.f32.mrf.mxu0
    %v3537 = vadd.f32 %v3432, %v3536
    %v3538 = vpop.f32.mrf.mxu0
    %v3539 = vpop.f32.mrf.mxu0
    %v3540 = vadd.f32 %v3432, %v3539
    %v3541 = vpop.f32.mrf.mxu0
    %3542 = vmatprep.mubr.bf16.mxu0 0
    %3543 = vmatmul.mubr.bf16.gmra.mxu0 %v3462
    %v3544 = vpop.f32.mrf.mxu0
    %v3545 = vadd.f32 %v3432, %v3544
    %v3546 = vpop.f32.mrf.mxu0
    %v3547 = vpop.f32.mrf.mxu0
    %v3548 = vadd.f32 %v3432, %v3547
    %v3549 = vpop.f32.mrf.mxu0
    %3550 = vmatprep.mubr.bf16.mxu0 0
    %3551 = vmatmul.mubr.bf16.gmra.mxu0 %v3465
    %v3552 = vpop.f32.mrf.mxu0
    %v3553 = vadd.f32 %v3432, %v3552
    %v3554 = vpop.f32.mrf.mxu0
    %v3555 = vpop.f32.mrf.mxu0
    %v3556 = vadd.f32 %v3432, %v3555
    %v3557 = vpop.f32.mrf.mxu0
    %3558 = vmatprep.mubr.bf16.mxu0 0
    %3559 = vmatmul.mubr.bf16.gmra.mxu0 %v3468
    %v3560 = vpop.f32.mrf.mxu0
    %v3561 = vadd.f32 %v3432, %v3560
    %v3562 = vpop.f32.mrf.mxu0
    %v3563 = vpop.f32.mrf.mxu0
    %v3564 = vadd.f32 %v3432, %v3563
    %v3565 = vpop.f32.mrf.mxu0
    %3566 = vdwg.mxu0
    %v3567 = vmul.f32 %v3505, 0.01
    %v3568 = vmul.f32 %v3508, 0.01
    %v3569 = vmul.f32 %v3513, 0.01
    %v3570 = vmul.f32 %v3516, 0.01
    %v3571 = vmul.f32 %v3521, 0.01
    %v3572 = vmul.f32 %v3524, 0.01
    %v3573 = vmul.f32 %v3529, 0.01
    %v3574 = vmul.f32 %v3532, 0.01
    %v3575 = vmul.f32 %v3537, 0.01
    %v3576 = vmul.f32 %v3540, 0.01
    %v3577 = vmul.f32 %v3545, 0.01
    %v3578 = vmul.f32 %v3548, 0.01
    %v3579 = vmul.f32 %v3553, 0.01
    %v3580 = vmul.f32 %v3556, 0.01
    %v3581 = vmul.f32 %v3561, 0.01
    %v3582 = vmul.f32 %v3564, 0.01
    %v3583 = vmax.f32 %v3505, %v3567
    %v3584 = vmax.f32 %v3508, %v3568
    %v3585 = vmax.f32 %v3513, %v3569
    %v3586 = vmax.f32 %v3516, %v3570
    %v3587 = vmax.f32 %v3521, %v3571
    %v3588 = vmax.f32 %v3524, %v3572
    %v3589 = vmax.f32 %v3529, %v3573
    %v3590 = vmax.f32 %v3532, %v3574
    %v3591 = vmax.f32 %v3537, %v3575
    %v3592 = vmax.f32 %v3540, %v3576
    %v3593 = vmax.f32 %v3545, %v3577
    %v3594 = vmax.f32 %v3548, %v3578
    %v3595 = vmax.f32 %v3553, %v3579
    %v3596 = vmax.f32 %v3556, %v3580
    %v3597 = vmax.f32 %v3561, %v3581
    %v3598 = vmax.f32 %v3564, %v3582
    %vm3599 = vcmask 523264
    %v3600 = vsel %vm3599, %v3583, 0.0
    %v3601 = vsel %vm3599, %v3584, 0.0
    %v3602 = vadd.f32 %v3600, %v3601
    %v3603 = vsel %vm3599, %v3585, 0.0
    %v3604 = vadd.f32 %v3602, %v3603
    %v3605 = vsel %vm3599, %v3586, 0.0
    %v3606 = vadd.f32 %v3604, %v3605
    %v3607 = vsel %vm3599, %v3587, 0.0
    %v3608 = vadd.f32 %v3606, %v3607
    %v3609 = vsel %vm3599, %v3588, 0.0
    %v3610 = vadd.f32 %v3608, %v3609
    %v3611 = vsel %vm3599, %v3589, 0.0
    %v3612 = vadd.f32 %v3610, %v3611
    %v3613 = vsel %vm3599, %v3590, 0.0
    %v3614 = vadd.f32 %v3612, %v3613
    %v3615 = vrot.slane %v3614, 4
    %v3616 = vadd.f32 %v3614, %v3615
    %v3617 = vrot.slane %v3616, 2
    %v3618 = vadd.f32 %v3616, %v3617
    %v3619 = vrot.slane %v3618, 1
    %v3620 = vadd.f32 %v3618, %v3619
    %v3621 = vsel %vm3599, %v3591, 0.0
    %v3622 = vsel %vm3599, %v3592, 0.0
    %v3623 = vadd.f32 %v3621, %v3622
    %v3624 = vsel %vm3599, %v3593, 0.0
    %v3625 = vadd.f32 %v3623, %v3624
    %v3626 = vsel %vm3599, %v3594, 0.0
    %v3627 = vadd.f32 %v3625, %v3626
    %v3628 = vsel %vm3599, %v3595, 0.0
    %v3629 = vadd.f32 %v3627, %v3628
    %v3630 = vsel %vm3599, %v3596, 0.0
    %v3631 = vadd.f32 %v3629, %v3630
    %v3632 = vsel %vm3599, %v3597, 0.0
    %v3633 = vadd.f32 %v3631, %v3632
    %v3634 = vsel %vm3599, %v3598, 0.0
    %v3635 = vadd.f32 %v3633, %v3634
    %v3636 = vrot.slane %v3635, 4
    %v3637 = vadd.f32 %v3635, %v3636
    %v3638 = vrot.slane %v3637, 2
    %v3639 = vadd.f32 %v3637, %v3638
    %v3640 = vrot.slane %v3639, 1
    %v3641 = vadd.f32 %v3639, %v3640
    %v3642 = vrcp.pop 64.0
    %v3643 = vmul.f32 %v3620, %v3642
    %v3644 = vmul.f32 %v3641, %v3642
    %v3645 = vld [vmem:[%s16] sm:$0xff]
    %v3646 = vld [vmem:[%s16 + $0x8] sm:$0xff]
    %v3647 = vld [vmem:[%s16 + $0x10] sm:$0xff]
    %v3648 = vld [vmem:[%s16 + $0x18] sm:$0xff]
    %v3649 = vld [vmem:[%s16 + $0x20] sm:$0xff]
    %v3650 = vld [vmem:[%s16 + $0x28] sm:$0xff]
    %v3651 = vld [vmem:[%s16 + $0x30] sm:$0xff]
    %v3652 = vld [vmem:[%s16 + $0x38] sm:$0xff]
    %v3653 = vld [vmem:[#allocation2] sm:$0x1]
    %v3655 = vlaneseq
    %v3656 = vshrl.u32 %v3655, 7
    %v3657 = vsub.s32 0, %v3656
    %v3658 = vrot.slane %v3653, %v3657
    %vm3662 = vcmask 1041409
    %v3663 = vsel %vm3662, %v3644, %v3643
    %v3664 = vsel %vm3599, %v3663, 0
    %3666 = vmatprep.subr.mxu0 0.0
    %3667 = vmatpush1.msra.mxu0 0.0
    %3668 = vmatprep.subr.mxu0 0.0
    %3669 = vmatpush1.msra.mxu0 0.0
    %3670 = vmatprep.subr.mxu0 0.0
    %3671 = vmatpush1.msra.mxu0 0.0
    %3672 = vmatprep.subr.mxu0 0.0
    %3673 = vmatpush1.msra.mxu0 0.0
    %3674 = vmatprep.subr.mxu0 0.0
    %3675 = vmatpush1.msra.mxu0 0.0
    %3676 = vmatprep.subr.mxu0 0.0
    %3677 = vmatpush1.msra.mxu0 0.0
    %3678 = vmatprep.subr.mxu0 0.0
    %3679 = vmatpush1.msra.mxu0 0.0
    %3680 = vmatprep.subr.mxu0 0.0
    %3681 = vmatpush1.msra.mxu0 0.0
    %3682 = vmatprep.subr.mxu0 0.0
    %3683 = vmatpush1.msra.mxu0 %v3652
    %3684 = vmatprep.subr.mxu0 0.0
    %3685 = vmatpush1.msra.mxu0 %v3651
    %3686 = vmatprep.subr.mxu0 0.0
    %3687 = vmatpush1.msra.mxu0 %v3650
    %3688 = vmatprep.subr.mxu0 0.0
    %3689 = vmatpush1.msra.mxu0 %v3649
    %3690 = vmatprep.subr.mxu0 0.0
    %3691 = vmatpush1.msra.mxu0 %v3648
    %3692 = vmatprep.subr.mxu0 0.0
    %3693 = vmatpush1.msra.mxu0 %v3647
    %3694 = vmatprep.subr.mxu0 0.0
    %3695 = vmatpush1.msra.mxu0 %v3646
    %3696 = vmatprep.subr.mxu0 0.0
    %3697 = vmatpush1.msra.mxu0 %v3645
    %3698 = vmatprep.subr.mxu0 0.0
    %3699 = vmatpush2.msra.mxu0 0.0
    %3700 = vmatprep.subr.mxu0 0.0
    %3701 = vmatpush2.msra.mxu0 0.0
    %3702 = vmatprep.subr.mxu0 0.0
    %3703 = vmatpush2.msra.mxu0 0.0
    %3704 = vmatprep.subr.mxu0 0.0
    %3705 = vmatpush2.msra.mxu0 0.0
    %3706 = vmatprep.subr.mxu0 0.0
    %3707 = vmatpush2.msra.mxu0 0.0
    %3708 = vmatprep.subr.mxu0 0.0
    %3709 = vmatpush2.msra.mxu0 0.0
    %3710 = vmatprep.subr.mxu0 0.0
    %3711 = vmatpush2.msra.mxu0 0.0
    %3712 = vmatprep.subr.mxu0 0.0
    %3713 = vmatpush2.msra.mxu0 0.0
    %3714 = vmatprep.subr.mxu0 0.0
    %3715 = vmatpush2.msra.mxu0 0.0
    %3716 = vmatprep.subr.mxu0 0.0
    %3717 = vmatpush2.msra.mxu0 0.0
    %3718 = vmatprep.subr.mxu0 0.0
    %3719 = vmatpush2.msra.mxu0 0.0
    %3720 = vmatprep.subr.mxu0 0.0
    %3721 = vmatpush2.msra.mxu0 0.0
    %3722 = vmatprep.subr.mxu0 0.0
    %3723 = vmatpush2.msra.mxu0 0.0
    %3724 = vmatprep.subr.mxu0 0.0
    %3725 = vmatpush2.msra.mxu0 0.0
    %3726 = vmatprep.subr.mxu0 0.0
    %3727 = vmatpush2.msra.mxu0 0.0
    %3728 = vmatprep.subr.mxu0 0.0
    %3729 = vmatpush2.msra.mxu0 0.0
    %3730 = vmatprep.mubr.f32.mxu0 0.0
    %3731 = vmatmul.mubr.f32.gmra.mxu0 %v3664
    %v3732 = vpop.f32.mrf.mxu0
    %v3733 = vadd.f32 %v3658, %v3732
    %v3734 = vpop.f32.mrf.mxu0
    %3735 = vdwg.mxu0
    %vm3736 = vcmask 1024
    %3737 = vst.msk [vmem:[%s18] sm:$0x3] %vm3736, %v3733
    // Predicated region
    $region78: #{tpu_custom_call.1} parent=1 // pred_check
      _
    $region79: #{tpu_custom_call.1} parent=1 // pred_check_branch
      %3739 = sbr.rel (0) target = $region81
    $region80: #{tpu_custom_call.1} parent=1 // pred_region
      _
    $region81: #{tpu_custom_call.1} parent=1 // pred_fallthru
      _
    // Predicated region
    $region82: #{tpu_custom_call.1} parent=1 // pred_check
      _
    $region83: #{tpu_custom_call.1} parent=1 // pred_check_branch
      %3741 = sbr.rel (0) target = $region85
    $region84: #{tpu_custom_call.1} parent=1 // pred_region
      _
    $region85: #{tpu_custom_call.1} parent=1 // pred_fallthru
      _
    %3742 = vsyncpa [#allocation4], 1

</llo_original>
